<compile_context>
chip_gen: v7x
topology: tpu7x:2x2x1
jax: 0.10.0
libtpu: 0.0.40
codegen_flags: <defaults>
</compile_context>

<pallas_src>
import numpy as np
import jax
import jax.numpy as jnp
from jax.experimental import pallas as pl
from jax.experimental.pallas import tpu as pltpu

# ---- small, module-consistent shapes -------------------------------------
N_HEAD = 4
D_HEAD = 8
D_MODEL = 32
QLEN = 8
BSZ = 2
KLEN = QLEN          # mems=None  => klen == qlen
RLEN = KLEN          # AC + BD requires rlen == klen
HD = N_HEAD * D_HEAD
HB = N_HEAD * BSZ    # stacked (head, batch) "z" axis
ZR = HB * QLEN       # stacked score rows (z*Q + i) = 64
SCALE = 1.0 / (D_HEAD ** 0.5)
LN_EPS = 1e-5


# ---- precomputed 0/1 constants: exact _rel_shift as a few 2-D MXU matmuls ----
def _build_rel_shift_constants():
    K, Q = KLEN, QLEN
    # cand[r, q*K+j] = bd[r, j+K-1-q]          (lower triangle incl. diag, via k-range)
    #               + bd[r+1, j-q-2]           (upper-triangle wrap, j >= q+2)
    m_lo = np.zeros((K, Q * K), np.float32)
    m_hi = np.zeros((K, Q * K), np.float32)
    for q in range(Q):
        for j in range(K):
            k_lo = j + K - 1 - q
            if 0 <= k_lo < K:
                m_lo[k_lo, q * K + j] = 1.0
            k_hi = j - q - 2
            if 0 <= k_hi < K:
                m_hi[k_hi, q * K + j] = 1.0
    # pick lane-block q == (row mod Q), then sum lane blocks back down to width K
    rowsel = np.zeros((ZR, Q * K), np.float32)
    for r in range(ZR):
        i = r % Q
        rowsel[r, i * K:(i + 1) * K] = 1.0
    tilesum = np.tile(np.eye(K, dtype=np.float32), (Q, 1))      # (Q*K, K)
    # bd_up[r] = bd[r+1]; the cross-z wrap row is never selected (m_hi==0 at i=Q-1)
    shift_up = np.zeros((ZR, ZR), np.float32)
    for r in range(ZR - 1):
        shift_up[r, r + 1] = 1.0
    return m_lo, m_hi, rowsel, tilesum, shift_up


_M_LO, _M_HI, _ROWSEL, _TILESUM, _SHIFT_UP = _build_rel_shift_constants()


# ---- ONE fused kernel ------------------------------------------------------
def _fused_attn_kernel(w_ref, r_ref, neg_ref, gamma_ref, beta_ref,
                       wproj_ref, rwb_ref, rrb_ref, wo_ref,
                       mlo_ref, mhi_ref, rowsel_ref, tilesum_ref, shiftup_ref,
                       out_ref, av_ref):
    BQ = BSZ * QLEN
    f32 = jnp.float32

    # -------- LayerNorm (pre_lnorm=True, biased variance like torch) on (B*Q, d_model)
    x = w_ref[...]
    mu = jnp.mean(x, axis=-1, keepdims=True)
    xc = x - mu
    var = jnp.mean(xc * xc, axis=-1, keepdims=True)
    ln = xc * jax.lax.rsqrt(var + LN_EPS) * gamma_ref[...] + beta_ref[...]

    # -------- fused QKV + R projection: one (B*Q+RLEN, 32) @ (32, 128) MXU pass.
    # The q-columns of wproj and the two biases carry SCALE already (review item 5).
    lhs = jnp.concatenate([ln, r_ref[...]], axis=0)               # (24, 32)
    proj = jnp.dot(lhs, wproj_ref[...], preferred_element_type=f32)   # (24, 128)
    heads = proj[:BQ, :3 * HD]                                    # (B*Q, 3*H*D)
    rk = proj[BQ:, 3 * HD:]                                       # (RLEN, H*D), computed once

    q = heads[:, :HD]
    k = heads[:, HD:2 * HD]
    v = heads[:, 2 * HD:3 * HD]
    rw_q = q + rwb_ref[...]                                       # SCALE*(q + r_w_bias)
    rr_q = q + rrb_ref[...]                                       # SCALE*(q + r_r_bias)

    # -------- stack heads into the leading batch axis, z = head*B + b (review item 3)
    def split_heads(mat2d):
        # (B*Q, H*D) -> H pieces of (B, Q, D); lane slice + leading-dim reshape only
        return [mat2d[:, n * D_HEAD:(n + 1) * D_HEAD].reshape(BSZ, QLEN, D_HEAD)
                for n in range(N_HEAD)]

    rwq_h = split_heads(rw_q)
    rrq_h = split_heads(rr_q)
    k_h = split_heads(k)
    v_h = split_heads(v)
    rk_pieces = []
    for n in range(N_HEAD):                                       # rk is shared across b
        piece = rk[:, n * D_HEAD:(n + 1) * D_HEAD].reshape(1, KLEN, D_HEAD)
        rk_pieces.extend([piece] * BSZ)

    # ONE batched dot_general computes AC (first HB batches) and raw BD (last HB batches)
    lhs_st = jnp.concatenate(rwq_h + rrq_h, axis=0)               # (2*HB, Q, D)
    rhs_st = jnp.concatenate(k_h + rk_pieces, axis=0)             # (2*HB, K, D)
    s_all = jnp.einsum('zqd,zkd->zqk', lhs_st, rhs_st, preferred_element_type=f32)
    ac = s_all[:HB]                                               # (HB, Q, K)
    bd = s_all[HB:]                                               # (HB, Q, K) pre rel-shift

    # -------- exact _rel_shift, all-heads-at-once, as 4 small MXU matmuls (items 1,2,7)
    bd2 = bd.reshape(ZR, KLEN)                                    # free: merge leading dims
    bd_up2 = jnp.dot(shiftup_ref[...], bd2, preferred_element_type=f32)      # bd[r+1]
    cand = (jnp.dot(bd2, mlo_ref[...], preferred_element_type=f32) +
            jnp.dot(bd_up2, mhi_ref[...], preferred_element_type=f32))       # (ZR, Q*K)
    bds2 = jnp.dot(cand * rowsel_ref[...], tilesum_ref[...],
                   preferred_element_type=f32)                    # (ZR, K)
    bds = bds2.reshape(HB, QLEN, KLEN)

    # -------- one softmax over the stacked (HB, Q, K) slab (items 3, 6)
    score = ac + bds + neg_ref[...]                               # additive mask only
    smax = jnp.max(score, axis=-1, keepdims=True)
    p = jnp.exp(score - smax)
    inv = pl.reciprocal(jnp.sum(p, axis=-1, keepdims=True), approx=True)
    prob = p * inv

    # -------- P@V as one batched einsum, heads written to scratch lanes (item 4)
    v_st = jnp.concatenate(v_h, axis=0)                           # (HB, K, D)
    pv = jnp.einsum('zqk,zkd->zqd', prob, v_st, preferred_element_type=f32)
    for n in range(N_HEAD):
        av_ref[:, n * D_HEAD:(n + 1) * D_HEAD] = (
            pv[n * BSZ:(n + 1) * BSZ].reshape(BQ, D_HEAD))

    out_ref[...] = jnp.dot(av_ref[...], wo_ref[...], preferred_element_type=f32)


# ---- wrapper ---------------------------------------------------------------
@jax.jit
def rel_partial_attn(w, mask, r, params):
    # fused projection matrix [Wqkv^T | Wr^T] with SCALE baked into the q-columns
    wqkv_t = params["wqkv"].T                                     # (d_model, 3*H*D)
    qcols = jnp.concatenate([jnp.full((HD,), SCALE, jnp.float32),
                             jnp.ones((2 * HD,), jnp.float32)])[None, :]
    wproj = jnp.concatenate([wqkv_t * qcols, params["wr"].T], axis=1)   # (32, 128)
    wo_t = params["wo"].T                                         # (H*D, d_model)
    gamma = params["gamma"].reshape(1, D_MODEL)
    beta = params["beta"].reshape(1, D_MODEL)
    rwb = params["r_w_bias"].reshape(1, HD) * SCALE
    rrb = params["r_r_bias"].reshape(1, HD) * SCALE
    w2d = w.reshape(BSZ * QLEN, D_MODEL)                          # batch folded into sublanes
    neg3 = ((1.0 - mask.astype(jnp.float32)) * (-1e30)).reshape(BSZ, QLEN, 1)
    neg_st = jnp.broadcast_to(neg3[None], (N_HEAD, BSZ, QLEN, 1)).reshape(HB, QLEN, 1)

    consts = (jnp.asarray(_M_LO), jnp.asarray(_M_HI), jnp.asarray(_ROWSEL),
              jnp.asarray(_TILESUM), jnp.asarray(_SHIFT_UP))

    vmem = pltpu.MemorySpace.VMEM
    out2d = pl.pallas_call(
        _fused_attn_kernel,
        out_shape=jax.ShapeDtypeStruct((BSZ * QLEN, D_MODEL), jnp.float32),
        in_specs=[pl.BlockSpec(memory_space=vmem) for _ in range(14)],
        out_specs=pl.BlockSpec(memory_space=vmem),
        scratch_shapes=[pltpu.VMEM((BSZ * QLEN, HD), jnp.float32)],
    )(w2d, r, neg_st, gamma, beta, wproj, rwb, rrb, wo_t, *consts)
    return out2d.reshape(BSZ, QLEN, D_MODEL)   # == torch output.permute(1,0,2)


# ---- pure-JAX reference mirroring the torch forward exactly ---------------
def _reference(w, mask, r, params):
    wq = jnp.transpose(w, (1, 0, 2))                     # (qlen, bsz, d_model)
    mu = wq.mean(-1, keepdims=True)
    var = ((wq - mu) ** 2).mean(-1, keepdims=True)
    ln = (wq - mu) / jnp.sqrt(var + LN_EPS) * params["gamma"] + params["beta"]
    w_heads = ln @ params["wqkv"].T
    r_head_k = r @ params["wr"].T
    q, k, v = jnp.split(w_heads, 3, axis=-1)
    q = q.reshape(QLEN, BSZ, N_HEAD, D_HEAD)
    k = k.reshape(KLEN, BSZ, N_HEAD, D_HEAD)
    v = v.reshape(KLEN, BSZ, N_HEAD, D_HEAD)
    rk = r_head_k.reshape(RLEN, N_HEAD, D_HEAD)
    AC = jnp.einsum('ibnd,jbnd->ijbn', q + params["r_w_bias"], k)
    BD = jnp.einsum('ibnd,jnd->ijbn', q + params["r_r_bias"], rk)
    zp = jnp.zeros((QLEN, 1, BSZ, N_HEAD), BD.dtype)
    xp = jnp.concatenate([zp, BD], axis=1).reshape(RLEN + 1, QLEN, BSZ, N_HEAD)
    BD = xp[1:].reshape(QLEN, RLEN, BSZ, N_HEAD)
    score = (AC + BD) * SCALE
    m = mask.astype(jnp.float32)[:, None, None, :]       # (bsz,1,1,qlen)
    score_p = jnp.transpose(score, (2, 3, 1, 0))         # (bsz, n, klen, qlen)
    score_p = score_p * m + (1.0 - m) * (-1e30)
    score = jnp.transpose(score_p, (3, 2, 0, 1))         # (qlen, klen, bsz, n)
    prob = jax.nn.softmax(score, axis=1)
    av = jnp.einsum('ijbn,jbnd->ibnd', prob, v).reshape(QLEN, BSZ, HD)
    out = av @ params["wo"].T
    return jnp.transpose(out, (1, 0, 2))


if __name__ == "__main__":
    key = jax.random.PRNGKey(0)
    ks = jax.random.split(key, 8)
    params = {
        # nn.Linear weights use torch layout (out_features, in_features)
        "wqkv": jax.random.normal(ks[0], (3 * HD, D_MODEL), jnp.float32) * 0.05,
        "wr": jax.random.normal(ks[1], (HD, D_MODEL), jnp.float32) * 0.05,
        "wo": jax.random.normal(ks[2], (D_MODEL, HD), jnp.float32) * 0.05,
        "r_w_bias": jax.random.normal(ks[3], (N_HEAD, D_HEAD), jnp.float32) * 0.05,
        "r_r_bias": jax.random.normal(ks[4], (N_HEAD, D_HEAD), jnp.float32) * 0.05,
        "gamma": jnp.ones((D_MODEL,), jnp.float32),
        "beta": jnp.zeros((D_MODEL,), jnp.float32),
    }
    w = jax.random.normal(ks[5], (BSZ, QLEN, D_MODEL), jnp.float32)
    r = jax.random.normal(ks[6], (RLEN, D_MODEL), jnp.float32)
    # mask: 1 = keep, 0 = pad (last two query positions of batch 1 padded)
    mask = jnp.ones((BSZ, QLEN), jnp.float32).at[1, QLEN - 2:].set(0.0)

    out = rel_partial_attn(w, mask, r, params)
    out = jax.block_until_ready(out)

    ref = _reference(w, mask, r, params)
    assert out.shape == (BSZ, QLEN, D_MODEL)
    assert bool(jnp.all(jnp.isfinite(out)))
    assert bool(jnp.allclose(out, ref, atol=2e-2, rtol=2e-2))
    print("KERNEL_OK")
</pallas_src>

<mosaic_0001>
module attributes {stable_mosaic.version = 11 : i64} {
  func.func @_fused_attn_kernel(%arg0: memref<16x32xf32, #tpu.memory_space<vmem>>, %arg1: memref<8x32xf32, #tpu.memory_space<vmem>>, %arg2: memref<8x8x1xf32, #tpu.memory_space<vmem>>, %arg3: memref<1x32xf32, #tpu.memory_space<vmem>>, %arg4: memref<1x32xf32, #tpu.memory_space<vmem>>, %arg5: memref<32x128xf32, #tpu.memory_space<vmem>>, %arg6: memref<1x32xf32, #tpu.memory_space<vmem>>, %arg7: memref<1x32xf32, #tpu.memory_space<vmem>>, %arg8: memref<32x32xf32, #tpu.memory_space<vmem>>, %arg9: memref<8x64xf32, #tpu.memory_space<vmem>>, %arg10: memref<8x64xf32, #tpu.memory_space<vmem>>, %arg11: memref<64x64xf32, #tpu.memory_space<vmem>>, %arg12: memref<64x8xf32, #tpu.memory_space<vmem>>, %arg13: memref<64x64xf32, #tpu.memory_space<vmem>>, %arg14: memref<16x32xf32, #tpu.memory_space<vmem>>, %arg15: memref<16x32xf32, #tpu.memory_space<vmem>>) attributes {dimension_semantics = [], scalar_prefetch = 0 : i64, scratch_operands = 1 : i64, tpu.core_type = #tpu.core_type<tc>} {
    %c0 = arith.constant 0 : index
    %c0_0 = arith.constant 0 : index
    %0 = vector.load %arg0[%c0, %c0_0] : memref<16x32xf32, #tpu.memory_space<vmem>>, vector<16x32xf32>
    %cst = arith.constant dense<0.000000e+00> : vector<16xf32>
    %1 = vector.multi_reduction <add>, %0, %cst [1] : vector<16x32xf32> to vector<16xf32>
    %2 = vector.shape_cast %1 : vector<16xf32> to vector<16x1xf32>
    %cst_1 = arith.constant 3.200000e+01 : f32
    %3 = vector.broadcast %cst_1 : f32 to vector<16x1xf32>
    %4 = arith.divf %2, %3 : vector<16x1xf32>
    %5 = vector.broadcast %4 : vector<16x1xf32> to vector<16x32xf32>
    %6 = arith.subf %0, %5 : vector<16x32xf32>
    %7 = arith.mulf %6, %6 : vector<16x32xf32>
    %cst_2 = arith.constant dense<0.000000e+00> : vector<16xf32>
    %8 = vector.multi_reduction <add>, %7, %cst_2 [1] : vector<16x32xf32> to vector<16xf32>
    %9 = vector.shape_cast %8 : vector<16xf32> to vector<16x1xf32>
    %cst_3 = arith.constant 3.200000e+01 : f32
    %10 = vector.broadcast %cst_3 : f32 to vector<16x1xf32>
    %11 = arith.divf %9, %10 : vector<16x1xf32>
    %cst_4 = arith.constant 9.99999974E-6 : f32
    %12 = vector.broadcast %cst_4 : f32 to vector<16x1xf32>
    %13 = arith.addf %11, %12 : vector<16x1xf32>
    %14 = math.rsqrt %13 : vector<16x1xf32>
    %15 = vector.broadcast %14 : vector<16x1xf32> to vector<16x32xf32>
    %16 = arith.mulf %6, %15 : vector<16x32xf32>
    %c0_5 = arith.constant 0 : index
    %c0_6 = arith.constant 0 : index
    %17 = vector.load %arg3[%c0_5, %c0_6] : memref<1x32xf32, #tpu.memory_space<vmem>>, vector<1x32xf32>
    %18 = vector.broadcast %17 : vector<1x32xf32> to vector<16x32xf32>
    %19 = arith.mulf %16, %18 : vector<16x32xf32>
    %c0_7 = arith.constant 0 : index
    %c0_8 = arith.constant 0 : index
    %20 = vector.load %arg4[%c0_7, %c0_8] : memref<1x32xf32, #tpu.memory_space<vmem>>, vector<1x32xf32>
    %21 = vector.broadcast %20 : vector<1x32xf32> to vector<16x32xf32>
    %22 = arith.addf %19, %21 : vector<16x32xf32>
    %c0_9 = arith.constant 0 : index
    %c0_10 = arith.constant 0 : index
    %23 = vector.load %arg1[%c0_9, %c0_10] : memref<8x32xf32, #tpu.memory_space<vmem>>, vector<8x32xf32>
    %24 = tpu.concatenate %22, %23 in 0 : vector<16x32xf32>, vector<8x32xf32> -> vector<24x32xf32>
    %c0_11 = arith.constant 0 : index
    %c0_12 = arith.constant 0 : index
    %25 = vector.load %arg5[%c0_11, %c0_12] : memref<32x128xf32, #tpu.memory_space<vmem>>, vector<32x128xf32>
    %cst_13 = arith.constant dense<0.000000e+00> : vector<24x128xf32>
    %26 = tpu.matmul %24, %25, %cst_13 {dimension_numbers = #tpu.dot_dimension_numbers<[1], [0], [0], [1], [0, 0, 1, 1], [], []>} : vector<24x32xf32>, vector<32x128xf32>, vector<24x128xf32> -> vector<24x128xf32>
    %27 = vector.extract_strided_slice %26 {offsets = [0, 0], sizes = [16, 96], strides = [1, 1]} : vector<24x128xf32> to vector<16x96xf32>
    %28 = vector.extract_strided_slice %26 {offsets = [16, 96], sizes = [8, 32], strides = [1, 1]} : vector<24x128xf32> to vector<8x32xf32>
    %29 = vector.extract_strided_slice %27 {offsets = [0, 0], sizes = [16, 32], strides = [1, 1]} : vector<16x96xf32> to vector<16x32xf32>
    %30 = vector.extract_strided_slice %27 {offsets = [0, 32], sizes = [16, 32], strides = [1, 1]} : vector<16x96xf32> to vector<16x32xf32>
    %31 = vector.extract_strided_slice %27 {offsets = [0, 64], sizes = [16, 32], strides = [1, 1]} : vector<16x96xf32> to vector<16x32xf32>
    %c0_14 = arith.constant 0 : index
    %c0_15 = arith.constant 0 : index
    %32 = vector.load %arg6[%c0_14, %c0_15] : memref<1x32xf32, #tpu.memory_space<vmem>>, vector<1x32xf32>
    %33 = vector.broadcast %32 : vector<1x32xf32> to vector<16x32xf32>
    %34 = arith.addf %29, %33 : vector<16x32xf32>
    %c0_16 = arith.constant 0 : index
    %c0_17 = arith.constant 0 : index
    %35 = vector.load %arg7[%c0_16, %c0_17] : memref<1x32xf32, #tpu.memory_space<vmem>>, vector<1x32xf32>
    %36 = vector.broadcast %35 : vector<1x32xf32> to vector<16x32xf32>
    %37 = arith.addf %29, %36 : vector<16x32xf32>
    %38 = vector.extract_strided_slice %34 {offsets = [0, 0], sizes = [16, 8], strides = [1, 1]} : vector<16x32xf32> to vector<16x8xf32>
    %39 = vector.shape_cast %38 : vector<16x8xf32> to vector<2x8x8xf32>
    %40 = vector.extract_strided_slice %34 {offsets = [0, 8], sizes = [16, 8], strides = [1, 1]} : vector<16x32xf32> to vector<16x8xf32>
    %41 = vector.shape_cast %40 : vector<16x8xf32> to vector<2x8x8xf32>
    %42 = vector.extract_strided_slice %34 {offsets = [0, 16], sizes = [16, 8], strides = [1, 1]} : vector<16x32xf32> to vector<16x8xf32>
    %43 = vector.shape_cast %42 : vector<16x8xf32> to vector<2x8x8xf32>
    %44 = vector.extract_strided_slice %34 {offsets = [0, 24], sizes = [16, 8], strides = [1, 1]} : vector<16x32xf32> to vector<16x8xf32>
    %45 = vector.shape_cast %44 : vector<16x8xf32> to vector<2x8x8xf32>
    %46 = vector.extract_strided_slice %37 {offsets = [0, 0], sizes = [16, 8], strides = [1, 1]} : vector<16x32xf32> to vector<16x8xf32>
    %47 = vector.shape_cast %46 : vector<16x8xf32> to vector<2x8x8xf32>
    %48 = vector.extract_strided_slice %37 {offsets = [0, 8], sizes = [16, 8], strides = [1, 1]} : vector<16x32xf32> to vector<16x8xf32>
    %49 = vector.shape_cast %48 : vector<16x8xf32> to vector<2x8x8xf32>
    %50 = vector.extract_strided_slice %37 {offsets = [0, 16], sizes = [16, 8], strides = [1, 1]} : vector<16x32xf32> to vector<16x8xf32>
    %51 = vector.shape_cast %50 : vector<16x8xf32> to vector<2x8x8xf32>
    %52 = vector.extract_strided_slice %37 {offsets = [0, 24], sizes = [16, 8], strides = [1, 1]} : vector<16x32xf32> to vector<16x8xf32>
    %53 = vector.shape_cast %52 : vector<16x8xf32> to vector<2x8x8xf32>
    %54 = vector.extract_strided_slice %30 {offsets = [0, 0], sizes = [16, 8], strides = [1, 1]} : vector<16x32xf32> to vector<16x8xf32>
    %55 = vector.shape_cast %54 : vector<16x8xf32> to vector<2x8x8xf32>
    %56 = vector.extract_strided_slice %30 {offsets = [0, 8], sizes = [16, 8], strides = [1, 1]} : vector<16x32xf32> to vector<16x8xf32>
    %57 = vector.shape_cast %56 : vector<16x8xf32> to vector<2x8x8xf32>
    %58 = vector.extract_strided_slice %30 {offsets = [0, 16], sizes = [16, 8], strides = [1, 1]} : vector<16x32xf32> to vector<16x8xf32>
    %59 = vector.shape_cast %58 : vector<16x8xf32> to vector<2x8x8xf32>
    %60 = vector.extract_strided_slice %30 {offsets = [0, 24], sizes = [16, 8], strides = [1, 1]} : vector<16x32xf32> to vector<16x8xf32>
    %61 = vector.shape_cast %60 : vector<16x8xf32> to vector<2x8x8xf32>
    %62 = vector.extract_strided_slice %31 {offsets = [0, 0], sizes = [16, 8], strides = [1, 1]} : vector<16x32xf32> to vector<16x8xf32>
    %63 = vector.shape_cast %62 : vector<16x8xf32> to vector<2x8x8xf32>
    %64 = vector.extract_strided_slice %31 {offsets = [0, 8], sizes = [16, 8], strides = [1, 1]} : vector<16x32xf32> to vector<16x8xf32>
    %65 = vector.shape_cast %64 : vector<16x8xf32> to vector<2x8x8xf32>
    %66 = vector.extract_strided_slice %31 {offsets = [0, 16], sizes = [16, 8], strides = [1, 1]} : vector<16x32xf32> to vector<16x8xf32>
    %67 = vector.shape_cast %66 : vector<16x8xf32> to vector<2x8x8xf32>
    %68 = vector.extract_strided_slice %31 {offsets = [0, 24], sizes = [16, 8], strides = [1, 1]} : vector<16x32xf32> to vector<16x8xf32>
    %69 = vector.shape_cast %68 : vector<16x8xf32> to vector<2x8x8xf32>
    %70 = vector.extract_strided_slice %28 {offsets = [0, 0], sizes = [8, 8], strides = [1, 1]} : vector<8x32xf32> to vector<8x8xf32>
    %71 = vector.shape_cast %70 : vector<8x8xf32> to vector<1x8x8xf32>
    %72 = vector.extract_strided_slice %28 {offsets = [0, 8], sizes = [8, 8], strides = [1, 1]} : vector<8x32xf32> to vector<8x8xf32>
    %73 = vector.shape_cast %72 : vector<8x8xf32> to vector<1x8x8xf32>
    %74 = vector.extract_strided_slice %28 {offsets = [0, 16], sizes = [8, 8], strides = [1, 1]} : vector<8x32xf32> to vector<8x8xf32>
    %75 = vector.shape_cast %74 : vector<8x8xf32> to vector<1x8x8xf32>
    %76 = vector.extract_strided_slice %28 {offsets = [0, 24], sizes = [8, 8], strides = [1, 1]} : vector<8x32xf32> to vector<8x8xf32>
    %77 = vector.shape_cast %76 : vector<8x8xf32> to vector<1x8x8xf32>
    %78 = tpu.concatenate %39, %41, %43, %45, %47, %49, %51, %53 in 0 : vector<2x8x8xf32>, vector<2x8x8xf32>, vector<2x8x8xf32>, vector<2x8x8xf32>, vector<2x8x8xf32>, vector<2x8x8xf32>, vector<2x8x8xf32>, vector<2x8x8xf32> -> vector<16x8x8xf32>
    %79 = tpu.concatenate %55, %57, %59, %61, %71, %71, %73, %73, %75, %75, %77, %77 in 0 : vector<2x8x8xf32>, vector<2x8x8xf32>, vector<2x8x8xf32>, vector<2x8x8xf32>, vector<1x8x8xf32>, vector<1x8x8xf32>, vector<1x8x8xf32>, vector<1x8x8xf32>, vector<1x8x8xf32>, vector<1x8x8xf32>, vector<1x8x8xf32>, vector<1x8x8xf32> -> vector<16x8x8xf32>
    "tpu.trace_start"() <{level = 10 : i32, message = "zqd,zkd->zqk"}> : () -> ()
    %cst_18 = arith.constant dense<0.000000e+00> : vector<16x8x8xf32>
    %80 = tpu.matmul %78, %79, %cst_18 {dimension_numbers = #tpu.dot_dimension_numbers<[2], [2], [1], [1], [0, 0, 0, 1, 1, 1], [0], [0]>} : vector<16x8x8xf32>, vector<16x8x8xf32>, vector<16x8x8xf32> -> vector<16x8x8xf32>
    "tpu.trace_stop"() : () -> ()
    %81 = vector.extract_strided_slice %80 {offsets = [0, 0, 0], sizes = [8, 8, 8], strides = [1, 1, 1]} : vector<16x8x8xf32> to vector<8x8x8xf32>
    %82 = vector.extract_strided_slice %80 {offsets = [8, 0, 0], sizes = [8, 8, 8], strides = [1, 1, 1]} : vector<16x8x8xf32> to vector<8x8x8xf32>
    %83 = vector.shape_cast %82 : vector<8x8x8xf32> to vector<64x8xf32>
    %c0_19 = arith.constant 0 : index
    %c0_20 = arith.constant 0 : index
    %84 = vector.load %arg13[%c0_19, %c0_20] : memref<64x64xf32, #tpu.memory_space<vmem>>, vector<64x64xf32>
    %cst_21 = arith.constant dense<0.000000e+00> : vector<64x8xf32>
    %85 = tpu.matmul %84, %83, %cst_21 {dimension_numbers = #tpu.dot_dimension_numbers<[1], [0], [0], [1], [0, 0, 1, 1], [], []>} : vector<64x64xf32>, vector<64x8xf32>, vector<64x8xf32> -> vector<64x8xf32>
    %c0_22 = arith.constant 0 : index
    %c0_23 = arith.constant 0 : index
    %86 = vector.load %arg9[%c0_22, %c0_23] : memref<8x64xf32, #tpu.memory_space<vmem>>, vector<8x64xf32>
    %cst_24 = arith.constant dense<0.000000e+00> : vector<64x64xf32>
    %87 = tpu.matmul %83, %86, %cst_24 {dimension_numbers = #tpu.dot_dimension_numbers<[1], [0], [0], [1], [0, 0, 1, 1], [], []>} : vector<64x8xf32>, vector<8x64xf32>, vector<64x64xf32> -> vector<64x64xf32>
    %c0_25 = arith.constant 0 : index
    %c0_26 = arith.constant 0 : index
    %88 = vector.load %arg10[%c0_25, %c0_26] : memref<8x64xf32, #tpu.memory_space<vmem>>, vector<8x64xf32>
    %cst_27 = arith.constant dense<0.000000e+00> : vector<64x64xf32>
    %89 = tpu.matmul %85, %88, %cst_27 {dimension_numbers = #tpu.dot_dimension_numbers<[1], [0], [0], [1], [0, 0, 1, 1], [], []>} : vector<64x8xf32>, vector<8x64xf32>, vector<64x64xf32> -> vector<64x64xf32>
    %90 = arith.addf %87, %89 : vector<64x64xf32>
    %c0_28 = arith.constant 0 : index
    %c0_29 = arith.constant 0 : index
    %91 = vector.load %arg11[%c0_28, %c0_29] : memref<64x64xf32, #tpu.memory_space<vmem>>, vector<64x64xf32>
    %92 = arith.mulf %90, %91 : vector<64x64xf32>
    %c0_30 = arith.constant 0 : index
    %c0_31 = arith.constant 0 : index
    %93 = vector.load %arg12[%c0_30, %c0_31] : memref<64x8xf32, #tpu.memory_space<vmem>>, vector<64x8xf32>
    %cst_32 = arith.constant dense<0.000000e+00> : vector<64x8xf32>
    %94 = tpu.matmul %92, %93, %cst_32 {dimension_numbers = #tpu.dot_dimension_numbers<[1], [0], [0], [1], [0, 0, 1, 1], [], []>} : vector<64x64xf32>, vector<64x8xf32>, vector<64x8xf32> -> vector<64x8xf32>
    %95 = vector.shape_cast %94 : vector<64x8xf32> to vector<8x8x8xf32>
    %96 = arith.addf %81, %95 : vector<8x8x8xf32>
    %c0_33 = arith.constant 0 : index
    %c0_34 = arith.constant 0 : index
    %c0_35 = arith.constant 0 : index
    %97 = vector.load %arg2[%c0_33, %c0_34, %c0_35] : memref<8x8x1xf32, #tpu.memory_space<vmem>>, vector<8x8x1xf32>
    %98 = vector.broadcast %97 : vector<8x8x1xf32> to vector<8x8x8xf32>
    %99 = arith.addf %96, %98 : vector<8x8x8xf32>
    %cst_36 = arith.constant dense<0xFF800000> : vector<8x8xf32>
    %100 = vector.multi_reduction <maximumf>, %99, %cst_36 [2] : vector<8x8x8xf32> to vector<8x8xf32>
    %101 = vector.shape_cast %100 : vector<8x8xf32> to vector<8x8x1xf32>
    %102 = vector.broadcast %101 : vector<8x8x1xf32> to vector<8x8x8xf32>
    %103 = arith.subf %99, %102 : vector<8x8x8xf32>
    %104 = math.exp %103 : vector<8x8x8xf32>
    %cst_37 = arith.constant dense<0.000000e+00> : vector<8x8xf32>
    %105 = vector.multi_reduction <add>, %104, %cst_37 [2] : vector<8x8x8xf32> to vector<8x8xf32>
    %106 = vector.shape_cast %105 : vector<8x8xf32> to vector<8x8x1xf32>
    %107 = tpu.reciprocal %106 {approx = true} : vector<8x8x1xf32> -> vector<8x8x1xf32>
    %108 = vector.broadcast %107 : vector<8x8x1xf32> to vector<8x8x8xf32>
    %109 = arith.mulf %104, %108 : vector<8x8x8xf32>
    %110 = tpu.concatenate %63, %65, %67, %69 in 0 : vector<2x8x8xf32>, vector<2x8x8xf32>, vector<2x8x8xf32>, vector<2x8x8xf32> -> vector<8x8x8xf32>
    "tpu.trace_start"() <{level = 10 : i32, message = "zqk,zkd->zqd"}> : () -> ()
    %cst_38 = arith.constant dense<0.000000e+00> : vector<8x8x8xf32>
    %111 = tpu.matmul %109, %110, %cst_38 {dimension_numbers = #tpu.dot_dimension_numbers<[2], [1], [1], [2], [0, 0, 0, 1, 1, 2], [0], [0]>} : vector<8x8x8xf32>, vector<8x8x8xf32>, vector<8x8x8xf32> -> vector<8x8x8xf32>
    "tpu.trace_stop"() : () -> ()
    %112 = vector.extract_strided_slice %111 {offsets = [0, 0, 0], sizes = [2, 8, 8], strides = [1, 1, 1]} : vector<8x8x8xf32> to vector<2x8x8xf32>
    %113 = vector.shape_cast %112 : vector<2x8x8xf32> to vector<16x8xf32>
    %c0_39 = arith.constant 0 : index
    %c0_40 = arith.constant 0 : index
    %114 = vector.load %arg15[%c0_39, %c0_40] : memref<16x32xf32, #tpu.memory_space<vmem>>, vector<16x8xf32>
    tpu.vector_store %arg15[%c0_39, %c0_40], %113 {strides = array<i32>} : memref<16x32xf32, #tpu.memory_space<vmem>>, vector<16x8xf32>,
    %115 = vector.extract_strided_slice %111 {offsets = [2, 0, 0], sizes = [2, 8, 8], strides = [1, 1, 1]} : vector<8x8x8xf32> to vector<2x8x8xf32>
    %116 = vector.shape_cast %115 : vector<2x8x8xf32> to vector<16x8xf32>
    %c0_41 = arith.constant 0 : index
    %c8 = arith.constant 8 : index
    %117 = vector.load %arg15[%c0_41, %c8] : memref<16x32xf32, #tpu.memory_space<vmem>>, vector<16x8xf32>
    tpu.vector_store %arg15[%c0_41, %c8], %116 {strides = array<i32>} : memref<16x32xf32, #tpu.memory_space<vmem>>, vector<16x8xf32>,
    %118 = vector.extract_strided_slice %111 {offsets = [4, 0, 0], sizes = [2, 8, 8], strides = [1, 1, 1]} : vector<8x8x8xf32> to vector<2x8x8xf32>
    %119 = vector.shape_cast %118 : vector<2x8x8xf32> to vector<16x8xf32>
    %c0_42 = arith.constant 0 : index
    %c16 = arith.constant 16 : index
    %120 = vector.load %arg15[%c0_42, %c16] : memref<16x32xf32, #tpu.memory_space<vmem>>, vector<16x8xf32>
    tpu.vector_store %arg15[%c0_42, %c16], %119 {strides = array<i32>} : memref<16x32xf32, #tpu.memory_space<vmem>>, vector<16x8xf32>,
    %121 = vector.extract_strided_slice %111 {offsets = [6, 0, 0], sizes = [2, 8, 8], strides = [1, 1, 1]} : vector<8x8x8xf32> to vector<2x8x8xf32>
    %122 = vector.shape_cast %121 : vector<2x8x8xf32> to vector<16x8xf32>
    %c0_43 = arith.constant 0 : index
    %c24 = arith.constant 24 : index
    %123 = vector.load %arg15[%c0_43, %c24] : memref<16x32xf32, #tpu.memory_space<vmem>>, vector<16x8xf32>
    tpu.vector_store %arg15[%c0_43, %c24], %122 {strides = array<i32>} : memref<16x32xf32, #tpu.memory_space<vmem>>, vector<16x8xf32>,
    %c0_44 = arith.constant 0 : index
    %c0_45 = arith.constant 0 : index
    %124 = vector.load %arg15[%c0_44, %c0_45] : memref<16x32xf32, #tpu.memory_space<vmem>>, vector<16x32xf32>
    %c0_46 = arith.constant 0 : index
    %c0_47 = arith.constant 0 : index
    %125 = vector.load %arg8[%c0_46, %c0_47] : memref<32x32xf32, #tpu.memory_space<vmem>>, vector<32x32xf32>
    %cst_48 = arith.constant dense<0.000000e+00> : vector<16x32xf32>
    %126 = tpu.matmul %124, %125, %cst_48 {dimension_numbers = #tpu.dot_dimension_numbers<[1], [0], [0], [1], [0, 0, 1, 1], [], []>} : vector<16x32xf32>, vector<32x32xf32>, vector<16x32xf32> -> vector<16x32xf32>
    %c0_49 = arith.constant 0 : index
    %c0_50 = arith.constant 0 : index
    %127 = vector.load %arg14[%c0_49, %c0_50] : memref<16x32xf32, #tpu.memory_space<vmem>>, vector<16x32xf32>
    tpu.vector_store %arg14[%c0_49, %c0_50], %126 {strides = array<i32>} : memref<16x32xf32, #tpu.memory_space<vmem>>, vector<16x32xf32>,
    return
  }
}

</mosaic_0001>

<llo_original>
// kernel: rel_partial_attn.1
$region0: #{rel_partial_attn.1}
  #allocation0 [shape = 'u32[]', space=smem, size = 0x4, offset = 0x4, fixed_abs, tag = 'smem constant byte address 0x4 - core index']
  #allocation1 [shape = 'u32[144,128]{1,0:T(1,128)}', space=vmem, size = 0x12000, scoped, tag = 'internal scratch']
  #allocation2 [shape = 'f32[16,32]{1,0:T(8,128)}', space=vmem, size = 0x2000, scoped, tag = 'scratch operand']
  %s0 = inlined_call_operand.vmem [shape: f32[16,32], index: 0, kind: input, shape index: {}]
  %s1 = inlined_call_operand.vmem [shape: f32[8,32], index: 1, kind: input, shape index: {}]
  %s2 = inlined_call_operand.vmem [shape: f32[8,8,1], index: 2, kind: input, shape index: {}]
  %s3 = inlined_call_operand.vmem [shape: f32[1,32], index: 3, kind: input, shape index: {}]
  %s4 = inlined_call_operand.vmem [shape: f32[1,32], index: 4, kind: input, shape index: {}]
  %s5 = inlined_call_operand.vmem [shape: f32[32,128], index: 5, kind: input, shape index: {}]
  %s6 = inlined_call_operand.vmem [shape: f32[1,32], index: 6, kind: input, shape index: {}]
  %s7 = inlined_call_operand.vmem [shape: f32[1,32], index: 7, kind: input, shape index: {}]
  %s8 = inlined_call_operand.vmem [shape: f32[32,32], index: 8, kind: input, shape index: {}]
  %s9 = inlined_call_operand.vmem [shape: f32[8,64], index: 9, kind: input, shape index: {}]
  %s10 = inlined_call_operand.vmem [shape: f32[8,64], index: 10, kind: input, shape index: {}]
  %s11 = inlined_call_operand.vmem [shape: f32[64,64], index: 11, kind: input, shape index: {}]
  %s12 = inlined_call_operand.vmem [shape: f32[64,8], index: 12, kind: input, shape index: {}]
  %s13 = inlined_call_operand.vmem [shape: f32[64,64], index: 13, kind: input, shape index: {}]
  %s14 = inlined_call_operand.hbm [shape: f32[16,32], index: 14, kind: output, shape index: {}]
  %s15 = sld [smem:[#allocation0]]
  $region66: #{rel_partial_attn.1} parent=0
    _
  %s17 = ssub.s32 1, %s15
  %s18 = scalar_select 0, %s17, %s15
  $region1: #{rel_partial_attn.1} parent=0
    #allocation3 [shape = 'u8[8192]{0}', space=vmem, size = 0x2000, scoped, tag = 'output window, operand 0, single buffered']
    #allocation4 [shape = 's32[1]{0}', space=sflag, size = 0x4, scoped, tag = 'scoped memory for rel_partial_attn.1']
    %19 = vsyncpa [#allocation4], 0
    // Predicated region
    $region2: #{rel_partial_attn.1} parent=1 // pred_check
      _
    $region3: #{rel_partial_attn.1} parent=1 // pred_check_branch
      %21 = sbr.rel (0) target = $region5
    $region4: #{rel_partial_attn.1} parent=1 // pred_region
      _
    $region5: #{rel_partial_attn.1} parent=1 // pred_fallthru
      _
    // Predicated region
    $region6: #{rel_partial_attn.1} parent=1 // pred_check
      _
    $region7: #{rel_partial_attn.1} parent=1 // pred_check_branch
      %23 = sbr.rel (0) target = $region9
    $region8: #{rel_partial_attn.1} parent=1 // pred_region
      _
    $region9: #{rel_partial_attn.1} parent=1 // pred_fallthru
      _
    // Predicated region
    $region10: #{rel_partial_attn.1} parent=1 // pred_check
      _
    $region11: #{rel_partial_attn.1} parent=1 // pred_check_branch
      %25 = sbr.rel (0) target = $region13
    $region12: #{rel_partial_attn.1} parent=1 // pred_region
      _
    $region13: #{rel_partial_attn.1} parent=1 // pred_fallthru
      _
    // Predicated region
    $region14: #{rel_partial_attn.1} parent=1 // pred_check
      _
    $region15: #{rel_partial_attn.1} parent=1 // pred_check_branch
      %27 = sbr.rel (0) target = $region17
    $region16: #{rel_partial_attn.1} parent=1 // pred_region
      _
    $region17: #{rel_partial_attn.1} parent=1 // pred_fallthru
      _
    // Predicated region
    $region18: #{rel_partial_attn.1} parent=1 // pred_check
      _
    $region19: #{rel_partial_attn.1} parent=1 // pred_check_branch
      %29 = sbr.rel (0) target = $region21
    $region20: #{rel_partial_attn.1} parent=1 // pred_region
      _
    $region21: #{rel_partial_attn.1} parent=1 // pred_fallthru
      _
    // Predicated region
    $region22: #{rel_partial_attn.1} parent=1 // pred_check
      _
    $region23: #{rel_partial_attn.1} parent=1 // pred_check_branch
      %31 = sbr.rel (0) target = $region25
    $region24: #{rel_partial_attn.1} parent=1 // pred_region
      _
    $region25: #{rel_partial_attn.1} parent=1 // pred_fallthru
      _
    // Predicated region
    $region26: #{rel_partial_attn.1} parent=1 // pred_check
      _
    $region27: #{rel_partial_attn.1} parent=1 // pred_check_branch
      %33 = sbr.rel (0) target = $region29
    $region28: #{rel_partial_attn.1} parent=1 // pred_region
      _
    $region29: #{rel_partial_attn.1} parent=1 // pred_fallthru
      _
    // Predicated region
    $region30: #{rel_partial_attn.1} parent=1 // pred_check
      _
    $region31: #{rel_partial_attn.1} parent=1 // pred_check_branch
      %35 = sbr.rel (0) target = $region33
    $region32: #{rel_partial_attn.1} parent=1 // pred_region
      _
    $region33: #{rel_partial_attn.1} parent=1 // pred_fallthru
      _
    // Predicated region
    $region34: #{rel_partial_attn.1} parent=1 // pred_check
      _
    $region35: #{rel_partial_attn.1} parent=1 // pred_check_branch
      %37 = sbr.rel (0) target = $region37
    $region36: #{rel_partial_attn.1} parent=1 // pred_region
      _
    $region37: #{rel_partial_attn.1} parent=1 // pred_fallthru
      _
    // Predicated region
    $region38: #{rel_partial_attn.1} parent=1 // pred_check
      _
    $region39: #{rel_partial_attn.1} parent=1 // pred_check_branch
      %39 = sbr.rel (0) target = $region41
    $region40: #{rel_partial_attn.1} parent=1 // pred_region
      _
    $region41: #{rel_partial_attn.1} parent=1 // pred_fallthru
      _
    // Predicated region
    $region42: #{rel_partial_attn.1} parent=1 // pred_check
      _
    $region43: #{rel_partial_attn.1} parent=1 // pred_check_branch
      %41 = sbr.rel (0) target = $region45
    $region44: #{rel_partial_attn.1} parent=1 // pred_region
      _
    $region45: #{rel_partial_attn.1} parent=1 // pred_fallthru
      _
    // Predicated region
    $region46: #{rel_partial_attn.1} parent=1 // pred_check
      _
    $region47: #{rel_partial_attn.1} parent=1 // pred_check_branch
      %43 = sbr.rel (0) target = $region49
    $region48: #{rel_partial_attn.1} parent=1 // pred_region
      _
    $region49: #{rel_partial_attn.1} parent=1 // pred_fallthru
      _
    // Predicated region
    $region50: #{rel_partial_attn.1} parent=1 // pred_check
      _
    $region51: #{rel_partial_attn.1} parent=1 // pred_check_branch
      %45 = sbr.rel (0) target = $region53
    $region52: #{rel_partial_attn.1} parent=1 // pred_region
      _
    $region53: #{rel_partial_attn.1} parent=1 // pred_fallthru
      _
    // Predicated region
    $region54: #{rel_partial_attn.1} parent=1 // pred_check
      _
    $region55: #{rel_partial_attn.1} parent=1 // pred_check_branch
      %47 = sbr.rel (0) target = $region57
    $region56: #{rel_partial_attn.1} parent=1 // pred_region
      _
    $region57: #{rel_partial_attn.1} parent=1 // pred_fallthru
      _
    %v48 = vld [vmem:[%s0] sm:$0xff]
    %v49 = vld [vmem:[%s0 + $0x8] sm:$0xff]
    %vm50 = vcmask 261120
    %v51 = vsel %vm50, %v48, 0.0
    %52 = vadd.xlane.f32.xlu0 %v51
    %v53 = vpop.xlane.xlu0 %52
    %v54 = vsel %vm50, %v49, 0.0
    %55 = vadd.xlane.f32.xlu0 %v54
    %v56 = vpop.xlane.xlu0 %55
    %v57 = vrcp.pop 32.0
    %v58 = vmul.f32 %v53, %v57
    %v59 = vmul.f32 %v56, %v57
    %v60 = vsub.f32 %v48, %v58
    %v61 = vsub.f32 %v49, %v59
    %v62 = vmul.f32 %v60, %v60
    %v63 = vmul.f32 %v61, %v61
    %v64 = vsel %vm50, %v62, 0.0
    %65 = vadd.xlane.f32.xlu0 %v64
    %v66 = vpop.xlane.xlu0 %65
    %v67 = vsel %vm50, %v63, 0.0
    %68 = vadd.xlane.f32.xlu0 %v67
    %v69 = vpop.xlane.xlu0 %68
    %v70 = vmul.f32 %v66, %v57
    %v71 = vmul.f32 %v69, %v57
    %v72 = vadd.f32 %v70, 1e-05
    %v73 = vadd.f32 %v71, 1e-05
    %v74 = vrsqrt.pop %v72
    %v75 = vrsqrt.pop %v73
    %v76 = vmul.f32 %v60, %v74
    %v77 = vmul.f32 %v61, %v75
    %v78 = vld [vmem:[%s3] sm:$0x1]
    %v80 = vlaneseq
    %v81 = vshrl.u32 %v80, 7
    %v82 = vsub.s32 0, %v81
    %v83 = vrot.slane %v78, %v82
    %v85 = vmul.f32 %v76, %v83
    %v86 = vmul.f32 %v77, %v83
    %v87 = vld [vmem:[%s4] sm:$0x1]
    %v89 = vlaneseq
    %v90 = vshrl.u32 %v89, 7
    %v91 = vsub.s32 0, %v90
    %v92 = vrot.slane %v87, %v91
    %v94 = vadd.f32 %v85, %v92
    %v95 = vadd.f32 %v86, %v92
    %v96 = vld [vmem:[%s1] sm:$0xff]
    %v97 = vld [vmem:[%s5] sm:$0xff]
    %v98 = vld [vmem:[%s5 + $0x8] sm:$0xff]
    %v99 = vld [vmem:[%s5 + $0x10] sm:$0xff]
    %v100 = vld [vmem:[%s5 + $0x18] sm:$0xff]
    %v102 = vsel %vm50, %v94, 0
    %v105 = vsel %vm50, %v95, 0
    %v108 = vsel %vm50, %v96, 0
    %110 = vmatprep.subr.mxu0 0.0
    %111 = vmatpush1.msra.mxu0 %v97
    %112 = vmatprep.subr.mxu0 0.0
    %113 = vmatpush1.msra.mxu0 %v98
    %114 = vmatprep.subr.mxu0 0.0
    %115 = vmatpush1.msra.mxu0 %v99
    %116 = vmatprep.subr.mxu0 0.0
    %117 = vmatpush1.msra.mxu0 %v100
    %118 = vmatprep.subr.mxu0 0.0
    %119 = vmatpush1.msra.mxu0 0.0
    %120 = vmatprep.subr.mxu0 0.0
    %121 = vmatpush1.msra.mxu0 0.0
    %122 = vmatprep.subr.mxu0 0.0
    %123 = vmatpush1.msra.mxu0 0.0
    %124 = vmatprep.subr.mxu0 0.0
    %125 = vmatpush1.msra.mxu0 0.0
    %126 = vmatprep.subr.mxu0 0.0
    %127 = vmatpush1.msra.mxu0 0.0
    %128 = vmatprep.subr.mxu0 0.0
    %129 = vmatpush1.msra.mxu0 0.0
    %130 = vmatprep.subr.mxu0 0.0
    %131 = vmatpush1.msra.mxu0 0.0
    %132 = vmatprep.subr.mxu0 0.0
    %133 = vmatpush1.msra.mxu0 0.0
    %134 = vmatprep.subr.mxu0 0.0
    %135 = vmatpush1.msra.mxu0 0.0
    %136 = vmatprep.subr.mxu0 0.0
    %137 = vmatpush1.msra.mxu0 0.0
    %138 = vmatprep.subr.mxu0 0.0
    %139 = vmatpush1.msra.mxu0 0.0
    %140 = vmatprep.subr.mxu0 0.0
    %141 = vmatpush1.msra.mxu0 0.0
    %142 = vmatprep.subr.mxu0 0.0
    %143 = vmatpush1.msra.mxu0 0.0
    %144 = vmatprep.subr.mxu0 0.0
    %145 = vmatpush1.msra.mxu0 0.0
    %146 = vmatprep.subr.mxu0 0.0
    %147 = vmatpush1.msra.mxu0 0.0
    %148 = vmatprep.subr.mxu0 0.0
    %149 = vmatpush1.msra.mxu0 0.0
    %150 = vmatprep.subr.mxu0 0.0
    %151 = vmatpush1.msra.mxu0 0.0
    %152 = vmatprep.subr.mxu0 0.0
    %153 = vmatpush1.msra.mxu0 0.0
    %154 = vmatprep.subr.mxu0 0.0
    %155 = vmatpush1.msra.mxu0 0.0
    %156 = vmatprep.subr.mxu0 0.0
    %157 = vmatpush1.msra.mxu0 0.0
    %158 = vmatprep.subr.mxu0 0.0
    %159 = vmatpush1.msra.mxu0 0.0
    %160 = vmatprep.subr.mxu0 0.0
    %161 = vmatpush1.msra.mxu0 0.0
    %162 = vmatprep.subr.mxu0 0.0
    %163 = vmatpush1.msra.mxu0 0.0
    %164 = vmatprep.subr.mxu0 0.0
    %165 = vmatpush1.msra.mxu0 0.0
    %166 = vmatprep.subr.mxu0 0.0
    %167 = vmatpush1.msra.mxu0 0.0
    %168 = vmatprep.subr.mxu0 0.0
    %169 = vmatpush1.msra.mxu0 0.0
    %170 = vmatprep.subr.mxu0 0.0
    %171 = vmatpush1.msra.mxu0 0.0
    %172 = vmatprep.subr.mxu0 0.0
    %173 = vmatpush1.msra.mxu0 0.0
    %174 = vmatprep.mubr.f32.mxu0 0.0
    %175 = vmatmul.mubr.f32.gmra.mrb[0].mxu0 %v102
    %v176 = vpop.f32.mrb[0].mxu0
    %v177 = vadd.f32 0.0, %v176
    %v178 = vpop.f32.mrb[0].mxu0
    %179 = vmatprep.mubr.f32.mxu0 0.0
    %180 = vmatmul.mubr.f32.gmra.mrb[0].mxu0 %v105
    %v181 = vpop.f32.mrb[0].mxu0
    %v182 = vadd.f32 0.0, %v181
    %v183 = vpop.f32.mrb[0].mxu0
    %184 = vmatprep.mubr.f32.mxu0 0.0
    %185 = vmatmul.mubr.f32.gmra.mrb[0].mxu0 %v108
    %v186 = vpop.f32.mrb[0].mxu0
    %v187 = vadd.f32 0.0, %v186
    %v188 = vpop.f32.mrb[0].mxu0
    %189 = vdwg.mxu0
    %v190 = vld [vmem:[%s6] sm:$0x1]
    %v192 = vlaneseq
    %v193 = vshrl.u32 %v192, 7
    %v194 = vsub.s32 0, %v193
    %v195 = vrot.slane %v190, %v194
    %v197 = vadd.f32 %v177, %v195
    %v198 = vadd.f32 %v182, %v195
    %v199 = vld [vmem:[%s7] sm:$0x1]
    %v201 = vlaneseq
    %v202 = vshrl.u32 %v201, 7
    %v203 = vsub.s32 0, %v202
    %v204 = vrot.slane %v199, %v203
    %v206 = vadd.f32 %v177, %v204
    %v207 = vadd.f32 %v182, %v204
    %210 = vrot.lane.b32.xlu0 %v197, 120
    %v211 = vpop.permute.xlu0 %210
    %212 = vrot.lane.b32.xlu0 %v198, 120
    %v213 = vpop.permute.xlu0 %212
    %214 = vrot.lane.b32.xlu0 %v197, 112
    %v215 = vpop.permute.xlu0 %214
    %216 = vrot.lane.b32.xlu0 %v198, 112
    %v217 = vpop.permute.xlu0 %216
    %218 = vrot.lane.b32.xlu0 %v197, 104
    %v219 = vpop.permute.xlu0 %218
    %220 = vrot.lane.b32.xlu0 %v198, 104
    %v221 = vpop.permute.xlu0 %220
    %224 = vrot.lane.b32.xlu0 %v206, 120
    %v225 = vpop.permute.xlu0 %224
    %226 = vrot.lane.b32.xlu0 %v207, 120
    %v227 = vpop.permute.xlu0 %226
    %228 = vrot.lane.b32.xlu0 %v206, 112
    %v229 = vpop.permute.xlu0 %228
    %230 = vrot.lane.b32.xlu0 %v207, 112
    %v231 = vpop.permute.xlu0 %230
    %232 = vrot.lane.b32.xlu0 %v206, 104
    %v233 = vpop.permute.xlu0 %232
    %234 = vrot.lane.b32.xlu0 %v207, 104
    %v235 = vpop.permute.xlu0 %234
    %238 = vrot.lane.b32.xlu0 %v177, 120
    %v239 = vpop.permute.xlu0 %238
    %240 = vrot.lane.b32.xlu0 %v182, 120
    %v241 = vpop.permute.xlu0 %240
    %242 = vrot.lane.b32.xlu0 %v177, 112
    %v243 = vpop.permute.xlu0 %242
    %244 = vrot.lane.b32.xlu0 %v182, 112
    %v245 = vpop.permute.xlu0 %244
    %246 = vrot.lane.b32.xlu0 %v177, 104
    %v247 = vpop.permute.xlu0 %246
    %248 = vrot.lane.b32.xlu0 %v182, 104
    %v249 = vpop.permute.xlu0 %248
    %251 = vrot.lane.b32.xlu0 %v187, 64
    %v252 = vpop.permute.xlu0 %251
    %253 = vrot.lane.b32.xlu0 %v187, 56
    %v254 = vpop.permute.xlu0 %253
    %255 = vrot.lane.b32.xlu0 %v187, 48
    %v256 = vpop.permute.xlu0 %255
    %257 = vrot.lane.b32.xlu0 %v187, 40
    %v258 = vpop.permute.xlu0 %257
    %259 = vrot.lane.b32.xlu0 %v177, 96
    %v260 = vpop.permute.xlu0 %259
    %vm261 = vcmask 64512
    %v262 = vsel %vm261, %v197, 0
    %v264 = vsel %vm261, %v260, 0
    %266 = vmatprep.subr.mxu0 0.0
    %267 = vmatpush1.xpose.msra.mxu0 %v264
    %268 = vmatprep.subr.mxu0 0.0
    %269 = vmatpush1.xpose.msra.mxu0 0.0
    %270 = vmatprep.subr.mxu0 0.0
    %271 = vmatpush1.xpose.msra.mxu0 0.0
    %272 = vmatprep.subr.mxu0 0.0
    %273 = vmatpush1.xpose.msra.mxu0 0.0
    %274 = vmatprep.subr.mxu0 0.0
    %275 = vmatpush1.xpose.msra.mxu0 0.0
    %276 = vmatprep.subr.mxu0 0.0
    %277 = vmatpush1.xpose.msra.mxu0 0.0
    %278 = vmatprep.subr.mxu0 0.0
    %279 = vmatpush1.xpose.msra.mxu0 0.0
    %280 = vmatprep.subr.mxu0 0.0
    %281 = vmatpush1.xpose.msra.mxu0 0.0
    %282 = vmatprep.subr.mxu0 0.0
    %283 = vmatpush1.xpose.msra.mxu0 0.0
    %284 = vmatprep.subr.mxu0 0.0
    %285 = vmatpush1.xpose.msra.mxu0 0.0
    %286 = vmatprep.subr.mxu0 0.0
    %287 = vmatpush1.xpose.msra.mxu0 0.0
    %288 = vmatprep.subr.mxu0 0.0
    %289 = vmatpush1.xpose.msra.mxu0 0.0
    %290 = vmatprep.subr.mxu0 0.0
    %291 = vmatpush1.xpose.msra.mxu0 0.0
    %292 = vmatprep.subr.mxu0 0.0
    %293 = vmatpush1.xpose.msra.mxu0 0.0
    %294 = vmatprep.subr.mxu0 0.0
    %295 = vmatpush1.xpose.msra.mxu0 0.0
    %296 = vmatprep.subr.mxu0 0.0
    %297 = vmatpush1.xpose.msra.mxu0 0.0
    %298 = vmatprep.subr.mxu0 0.0
    %299 = vmatpush1.xpose.msra.mxu0 0.0
    %300 = vmatprep.subr.mxu0 0.0
    %301 = vmatpush1.xpose.msra.mxu0 0.0
    %302 = vmatprep.subr.mxu0 0.0
    %303 = vmatpush1.xpose.msra.mxu0 0.0
    %304 = vmatprep.subr.mxu0 0.0
    %305 = vmatpush1.xpose.msra.mxu0 0.0
    %306 = vmatprep.subr.mxu0 0.0
    %307 = vmatpush1.xpose.msra.mxu0 0.0
    %308 = vmatprep.subr.mxu0 0.0
    %309 = vmatpush1.xpose.msra.mxu0 0.0
    %310 = vmatprep.subr.mxu0 0.0
    %311 = vmatpush1.xpose.msra.mxu0 0.0
    %312 = vmatprep.subr.mxu0 0.0
    %313 = vmatpush1.xpose.msra.mxu0 0.0
    %314 = vmatprep.subr.mxu0 0.0
    %315 = vmatpush1.xpose.msra.mxu0 0.0
    %316 = vmatprep.subr.mxu0 0.0
    %317 = vmatpush1.xpose.msra.mxu0 0.0
    %318 = vmatprep.subr.mxu0 0.0
    %319 = vmatpush1.xpose.msra.mxu0 0.0
    %320 = vmatprep.subr.mxu0 0.0
    %321 = vmatpush1.xpose.msra.mxu0 0.0
    %322 = vmatprep.subr.mxu0 0.0
    %323 = vmatpush1.xpose.msra.mxu0 0.0
    %324 = vmatprep.subr.mxu0 0.0
    %325 = vmatpush1.xpose.msra.mxu0 0.0
    %326 = vmatprep.subr.mxu0 0.0
    %327 = vmatpush1.xpose.msra.mxu0 0.0
    %328 = vmatprep.subr.mxu0 0.0
    %329 = vmatpush1.xpose.msra.mxu0 0.0
    %330 = vmatprep.mubr.f32.mxu0 0.0
    %331 = vmatmul.mubr.f32.gmra.mrb[0].mxu0 %v262
    %v332 = vpop.f32.mrb[0].mxu0
    %v333 = vadd.f32 0.0, %v332
    %v334 = vpop.f32.mrb[0].mxu0
    %335 = vdwg.mxu0
    %336 = vrot.lane.b32.xlu0 %v182, 96
    %v337 = vpop.permute.xlu0 %336
    %v338 = vsel %vm261, %v198, 0
    %v340 = vsel %vm261, %v337, 0
    %342 = vmatprep.subr.mxu0 0.0
    %343 = vmatpush1.xpose.msra.mxu0 %v340
    %344 = vmatprep.subr.mxu0 0.0
    %345 = vmatpush1.xpose.msra.mxu0 0.0
    %346 = vmatprep.subr.mxu0 0.0
    %347 = vmatpush1.xpose.msra.mxu0 0.0
    %348 = vmatprep.subr.mxu0 0.0
    %349 = vmatpush1.xpose.msra.mxu0 0.0
    %350 = vmatprep.subr.mxu0 0.0
    %351 = vmatpush1.xpose.msra.mxu0 0.0
    %352 = vmatprep.subr.mxu0 0.0
    %353 = vmatpush1.xpose.msra.mxu0 0.0
    %354 = vmatprep.subr.mxu0 0.0
    %355 = vmatpush1.xpose.msra.mxu0 0.0
    %356 = vmatprep.subr.mxu0 0.0
    %357 = vmatpush1.xpose.msra.mxu0 0.0
    %358 = vmatprep.subr.mxu0 0.0
    %359 = vmatpush1.xpose.msra.mxu0 0.0
    %360 = vmatprep.subr.mxu0 0.0
    %361 = vmatpush1.xpose.msra.mxu0 0.0
    %362 = vmatprep.subr.mxu0 0.0
    %363 = vmatpush1.xpose.msra.mxu0 0.0
    %364 = vmatprep.subr.mxu0 0.0
    %365 = vmatpush1.xpose.msra.mxu0 0.0
    %366 = vmatprep.subr.mxu0 0.0
    %367 = vmatpush1.xpose.msra.mxu0 0.0
    %368 = vmatprep.subr.mxu0 0.0
    %369 = vmatpush1.xpose.msra.mxu0 0.0
    %370 = vmatprep.subr.mxu0 0.0
    %371 = vmatpush1.xpose.msra.mxu0 0.0
    %372 = vmatprep.subr.mxu0 0.0
    %373 = vmatpush1.xpose.msra.mxu0 0.0
    %374 = vmatprep.subr.mxu0 0.0
    %375 = vmatpush1.xpose.msra.mxu0 0.0
    %376 = vmatprep.subr.mxu0 0.0
    %377 = vmatpush1.xpose.msra.mxu0 0.0
    %378 = vmatprep.subr.mxu0 0.0
    %379 = vmatpush1.xpose.msra.mxu0 0.0
    %380 = vmatprep.subr.mxu0 0.0
    %381 = vmatpush1.xpose.msra.mxu0 0.0
    %382 = vmatprep.subr.mxu0 0.0
    %383 = vmatpush1.xpose.msra.mxu0 0.0
    %384 = vmatprep.subr.mxu0 0.0
    %385 = vmatpush1.xpose.msra.mxu0 0.0
    %386 = vmatprep.subr.mxu0 0.0
    %387 = vmatpush1.xpose.msra.mxu0 0.0
    %388 = vmatprep.subr.mxu0 0.0
    %389 = vmatpush1.xpose.msra.mxu0 0.0
    %390 = vmatprep.subr.mxu0 0.0
    %391 = vmatpush1.xpose.msra.mxu0 0.0
    %392 = vmatprep.subr.mxu0 0.0
    %393 = vmatpush1.xpose.msra.mxu0 0.0
    %394 = vmatprep.subr.mxu0 0.0
    %395 = vmatpush1.xpose.msra.mxu0 0.0
    %396 = vmatprep.subr.mxu0 0.0
    %397 = vmatpush1.xpose.msra.mxu0 0.0
    %398 = vmatprep.subr.mxu0 0.0
    %399 = vmatpush1.xpose.msra.mxu0 0.0
    %400 = vmatprep.subr.mxu0 0.0
    %401 = vmatpush1.xpose.msra.mxu0 0.0
    %402 = vmatprep.subr.mxu0 0.0
    %403 = vmatpush1.xpose.msra.mxu0 0.0
    %404 = vmatprep.subr.mxu0 0.0
    %405 = vmatpush1.xpose.msra.mxu0 0.0
    %406 = vmatprep.mubr.f32.mxu0 0.0
    %407 = vmatmul.mubr.f32.gmra.mrb[0].mxu0 %v338
    %v408 = vpop.f32.mrb[0].mxu0
    %v409 = vadd.f32 0.0, %v408
    %v410 = vpop.f32.mrb[0].mxu0
    %411 = vdwg.mxu0
    %412 = vrot.lane.b32.xlu0 %v239, 96
    %v413 = vpop.permute.xlu0 %412
    %v414 = vsel %vm261, %v211, 0
    %v416 = vsel %vm261, %v413, 0
    %418 = vmatprep.subr.mxu0 0.0
    %419 = vmatpush1.xpose.msra.mxu0 %v416
    %420 = vmatprep.subr.mxu0 0.0
    %421 = vmatpush1.xpose.msra.mxu0 0.0
    %422 = vmatprep.subr.mxu0 0.0
    %423 = vmatpush1.xpose.msra.mxu0 0.0
    %424 = vmatprep.subr.mxu0 0.0
    %425 = vmatpush1.xpose.msra.mxu0 0.0
    %426 = vmatprep.subr.mxu0 0.0
    %427 = vmatpush1.xpose.msra.mxu0 0.0
    %428 = vmatprep.subr.mxu0 0.0
    %429 = vmatpush1.xpose.msra.mxu0 0.0
    %430 = vmatprep.subr.mxu0 0.0
    %431 = vmatpush1.xpose.msra.mxu0 0.0
    %432 = vmatprep.subr.mxu0 0.0
    %433 = vmatpush1.xpose.msra.mxu0 0.0
    %434 = vmatprep.subr.mxu0 0.0
    %435 = vmatpush1.xpose.msra.mxu0 0.0
    %436 = vmatprep.subr.mxu0 0.0
    %437 = vmatpush1.xpose.msra.mxu0 0.0
    %438 = vmatprep.subr.mxu0 0.0
    %439 = vmatpush1.xpose.msra.mxu0 0.0
    %440 = vmatprep.subr.mxu0 0.0
    %441 = vmatpush1.xpose.msra.mxu0 0.0
    %442 = vmatprep.subr.mxu0 0.0
    %443 = vmatpush1.xpose.msra.mxu0 0.0
    %444 = vmatprep.subr.mxu0 0.0
    %445 = vmatpush1.xpose.msra.mxu0 0.0
    %446 = vmatprep.subr.mxu0 0.0
    %447 = vmatpush1.xpose.msra.mxu0 0.0
    %448 = vmatprep.subr.mxu0 0.0
    %449 = vmatpush1.xpose.msra.mxu0 0.0
    %450 = vmatprep.subr.mxu0 0.0
    %451 = vmatpush1.xpose.msra.mxu0 0.0
    %452 = vmatprep.subr.mxu0 0.0
    %453 = vmatpush1.xpose.msra.mxu0 0.0
    %454 = vmatprep.subr.mxu0 0.0
    %455 = vmatpush1.xpose.msra.mxu0 0.0
    %456 = vmatprep.subr.mxu0 0.0
    %457 = vmatpush1.xpose.msra.mxu0 0.0
    %458 = vmatprep.subr.mxu0 0.0
    %459 = vmatpush1.xpose.msra.mxu0 0.0
    %460 = vmatprep.subr.mxu0 0.0
    %461 = vmatpush1.xpose.msra.mxu0 0.0
    %462 = vmatprep.subr.mxu0 0.0
    %463 = vmatpush1.xpose.msra.mxu0 0.0
    %464 = vmatprep.subr.mxu0 0.0
    %465 = vmatpush1.xpose.msra.mxu0 0.0
    %466 = vmatprep.subr.mxu0 0.0
    %467 = vmatpush1.xpose.msra.mxu0 0.0
    %468 = vmatprep.subr.mxu0 0.0
    %469 = vmatpush1.xpose.msra.mxu0 0.0
    %470 = vmatprep.subr.mxu0 0.0
    %471 = vmatpush1.xpose.msra.mxu0 0.0
    %472 = vmatprep.subr.mxu0 0.0
    %473 = vmatpush1.xpose.msra.mxu0 0.0
    %474 = vmatprep.subr.mxu0 0.0
    %475 = vmatpush1.xpose.msra.mxu0 0.0
    %476 = vmatprep.subr.mxu0 0.0
    %477 = vmatpush1.xpose.msra.mxu0 0.0
    %478 = vmatprep.subr.mxu0 0.0
    %479 = vmatpush1.xpose.msra.mxu0 0.0
    %480 = vmatprep.subr.mxu0 0.0
    %481 = vmatpush1.xpose.msra.mxu0 0.0
    %482 = vmatprep.mubr.f32.mxu0 0.0
    %483 = vmatmul.mubr.f32.gmra.mrb[0].mxu0 %v414
    %v484 = vpop.f32.mrb[0].mxu0
    %v485 = vadd.f32 0.0, %v484
    %v486 = vpop.f32.mrb[0].mxu0
    %487 = vdwg.mxu0
    %488 = vrot.lane.b32.xlu0 %v241, 96
    %v489 = vpop.permute.xlu0 %488
    %v490 = vsel %vm261, %v213, 0
    %v492 = vsel %vm261, %v489, 0
    %494 = vmatprep.subr.mxu0 0.0
    %495 = vmatpush1.xpose.msra.mxu0 %v492
    %496 = vmatprep.subr.mxu0 0.0
    %497 = vmatpush1.xpose.msra.mxu0 0.0
    %498 = vmatprep.subr.mxu0 0.0
    %499 = vmatpush1.xpose.msra.mxu0 0.0
    %500 = vmatprep.subr.mxu0 0.0
    %501 = vmatpush1.xpose.msra.mxu0 0.0
    %502 = vmatprep.subr.mxu0 0.0
    %503 = vmatpush1.xpose.msra.mxu0 0.0
    %504 = vmatprep.subr.mxu0 0.0
    %505 = vmatpush1.xpose.msra.mxu0 0.0
    %506 = vmatprep.subr.mxu0 0.0
    %507 = vmatpush1.xpose.msra.mxu0 0.0
    %508 = vmatprep.subr.mxu0 0.0
    %509 = vmatpush1.xpose.msra.mxu0 0.0
    %510 = vmatprep.subr.mxu0 0.0
    %511 = vmatpush1.xpose.msra.mxu0 0.0
    %512 = vmatprep.subr.mxu0 0.0
    %513 = vmatpush1.xpose.msra.mxu0 0.0
    %514 = vmatprep.subr.mxu0 0.0
    %515 = vmatpush1.xpose.msra.mxu0 0.0
    %516 = vmatprep.subr.mxu0 0.0
    %517 = vmatpush1.xpose.msra.mxu0 0.0
    %518 = vmatprep.subr.mxu0 0.0
    %519 = vmatpush1.xpose.msra.mxu0 0.0
    %520 = vmatprep.subr.mxu0 0.0
    %521 = vmatpush1.xpose.msra.mxu0 0.0
    %522 = vmatprep.subr.mxu0 0.0
    %523 = vmatpush1.xpose.msra.mxu0 0.0
    %524 = vmatprep.subr.mxu0 0.0
    %525 = vmatpush1.xpose.msra.mxu0 0.0
    %526 = vmatprep.subr.mxu0 0.0
    %527 = vmatpush1.xpose.msra.mxu0 0.0
    %528 = vmatprep.subr.mxu0 0.0
    %529 = vmatpush1.xpose.msra.mxu0 0.0
    %530 = vmatprep.subr.mxu0 0.0
    %531 = vmatpush1.xpose.msra.mxu0 0.0
    %532 = vmatprep.subr.mxu0 0.0
    %533 = vmatpush1.xpose.msra.mxu0 0.0
    %534 = vmatprep.subr.mxu0 0.0
    %535 = vmatpush1.xpose.msra.mxu0 0.0
    %536 = vmatprep.subr.mxu0 0.0
    %537 = vmatpush1.xpose.msra.mxu0 0.0
    %538 = vmatprep.subr.mxu0 0.0
    %539 = vmatpush1.xpose.msra.mxu0 0.0
    %540 = vmatprep.subr.mxu0 0.0
    %541 = vmatpush1.xpose.msra.mxu0 0.0
    %542 = vmatprep.subr.mxu0 0.0
    %543 = vmatpush1.xpose.msra.mxu0 0.0
    %544 = vmatprep.subr.mxu0 0.0
    %545 = vmatpush1.xpose.msra.mxu0 0.0
    %546 = vmatprep.subr.mxu0 0.0
    %547 = vmatpush1.xpose.msra.mxu0 0.0
    %548 = vmatprep.subr.mxu0 0.0
    %549 = vmatpush1.xpose.msra.mxu0 0.0
    %550 = vmatprep.subr.mxu0 0.0
    %551 = vmatpush1.xpose.msra.mxu0 0.0
    %552 = vmatprep.subr.mxu0 0.0
    %553 = vmatpush1.xpose.msra.mxu0 0.0
    %554 = vmatprep.subr.mxu0 0.0
    %555 = vmatpush1.xpose.msra.mxu0 0.0
    %556 = vmatprep.subr.mxu0 0.0
    %557 = vmatpush1.xpose.msra.mxu0 0.0
    %558 = vmatprep.mubr.f32.mxu0 0.0
    %559 = vmatmul.mubr.f32.gmra.mrb[0].mxu0 %v490
    %v560 = vpop.f32.mrb[0].mxu0
    %v561 = vadd.f32 0.0, %v560
    %v562 = vpop.f32.mrb[0].mxu0
    %563 = vdwg.mxu0
    %564 = vrot.lane.b32.xlu0 %v243, 96
    %v565 = vpop.permute.xlu0 %564
    %v566 = vsel %vm261, %v215, 0
    %v568 = vsel %vm261, %v565, 0
    %570 = vmatprep.subr.mxu0 0.0
    %571 = vmatpush1.xpose.msra.mxu0 %v568
    %572 = vmatprep.subr.mxu0 0.0
    %573 = vmatpush1.xpose.msra.mxu0 0.0
    %574 = vmatprep.subr.mxu0 0.0
    %575 = vmatpush1.xpose.msra.mxu0 0.0
    %576 = vmatprep.subr.mxu0 0.0
    %577 = vmatpush1.xpose.msra.mxu0 0.0
    %578 = vmatprep.subr.mxu0 0.0
    %579 = vmatpush1.xpose.msra.mxu0 0.0
    %580 = vmatprep.subr.mxu0 0.0
    %581 = vmatpush1.xpose.msra.mxu0 0.0
    %582 = vmatprep.subr.mxu0 0.0
    %583 = vmatpush1.xpose.msra.mxu0 0.0
    %584 = vmatprep.subr.mxu0 0.0
    %585 = vmatpush1.xpose.msra.mxu0 0.0
    %586 = vmatprep.subr.mxu0 0.0
    %587 = vmatpush1.xpose.msra.mxu0 0.0
    %588 = vmatprep.subr.mxu0 0.0
    %589 = vmatpush1.xpose.msra.mxu0 0.0
    %590 = vmatprep.subr.mxu0 0.0
    %591 = vmatpush1.xpose.msra.mxu0 0.0
    %592 = vmatprep.subr.mxu0 0.0
    %593 = vmatpush1.xpose.msra.mxu0 0.0
    %594 = vmatprep.subr.mxu0 0.0
    %595 = vmatpush1.xpose.msra.mxu0 0.0
    %596 = vmatprep.subr.mxu0 0.0
    %597 = vmatpush1.xpose.msra.mxu0 0.0
    %598 = vmatprep.subr.mxu0 0.0
    %599 = vmatpush1.xpose.msra.mxu0 0.0
    %600 = vmatprep.subr.mxu0 0.0
    %601 = vmatpush1.xpose.msra.mxu0 0.0
    %602 = vmatprep.subr.mxu0 0.0
    %603 = vmatpush1.xpose.msra.mxu0 0.0
    %604 = vmatprep.subr.mxu0 0.0
    %605 = vmatpush1.xpose.msra.mxu0 0.0
    %606 = vmatprep.subr.mxu0 0.0
    %607 = vmatpush1.xpose.msra.mxu0 0.0
    %608 = vmatprep.subr.mxu0 0.0
    %609 = vmatpush1.xpose.msra.mxu0 0.0
    %610 = vmatprep.subr.mxu0 0.0
    %611 = vmatpush1.xpose.msra.mxu0 0.0
    %612 = vmatprep.subr.mxu0 0.0
    %613 = vmatpush1.xpose.msra.mxu0 0.0
    %614 = vmatprep.subr.mxu0 0.0
    %615 = vmatpush1.xpose.msra.mxu0 0.0
    %616 = vmatprep.subr.mxu0 0.0
    %617 = vmatpush1.xpose.msra.mxu0 0.0
    %618 = vmatprep.subr.mxu0 0.0
    %619 = vmatpush1.xpose.msra.mxu0 0.0
    %620 = vmatprep.subr.mxu0 0.0
    %621 = vmatpush1.xpose.msra.mxu0 0.0
    %622 = vmatprep.subr.mxu0 0.0
    %623 = vmatpush1.xpose.msra.mxu0 0.0
    %624 = vmatprep.subr.mxu0 0.0
    %625 = vmatpush1.xpose.msra.mxu0 0.0
    %626 = vmatprep.subr.mxu0 0.0
    %627 = vmatpush1.xpose.msra.mxu0 0.0
    %628 = vmatprep.subr.mxu0 0.0
    %629 = vmatpush1.xpose.msra.mxu0 0.0
    %630 = vmatprep.subr.mxu0 0.0
    %631 = vmatpush1.xpose.msra.mxu0 0.0
    %632 = vmatprep.subr.mxu0 0.0
    %633 = vmatpush1.xpose.msra.mxu0 0.0
    %634 = vmatprep.mubr.f32.mxu0 0.0
    %635 = vmatmul.mubr.f32.gmra.mrb[0].mxu0 %v566
    %v636 = vpop.f32.mrb[0].mxu0
    %v637 = vadd.f32 0.0, %v636
    %v638 = vpop.f32.mrb[0].mxu0
    %639 = vdwg.mxu0
    %640 = vrot.lane.b32.xlu0 %v245, 96
    %v641 = vpop.permute.xlu0 %640
    %v642 = vsel %vm261, %v217, 0
    %v644 = vsel %vm261, %v641, 0
    %646 = vmatprep.subr.mxu0 0.0
    %647 = vmatpush1.xpose.msra.mxu0 %v644
    %648 = vmatprep.subr.mxu0 0.0
    %649 = vmatpush1.xpose.msra.mxu0 0.0
    %650 = vmatprep.subr.mxu0 0.0
    %651 = vmatpush1.xpose.msra.mxu0 0.0
    %652 = vmatprep.subr.mxu0 0.0
    %653 = vmatpush1.xpose.msra.mxu0 0.0
    %654 = vmatprep.subr.mxu0 0.0
    %655 = vmatpush1.xpose.msra.mxu0 0.0
    %656 = vmatprep.subr.mxu0 0.0
    %657 = vmatpush1.xpose.msra.mxu0 0.0
    %658 = vmatprep.subr.mxu0 0.0
    %659 = vmatpush1.xpose.msra.mxu0 0.0
    %660 = vmatprep.subr.mxu0 0.0
    %661 = vmatpush1.xpose.msra.mxu0 0.0
    %662 = vmatprep.subr.mxu0 0.0
    %663 = vmatpush1.xpose.msra.mxu0 0.0
    %664 = vmatprep.subr.mxu0 0.0
    %665 = vmatpush1.xpose.msra.mxu0 0.0
    %666 = vmatprep.subr.mxu0 0.0
    %667 = vmatpush1.xpose.msra.mxu0 0.0
    %668 = vmatprep.subr.mxu0 0.0
    %669 = vmatpush1.xpose.msra.mxu0 0.0
    %670 = vmatprep.subr.mxu0 0.0
    %671 = vmatpush1.xpose.msra.mxu0 0.0
    %672 = vmatprep.subr.mxu0 0.0
    %673 = vmatpush1.xpose.msra.mxu0 0.0
    %674 = vmatprep.subr.mxu0 0.0
    %675 = vmatpush1.xpose.msra.mxu0 0.0
    %676 = vmatprep.subr.mxu0 0.0
    %677 = vmatpush1.xpose.msra.mxu0 0.0
    %678 = vmatprep.subr.mxu0 0.0
    %679 = vmatpush1.xpose.msra.mxu0 0.0
    %680 = vmatprep.subr.mxu0 0.0
    %681 = vmatpush1.xpose.msra.mxu0 0.0
    %682 = vmatprep.subr.mxu0 0.0
    %683 = vmatpush1.xpose.msra.mxu0 0.0
    %684 = vmatprep.subr.mxu0 0.0
    %685 = vmatpush1.xpose.msra.mxu0 0.0
    %686 = vmatprep.subr.mxu0 0.0
    %687 = vmatpush1.xpose.msra.mxu0 0.0
    %688 = vmatprep.subr.mxu0 0.0
    %689 = vmatpush1.xpose.msra.mxu0 0.0
    %690 = vmatprep.subr.mxu0 0.0
    %691 = vmatpush1.xpose.msra.mxu0 0.0
    %692 = vmatprep.subr.mxu0 0.0
    %693 = vmatpush1.xpose.msra.mxu0 0.0
    %694 = vmatprep.subr.mxu0 0.0
    %695 = vmatpush1.xpose.msra.mxu0 0.0
    %696 = vmatprep.subr.mxu0 0.0
    %697 = vmatpush1.xpose.msra.mxu0 0.0
    %698 = vmatprep.subr.mxu0 0.0
    %699 = vmatpush1.xpose.msra.mxu0 0.0
    %700 = vmatprep.subr.mxu0 0.0
    %701 = vmatpush1.xpose.msra.mxu0 0.0
    %702 = vmatprep.subr.mxu0 0.0
    %703 = vmatpush1.xpose.msra.mxu0 0.0
    %704 = vmatprep.subr.mxu0 0.0
    %705 = vmatpush1.xpose.msra.mxu0 0.0
    %706 = vmatprep.subr.mxu0 0.0
    %707 = vmatpush1.xpose.msra.mxu0 0.0
    %708 = vmatprep.subr.mxu0 0.0
    %709 = vmatpush1.xpose.msra.mxu0 0.0
    %710 = vmatprep.mubr.f32.mxu0 0.0
    %711 = vmatmul.mubr.f32.gmra.mrb[0].mxu0 %v642
    %v712 = vpop.f32.mrb[0].mxu0
    %v713 = vadd.f32 0.0, %v712
    %v714 = vpop.f32.mrb[0].mxu0
    %715 = vdwg.mxu0
    %716 = vrot.lane.b32.xlu0 %v247, 96
    %v717 = vpop.permute.xlu0 %716
    %v718 = vsel %vm261, %v219, 0
    %v720 = vsel %vm261, %v717, 0
    %722 = vmatprep.subr.mxu0 0.0
    %723 = vmatpush1.xpose.msra.mxu0 %v720
    %724 = vmatprep.subr.mxu0 0.0
    %725 = vmatpush1.xpose.msra.mxu0 0.0
    %726 = vmatprep.subr.mxu0 0.0
    %727 = vmatpush1.xpose.msra.mxu0 0.0
    %728 = vmatprep.subr.mxu0 0.0
    %729 = vmatpush1.xpose.msra.mxu0 0.0
    %730 = vmatprep.subr.mxu0 0.0
    %731 = vmatpush1.xpose.msra.mxu0 0.0
    %732 = vmatprep.subr.mxu0 0.0
    %733 = vmatpush1.xpose.msra.mxu0 0.0
    %734 = vmatprep.subr.mxu0 0.0
    %735 = vmatpush1.xpose.msra.mxu0 0.0
    %736 = vmatprep.subr.mxu0 0.0
    %737 = vmatpush1.xpose.msra.mxu0 0.0
    %738 = vmatprep.subr.mxu0 0.0
    %739 = vmatpush1.xpose.msra.mxu0 0.0
    %740 = vmatprep.subr.mxu0 0.0
    %741 = vmatpush1.xpose.msra.mxu0 0.0
    %742 = vmatprep.subr.mxu0 0.0
    %743 = vmatpush1.xpose.msra.mxu0 0.0
    %744 = vmatprep.subr.mxu0 0.0
    %745 = vmatpush1.xpose.msra.mxu0 0.0
    %746 = vmatprep.subr.mxu0 0.0
    %747 = vmatpush1.xpose.msra.mxu0 0.0
    %748 = vmatprep.subr.mxu0 0.0
    %749 = vmatpush1.xpose.msra.mxu0 0.0
    %750 = vmatprep.subr.mxu0 0.0
    %751 = vmatpush1.xpose.msra.mxu0 0.0
    %752 = vmatprep.subr.mxu0 0.0
    %753 = vmatpush1.xpose.msra.mxu0 0.0
    %754 = vmatprep.subr.mxu0 0.0
    %755 = vmatpush1.xpose.msra.mxu0 0.0
    %756 = vmatprep.subr.mxu0 0.0
    %757 = vmatpush1.xpose.msra.mxu0 0.0
    %758 = vmatprep.subr.mxu0 0.0
    %759 = vmatpush1.xpose.msra.mxu0 0.0
    %760 = vmatprep.subr.mxu0 0.0
    %761 = vmatpush1.xpose.msra.mxu0 0.0
    %762 = vmatprep.subr.mxu0 0.0
    %763 = vmatpush1.xpose.msra.mxu0 0.0
    %764 = vmatprep.subr.mxu0 0.0
    %765 = vmatpush1.xpose.msra.mxu0 0.0
    %766 = vmatprep.subr.mxu0 0.0
    %767 = vmatpush1.xpose.msra.mxu0 0.0
    %768 = vmatprep.subr.mxu0 0.0
    %769 = vmatpush1.xpose.msra.mxu0 0.0
    %770 = vmatprep.subr.mxu0 0.0
    %771 = vmatpush1.xpose.msra.mxu0 0.0
    %772 = vmatprep.subr.mxu0 0.0
    %773 = vmatpush1.xpose.msra.mxu0 0.0
    %774 = vmatprep.subr.mxu0 0.0
    %775 = vmatpush1.xpose.msra.mxu0 0.0
    %776 = vmatprep.subr.mxu0 0.0
    %777 = vmatpush1.xpose.msra.mxu0 0.0
    %778 = vmatprep.subr.mxu0 0.0
    %779 = vmatpush1.xpose.msra.mxu0 0.0
    %780 = vmatprep.subr.mxu0 0.0
    %781 = vmatpush1.xpose.msra.mxu0 0.0
    %782 = vmatprep.subr.mxu0 0.0
    %783 = vmatpush1.xpose.msra.mxu0 0.0
    %784 = vmatprep.subr.mxu0 0.0
    %785 = vmatpush1.xpose.msra.mxu0 0.0
    %786 = vmatprep.mubr.f32.mxu0 0.0
    %787 = vmatmul.mubr.f32.gmra.mrb[0].mxu0 %v718
    %v788 = vpop.f32.mrb[0].mxu0
    %v789 = vadd.f32 0.0, %v788
    %v790 = vpop.f32.mrb[0].mxu0
    %791 = vdwg.mxu0
    %792 = vrot.lane.b32.xlu0 %v249, 96
    %v793 = vpop.permute.xlu0 %792
    %v794 = vsel %vm261, %v221, 0
    %v796 = vsel %vm261, %v793, 0
    %798 = vmatprep.subr.mxu0 0.0
    %799 = vmatpush1.xpose.msra.mxu0 %v796
    %800 = vmatprep.subr.mxu0 0.0
    %801 = vmatpush1.xpose.msra.mxu0 0.0
    %802 = vmatprep.subr.mxu0 0.0
    %803 = vmatpush1.xpose.msra.mxu0 0.0
    %804 = vmatprep.subr.mxu0 0.0
    %805 = vmatpush1.xpose.msra.mxu0 0.0
    %806 = vmatprep.subr.mxu0 0.0
    %807 = vmatpush1.xpose.msra.mxu0 0.0
    %808 = vmatprep.subr.mxu0 0.0
    %809 = vmatpush1.xpose.msra.mxu0 0.0
    %810 = vmatprep.subr.mxu0 0.0
    %811 = vmatpush1.xpose.msra.mxu0 0.0
    %812 = vmatprep.subr.mxu0 0.0
    %813 = vmatpush1.xpose.msra.mxu0 0.0
    %814 = vmatprep.subr.mxu0 0.0
    %815 = vmatpush1.xpose.msra.mxu0 0.0
    %816 = vmatprep.subr.mxu0 0.0
    %817 = vmatpush1.xpose.msra.mxu0 0.0
    %818 = vmatprep.subr.mxu0 0.0
    %819 = vmatpush1.xpose.msra.mxu0 0.0
    %820 = vmatprep.subr.mxu0 0.0
    %821 = vmatpush1.xpose.msra.mxu0 0.0
    %822 = vmatprep.subr.mxu0 0.0
    %823 = vmatpush1.xpose.msra.mxu0 0.0
    %824 = vmatprep.subr.mxu0 0.0
    %825 = vmatpush1.xpose.msra.mxu0 0.0
    %826 = vmatprep.subr.mxu0 0.0
    %827 = vmatpush1.xpose.msra.mxu0 0.0
    %828 = vmatprep.subr.mxu0 0.0
    %829 = vmatpush1.xpose.msra.mxu0 0.0
    %830 = vmatprep.subr.mxu0 0.0
    %831 = vmatpush1.xpose.msra.mxu0 0.0
    %832 = vmatprep.subr.mxu0 0.0
    %833 = vmatpush1.xpose.msra.mxu0 0.0
    %834 = vmatprep.subr.mxu0 0.0
    %835 = vmatpush1.xpose.msra.mxu0 0.0
    %836 = vmatprep.subr.mxu0 0.0
    %837 = vmatpush1.xpose.msra.mxu0 0.0
    %838 = vmatprep.subr.mxu0 0.0
    %839 = vmatpush1.xpose.msra.mxu0 0.0
    %840 = vmatprep.subr.mxu0 0.0
    %841 = vmatpush1.xpose.msra.mxu0 0.0
    %842 = vmatprep.subr.mxu0 0.0
    %843 = vmatpush1.xpose.msra.mxu0 0.0
    %844 = vmatprep.subr.mxu0 0.0
    %845 = vmatpush1.xpose.msra.mxu0 0.0
    %846 = vmatprep.subr.mxu0 0.0
    %847 = vmatpush1.xpose.msra.mxu0 0.0
    %848 = vmatprep.subr.mxu0 0.0
    %849 = vmatpush1.xpose.msra.mxu0 0.0
    %850 = vmatprep.subr.mxu0 0.0
    %851 = vmatpush1.xpose.msra.mxu0 0.0
    %852 = vmatprep.subr.mxu0 0.0
    %853 = vmatpush1.xpose.msra.mxu0 0.0
    %854 = vmatprep.subr.mxu0 0.0
    %855 = vmatpush1.xpose.msra.mxu0 0.0
    %856 = vmatprep.subr.mxu0 0.0
    %857 = vmatpush1.xpose.msra.mxu0 0.0
    %858 = vmatprep.subr.mxu0 0.0
    %859 = vmatpush1.xpose.msra.mxu0 0.0
    %860 = vmatprep.subr.mxu0 0.0
    %861 = vmatpush1.xpose.msra.mxu0 0.0
    %862 = vmatprep.mubr.f32.mxu0 0.0
    %863 = vmatmul.mubr.f32.gmra.mrb[0].mxu0 %v794
    %v864 = vpop.f32.mrb[0].mxu0
    %v865 = vadd.f32 0.0, %v864
    %v866 = vpop.f32.mrb[0].mxu0
    %867 = vdwg.mxu0
    %868 = vrot.lane.b32.xlu0 %v252, 96
    %v869 = vpop.permute.xlu0 %868
    %v870 = vsel %vm261, %v206, 0
    %v872 = vsel %vm261, %v869, 0
    %874 = vmatprep.subr.mxu0 0.0
    %875 = vmatpush1.xpose.msra.mxu0 %v872
    %876 = vmatprep.subr.mxu0 0.0
    %877 = vmatpush1.xpose.msra.mxu0 0.0
    %878 = vmatprep.subr.mxu0 0.0
    %879 = vmatpush1.xpose.msra.mxu0 0.0
    %880 = vmatprep.subr.mxu0 0.0
    %881 = vmatpush1.xpose.msra.mxu0 0.0
    %882 = vmatprep.subr.mxu0 0.0
    %883 = vmatpush1.xpose.msra.mxu0 0.0
    %884 = vmatprep.subr.mxu0 0.0
    %885 = vmatpush1.xpose.msra.mxu0 0.0
    %886 = vmatprep.subr.mxu0 0.0
    %887 = vmatpush1.xpose.msra.mxu0 0.0
    %888 = vmatprep.subr.mxu0 0.0
    %889 = vmatpush1.xpose.msra.mxu0 0.0
    %890 = vmatprep.subr.mxu0 0.0
    %891 = vmatpush1.xpose.msra.mxu0 0.0
    %892 = vmatprep.subr.mxu0 0.0
    %893 = vmatpush1.xpose.msra.mxu0 0.0
    %894 = vmatprep.subr.mxu0 0.0
    %895 = vmatpush1.xpose.msra.mxu0 0.0
    %896 = vmatprep.subr.mxu0 0.0
    %897 = vmatpush1.xpose.msra.mxu0 0.0
    %898 = vmatprep.subr.mxu0 0.0
    %899 = vmatpush1.xpose.msra.mxu0 0.0
    %900 = vmatprep.subr.mxu0 0.0
    %901 = vmatpush1.xpose.msra.mxu0 0.0
    %902 = vmatprep.subr.mxu0 0.0
    %903 = vmatpush1.xpose.msra.mxu0 0.0
    %904 = vmatprep.subr.mxu0 0.0
    %905 = vmatpush1.xpose.msra.mxu0 0.0
    %906 = vmatprep.subr.mxu0 0.0
    %907 = vmatpush1.xpose.msra.mxu0 0.0
    %908 = vmatprep.subr.mxu0 0.0
    %909 = vmatpush1.xpose.msra.mxu0 0.0
    %910 = vmatprep.subr.mxu0 0.0
    %911 = vmatpush1.xpose.msra.mxu0 0.0
    %912 = vmatprep.subr.mxu0 0.0
    %913 = vmatpush1.xpose.msra.mxu0 0.0
    %914 = vmatprep.subr.mxu0 0.0
    %915 = vmatpush1.xpose.msra.mxu0 0.0
    %916 = vmatprep.subr.mxu0 0.0
    %917 = vmatpush1.xpose.msra.mxu0 0.0
    %918 = vmatprep.subr.mxu0 0.0
    %919 = vmatpush1.xpose.msra.mxu0 0.0
    %920 = vmatprep.subr.mxu0 0.0
    %921 = vmatpush1.xpose.msra.mxu0 0.0
    %922 = vmatprep.subr.mxu0 0.0
    %923 = vmatpush1.xpose.msra.mxu0 0.0
    %924 = vmatprep.subr.mxu0 0.0
    %925 = vmatpush1.xpose.msra.mxu0 0.0
    %926 = vmatprep.subr.mxu0 0.0
    %927 = vmatpush1.xpose.msra.mxu0 0.0
    %928 = vmatprep.subr.mxu0 0.0
    %929 = vmatpush1.xpose.msra.mxu0 0.0
    %930 = vmatprep.subr.mxu0 0.0
    %931 = vmatpush1.xpose.msra.mxu0 0.0
    %932 = vmatprep.subr.mxu0 0.0
    %933 = vmatpush1.xpose.msra.mxu0 0.0
    %934 = vmatprep.subr.mxu0 0.0
    %935 = vmatpush1.xpose.msra.mxu0 0.0
    %936 = vmatprep.subr.mxu0 0.0
    %937 = vmatpush1.xpose.msra.mxu0 0.0
    %938 = vmatprep.mubr.f32.mxu0 0.0
    %939 = vmatmul.mubr.f32.gmra.mrb[0].mxu0 %v870
    %v940 = vpop.f32.mrb[0].mxu0
    %v941 = vadd.f32 0.0, %v940
    %v942 = vpop.f32.mrb[0].mxu0
    %943 = vdwg.mxu0
    %v944 = vsel %vm261, %v207, 0
    %946 = vmatprep.subr.mxu0 0.0
    %947 = vmatpush1.xpose.msra.mxu0 %v872
    %948 = vmatprep.subr.mxu0 0.0
    %949 = vmatpush1.xpose.msra.mxu0 0.0
    %950 = vmatprep.subr.mxu0 0.0
    %951 = vmatpush1.xpose.msra.mxu0 0.0
    %952 = vmatprep.subr.mxu0 0.0
    %953 = vmatpush1.xpose.msra.mxu0 0.0
    %954 = vmatprep.subr.mxu0 0.0
    %955 = vmatpush1.xpose.msra.mxu0 0.0
    %956 = vmatprep.subr.mxu0 0.0
    %957 = vmatpush1.xpose.msra.mxu0 0.0
    %958 = vmatprep.subr.mxu0 0.0
    %959 = vmatpush1.xpose.msra.mxu0 0.0
    %960 = vmatprep.subr.mxu0 0.0
    %961 = vmatpush1.xpose.msra.mxu0 0.0
    %962 = vmatprep.subr.mxu0 0.0
    %963 = vmatpush1.xpose.msra.mxu0 0.0
    %964 = vmatprep.subr.mxu0 0.0
    %965 = vmatpush1.xpose.msra.mxu0 0.0
    %966 = vmatprep.subr.mxu0 0.0
    %967 = vmatpush1.xpose.msra.mxu0 0.0
    %968 = vmatprep.subr.mxu0 0.0
    %969 = vmatpush1.xpose.msra.mxu0 0.0
    %970 = vmatprep.subr.mxu0 0.0
    %971 = vmatpush1.xpose.msra.mxu0 0.0
    %972 = vmatprep.subr.mxu0 0.0
    %973 = vmatpush1.xpose.msra.mxu0 0.0
    %974 = vmatprep.subr.mxu0 0.0
    %975 = vmatpush1.xpose.msra.mxu0 0.0
    %976 = vmatprep.subr.mxu0 0.0
    %977 = vmatpush1.xpose.msra.mxu0 0.0
    %978 = vmatprep.subr.mxu0 0.0
    %979 = vmatpush1.xpose.msra.mxu0 0.0
    %980 = vmatprep.subr.mxu0 0.0
    %981 = vmatpush1.xpose.msra.mxu0 0.0
    %982 = vmatprep.subr.mxu0 0.0
    %983 = vmatpush1.xpose.msra.mxu0 0.0
    %984 = vmatprep.subr.mxu0 0.0
    %985 = vmatpush1.xpose.msra.mxu0 0.0
    %986 = vmatprep.subr.mxu0 0.0
    %987 = vmatpush1.xpose.msra.mxu0 0.0
    %988 = vmatprep.subr.mxu0 0.0
    %989 = vmatpush1.xpose.msra.mxu0 0.0
    %990 = vmatprep.subr.mxu0 0.0
    %991 = vmatpush1.xpose.msra.mxu0 0.0
    %992 = vmatprep.subr.mxu0 0.0
    %993 = vmatpush1.xpose.msra.mxu0 0.0
    %994 = vmatprep.subr.mxu0 0.0
    %995 = vmatpush1.xpose.msra.mxu0 0.0
    %996 = vmatprep.subr.mxu0 0.0
    %997 = vmatpush1.xpose.msra.mxu0 0.0
    %998 = vmatprep.subr.mxu0 0.0
    %999 = vmatpush1.xpose.msra.mxu0 0.0
    %1000 = vmatprep.subr.mxu0 0.0
    %1001 = vmatpush1.xpose.msra.mxu0 0.0
    %1002 = vmatprep.subr.mxu0 0.0
    %1003 = vmatpush1.xpose.msra.mxu0 0.0
    %1004 = vmatprep.subr.mxu0 0.0
    %1005 = vmatpush1.xpose.msra.mxu0 0.0
    %1006 = vmatprep.subr.mxu0 0.0
    %1007 = vmatpush1.xpose.msra.mxu0 0.0
    %1008 = vmatprep.subr.mxu0 0.0
    %1009 = vmatpush1.xpose.msra.mxu0 0.0
    %1010 = vmatprep.mubr.f32.mxu0 0.0
    %1011 = vmatmul.mubr.f32.gmra.mrb[0].mxu0 %v944
    %v1012 = vpop.f32.mrb[0].mxu0
    %v1013 = vadd.f32 0.0, %v1012
    %v1014 = vpop.f32.mrb[0].mxu0
    %1015 = vdwg.mxu0
    %1016 = vrot.lane.b32.xlu0 %v254, 96
    %v1017 = vpop.permute.xlu0 %1016
    %v1018 = vsel %vm261, %v225, 0
    %v1020 = vsel %vm261, %v1017, 0
    %1022 = vmatprep.subr.mxu0 0.0
    %1023 = vmatpush1.xpose.msra.mxu0 %v1020
    %1024 = vmatprep.subr.mxu0 0.0
    %1025 = vmatpush1.xpose.msra.mxu0 0.0
    %1026 = vmatprep.subr.mxu0 0.0
    %1027 = vmatpush1.xpose.msra.mxu0 0.0
    %1028 = vmatprep.subr.mxu0 0.0
    %1029 = vmatpush1.xpose.msra.mxu0 0.0
    %1030 = vmatprep.subr.mxu0 0.0
    %1031 = vmatpush1.xpose.msra.mxu0 0.0
    %1032 = vmatprep.subr.mxu0 0.0
    %1033 = vmatpush1.xpose.msra.mxu0 0.0
    %1034 = vmatprep.subr.mxu0 0.0
    %1035 = vmatpush1.xpose.msra.mxu0 0.0
    %1036 = vmatprep.subr.mxu0 0.0
    %1037 = vmatpush1.xpose.msra.mxu0 0.0
    %1038 = vmatprep.subr.mxu0 0.0
    %1039 = vmatpush1.xpose.msra.mxu0 0.0
    %1040 = vmatprep.subr.mxu0 0.0
    %1041 = vmatpush1.xpose.msra.mxu0 0.0
    %1042 = vmatprep.subr.mxu0 0.0
    %1043 = vmatpush1.xpose.msra.mxu0 0.0
    %1044 = vmatprep.subr.mxu0 0.0
    %1045 = vmatpush1.xpose.msra.mxu0 0.0
    %1046 = vmatprep.subr.mxu0 0.0
    %1047 = vmatpush1.xpose.msra.mxu0 0.0
    %1048 = vmatprep.subr.mxu0 0.0
    %1049 = vmatpush1.xpose.msra.mxu0 0.0
    %1050 = vmatprep.subr.mxu0 0.0
    %1051 = vmatpush1.xpose.msra.mxu0 0.0
    %1052 = vmatprep.subr.mxu0 0.0
    %1053 = vmatpush1.xpose.msra.mxu0 0.0
    %1054 = vmatprep.subr.mxu0 0.0
    %1055 = vmatpush1.xpose.msra.mxu0 0.0
    %1056 = vmatprep.subr.mxu0 0.0
    %1057 = vmatpush1.xpose.msra.mxu0 0.0
    %1058 = vmatprep.subr.mxu0 0.0
    %1059 = vmatpush1.xpose.msra.mxu0 0.0
    %1060 = vmatprep.subr.mxu0 0.0
    %1061 = vmatpush1.xpose.msra.mxu0 0.0
    %1062 = vmatprep.subr.mxu0 0.0
    %1063 = vmatpush1.xpose.msra.mxu0 0.0
    %1064 = vmatprep.subr.mxu0 0.0
    %1065 = vmatpush1.xpose.msra.mxu0 0.0
    %1066 = vmatprep.subr.mxu0 0.0
    %1067 = vmatpush1.xpose.msra.mxu0 0.0
    %1068 = vmatprep.subr.mxu0 0.0
    %1069 = vmatpush1.xpose.msra.mxu0 0.0
    %1070 = vmatprep.subr.mxu0 0.0
    %1071 = vmatpush1.xpose.msra.mxu0 0.0
    %1072 = vmatprep.subr.mxu0 0.0
    %1073 = vmatpush1.xpose.msra.mxu0 0.0
    %1074 = vmatprep.subr.mxu0 0.0
    %1075 = vmatpush1.xpose.msra.mxu0 0.0
    %1076 = vmatprep.subr.mxu0 0.0
    %1077 = vmatpush1.xpose.msra.mxu0 0.0
    %1078 = vmatprep.subr.mxu0 0.0
    %1079 = vmatpush1.xpose.msra.mxu0 0.0
    %1080 = vmatprep.subr.mxu0 0.0
    %1081 = vmatpush1.xpose.msra.mxu0 0.0
    %1082 = vmatprep.subr.mxu0 0.0
    %1083 = vmatpush1.xpose.msra.mxu0 0.0
    %1084 = vmatprep.subr.mxu0 0.0
    %1085 = vmatpush1.xpose.msra.mxu0 0.0
    %1086 = vmatprep.mubr.f32.mxu0 0.0
    %1087 = vmatmul.mubr.f32.gmra.mrb[0].mxu0 %v1018
    %v1088 = vpop.f32.mrb[0].mxu0
    %v1089 = vadd.f32 0.0, %v1088
    %v1090 = vpop.f32.mrb[0].mxu0
    %1091 = vdwg.mxu0
    %v1092 = vsel %vm261, %v227, 0
    %1094 = vmatprep.subr.mxu0 0.0
    %1095 = vmatpush1.xpose.msra.mxu0 %v1020
    %1096 = vmatprep.subr.mxu0 0.0
    %1097 = vmatpush1.xpose.msra.mxu0 0.0
    %1098 = vmatprep.subr.mxu0 0.0
    %1099 = vmatpush1.xpose.msra.mxu0 0.0
    %1100 = vmatprep.subr.mxu0 0.0
    %1101 = vmatpush1.xpose.msra.mxu0 0.0
    %1102 = vmatprep.subr.mxu0 0.0
    %1103 = vmatpush1.xpose.msra.mxu0 0.0
    %1104 = vmatprep.subr.mxu0 0.0
    %1105 = vmatpush1.xpose.msra.mxu0 0.0
    %1106 = vmatprep.subr.mxu0 0.0
    %1107 = vmatpush1.xpose.msra.mxu0 0.0
    %1108 = vmatprep.subr.mxu0 0.0
    %1109 = vmatpush1.xpose.msra.mxu0 0.0
    %1110 = vmatprep.subr.mxu0 0.0
    %1111 = vmatpush1.xpose.msra.mxu0 0.0
    %1112 = vmatprep.subr.mxu0 0.0
    %1113 = vmatpush1.xpose.msra.mxu0 0.0
    %1114 = vmatprep.subr.mxu0 0.0
    %1115 = vmatpush1.xpose.msra.mxu0 0.0
    %1116 = vmatprep.subr.mxu0 0.0
    %1117 = vmatpush1.xpose.msra.mxu0 0.0
    %1118 = vmatprep.subr.mxu0 0.0
    %1119 = vmatpush1.xpose.msra.mxu0 0.0
    %1120 = vmatprep.subr.mxu0 0.0
    %1121 = vmatpush1.xpose.msra.mxu0 0.0
    %1122 = vmatprep.subr.mxu0 0.0
    %1123 = vmatpush1.xpose.msra.mxu0 0.0
    %1124 = vmatprep.subr.mxu0 0.0
    %1125 = vmatpush1.xpose.msra.mxu0 0.0
    %1126 = vmatprep.subr.mxu0 0.0
    %1127 = vmatpush1.xpose.msra.mxu0 0.0
    %1128 = vmatprep.subr.mxu0 0.0
    %1129 = vmatpush1.xpose.msra.mxu0 0.0
    %1130 = vmatprep.subr.mxu0 0.0
    %1131 = vmatpush1.xpose.msra.mxu0 0.0
    %1132 = vmatprep.subr.mxu0 0.0
    %1133 = vmatpush1.xpose.msra.mxu0 0.0
    %1134 = vmatprep.subr.mxu0 0.0
    %1135 = vmatpush1.xpose.msra.mxu0 0.0
    %1136 = vmatprep.subr.mxu0 0.0
    %1137 = vmatpush1.xpose.msra.mxu0 0.0
    %1138 = vmatprep.subr.mxu0 0.0
    %1139 = vmatpush1.xpose.msra.mxu0 0.0
    %1140 = vmatprep.subr.mxu0 0.0
    %1141 = vmatpush1.xpose.msra.mxu0 0.0
    %1142 = vmatprep.subr.mxu0 0.0
    %1143 = vmatpush1.xpose.msra.mxu0 0.0
    %1144 = vmatprep.subr.mxu0 0.0
    %1145 = vmatpush1.xpose.msra.mxu0 0.0
    %1146 = vmatprep.subr.mxu0 0.0
    %1147 = vmatpush1.xpose.msra.mxu0 0.0
    %1148 = vmatprep.subr.mxu0 0.0
    %1149 = vmatpush1.xpose.msra.mxu0 0.0
    %1150 = vmatprep.subr.mxu0 0.0
    %1151 = vmatpush1.xpose.msra.mxu0 0.0
    %1152 = vmatprep.subr.mxu0 0.0
    %1153 = vmatpush1.xpose.msra.mxu0 0.0
    %1154 = vmatprep.subr.mxu0 0.0
    %1155 = vmatpush1.xpose.msra.mxu0 0.0
    %1156 = vmatprep.subr.mxu0 0.0
    %1157 = vmatpush1.xpose.msra.mxu0 0.0
    %1158 = vmatprep.mubr.f32.mxu0 0.0
    %1159 = vmatmul.mubr.f32.gmra.mrb[0].mxu0 %v1092
    %v1160 = vpop.f32.mrb[0].mxu0
    %v1161 = vadd.f32 0.0, %v1160
    %v1162 = vpop.f32.mrb[0].mxu0
    %1163 = vdwg.mxu0
    %1164 = vrot.lane.b32.xlu0 %v256, 96
    %v1165 = vpop.permute.xlu0 %1164
    %v1166 = vsel %vm261, %v229, 0
    %v1168 = vsel %vm261, %v1165, 0
    %1170 = vmatprep.subr.mxu0 0.0
    %1171 = vmatpush1.xpose.msra.mxu0 %v1168
    %1172 = vmatprep.subr.mxu0 0.0
    %1173 = vmatpush1.xpose.msra.mxu0 0.0
    %1174 = vmatprep.subr.mxu0 0.0
    %1175 = vmatpush1.xpose.msra.mxu0 0.0
    %1176 = vmatprep.subr.mxu0 0.0
    %1177 = vmatpush1.xpose.msra.mxu0 0.0
    %1178 = vmatprep.subr.mxu0 0.0
    %1179 = vmatpush1.xpose.msra.mxu0 0.0
    %1180 = vmatprep.subr.mxu0 0.0
    %1181 = vmatpush1.xpose.msra.mxu0 0.0
    %1182 = vmatprep.subr.mxu0 0.0
    %1183 = vmatpush1.xpose.msra.mxu0 0.0
    %1184 = vmatprep.subr.mxu0 0.0
    %1185 = vmatpush1.xpose.msra.mxu0 0.0
    %1186 = vmatprep.subr.mxu0 0.0
    %1187 = vmatpush1.xpose.msra.mxu0 0.0
    %1188 = vmatprep.subr.mxu0 0.0
    %1189 = vmatpush1.xpose.msra.mxu0 0.0
    %1190 = vmatprep.subr.mxu0 0.0
    %1191 = vmatpush1.xpose.msra.mxu0 0.0
    %1192 = vmatprep.subr.mxu0 0.0
    %1193 = vmatpush1.xpose.msra.mxu0 0.0
    %1194 = vmatprep.subr.mxu0 0.0
    %1195 = vmatpush1.xpose.msra.mxu0 0.0
    %1196 = vmatprep.subr.mxu0 0.0
    %1197 = vmatpush1.xpose.msra.mxu0 0.0
    %1198 = vmatprep.subr.mxu0 0.0
    %1199 = vmatpush1.xpose.msra.mxu0 0.0
    %1200 = vmatprep.subr.mxu0 0.0
    %1201 = vmatpush1.xpose.msra.mxu0 0.0
    %1202 = vmatprep.subr.mxu0 0.0
    %1203 = vmatpush1.xpose.msra.mxu0 0.0
    %1204 = vmatprep.subr.mxu0 0.0
    %1205 = vmatpush1.xpose.msra.mxu0 0.0
    %1206 = vmatprep.subr.mxu0 0.0
    %1207 = vmatpush1.xpose.msra.mxu0 0.0
    %1208 = vmatprep.subr.mxu0 0.0
    %1209 = vmatpush1.xpose.msra.mxu0 0.0
    %1210 = vmatprep.subr.mxu0 0.0
    %1211 = vmatpush1.xpose.msra.mxu0 0.0
    %1212 = vmatprep.subr.mxu0 0.0
    %1213 = vmatpush1.xpose.msra.mxu0 0.0
    %1214 = vmatprep.subr.mxu0 0.0
    %1215 = vmatpush1.xpose.msra.mxu0 0.0
    %1216 = vmatprep.subr.mxu0 0.0
    %1217 = vmatpush1.xpose.msra.mxu0 0.0
    %1218 = vmatprep.subr.mxu0 0.0
    %1219 = vmatpush1.xpose.msra.mxu0 0.0
    %1220 = vmatprep.subr.mxu0 0.0
    %1221 = vmatpush1.xpose.msra.mxu0 0.0
    %1222 = vmatprep.subr.mxu0 0.0
    %1223 = vmatpush1.xpose.msra.mxu0 0.0
    %1224 = vmatprep.subr.mxu0 0.0
    %1225 = vmatpush1.xpose.msra.mxu0 0.0
    %1226 = vmatprep.subr.mxu0 0.0
    %1227 = vmatpush1.xpose.msra.mxu0 0.0
    %1228 = vmatprep.subr.mxu0 0.0
    %1229 = vmatpush1.xpose.msra.mxu0 0.0
    %1230 = vmatprep.subr.mxu0 0.0
    %1231 = vmatpush1.xpose.msra.mxu0 0.0
    %1232 = vmatprep.subr.mxu0 0.0
    %1233 = vmatpush1.xpose.msra.mxu0 0.0
    %1234 = vmatprep.mubr.f32.mxu0 0.0
    %1235 = vmatmul.mubr.f32.gmra.mrb[0].mxu0 %v1166
    %v1236 = vpop.f32.mrb[0].mxu0
    %v1237 = vadd.f32 0.0, %v1236
    %v1238 = vpop.f32.mrb[0].mxu0
    %1239 = vdwg.mxu0
    %v1240 = vsel %vm261, %v231, 0
    %1242 = vmatprep.subr.mxu0 0.0
    %1243 = vmatpush1.xpose.msra.mxu0 %v1168
    %1244 = vmatprep.subr.mxu0 0.0
    %1245 = vmatpush1.xpose.msra.mxu0 0.0
    %1246 = vmatprep.subr.mxu0 0.0
    %1247 = vmatpush1.xpose.msra.mxu0 0.0
    %1248 = vmatprep.subr.mxu0 0.0
    %1249 = vmatpush1.xpose.msra.mxu0 0.0
    %1250 = vmatprep.subr.mxu0 0.0
    %1251 = vmatpush1.xpose.msra.mxu0 0.0
    %1252 = vmatprep.subr.mxu0 0.0
    %1253 = vmatpush1.xpose.msra.mxu0 0.0
    %1254 = vmatprep.subr.mxu0 0.0
    %1255 = vmatpush1.xpose.msra.mxu0 0.0
    %1256 = vmatprep.subr.mxu0 0.0
    %1257 = vmatpush1.xpose.msra.mxu0 0.0
    %1258 = vmatprep.subr.mxu0 0.0
    %1259 = vmatpush1.xpose.msra.mxu0 0.0
    %1260 = vmatprep.subr.mxu0 0.0
    %1261 = vmatpush1.xpose.msra.mxu0 0.0
    %1262 = vmatprep.subr.mxu0 0.0
    %1263 = vmatpush1.xpose.msra.mxu0 0.0
    %1264 = vmatprep.subr.mxu0 0.0
    %1265 = vmatpush1.xpose.msra.mxu0 0.0
    %1266 = vmatprep.subr.mxu0 0.0
    %1267 = vmatpush1.xpose.msra.mxu0 0.0
    %1268 = vmatprep.subr.mxu0 0.0
    %1269 = vmatpush1.xpose.msra.mxu0 0.0
    %1270 = vmatprep.subr.mxu0 0.0
    %1271 = vmatpush1.xpose.msra.mxu0 0.0
    %1272 = vmatprep.subr.mxu0 0.0
    %1273 = vmatpush1.xpose.msra.mxu0 0.0
    %1274 = vmatprep.subr.mxu0 0.0
    %1275 = vmatpush1.xpose.msra.mxu0 0.0
    %1276 = vmatprep.subr.mxu0 0.0
    %1277 = vmatpush1.xpose.msra.mxu0 0.0
    %1278 = vmatprep.subr.mxu0 0.0
    %1279 = vmatpush1.xpose.msra.mxu0 0.0
    %1280 = vmatprep.subr.mxu0 0.0
    %1281 = vmatpush1.xpose.msra.mxu0 0.0
    %1282 = vmatprep.subr.mxu0 0.0
    %1283 = vmatpush1.xpose.msra.mxu0 0.0
    %1284 = vmatprep.subr.mxu0 0.0
    %1285 = vmatpush1.xpose.msra.mxu0 0.0
    %1286 = vmatprep.subr.mxu0 0.0
    %1287 = vmatpush1.xpose.msra.mxu0 0.0
    %1288 = vmatprep.subr.mxu0 0.0
    %1289 = vmatpush1.xpose.msra.mxu0 0.0
    %1290 = vmatprep.subr.mxu0 0.0
    %1291 = vmatpush1.xpose.msra.mxu0 0.0
    %1292 = vmatprep.subr.mxu0 0.0
    %1293 = vmatpush1.xpose.msra.mxu0 0.0
    %1294 = vmatprep.subr.mxu0 0.0
    %1295 = vmatpush1.xpose.msra.mxu0 0.0
    %1296 = vmatprep.subr.mxu0 0.0
    %1297 = vmatpush1.xpose.msra.mxu0 0.0
    %1298 = vmatprep.subr.mxu0 0.0
    %1299 = vmatpush1.xpose.msra.mxu0 0.0
    %1300 = vmatprep.subr.mxu0 0.0
    %1301 = vmatpush1.xpose.msra.mxu0 0.0
    %1302 = vmatprep.subr.mxu0 0.0
    %1303 = vmatpush1.xpose.msra.mxu0 0.0
    %1304 = vmatprep.subr.mxu0 0.0
    %1305 = vmatpush1.xpose.msra.mxu0 0.0
    %1306 = vmatprep.mubr.f32.mxu0 0.0
    %1307 = vmatmul.mubr.f32.gmra.mrb[0].mxu0 %v1240
    %v1308 = vpop.f32.mrb[0].mxu0
    %v1309 = vadd.f32 0.0, %v1308
    %v1310 = vpop.f32.mrb[0].mxu0
    %1311 = vdwg.mxu0
    %1312 = vrot.lane.b32.xlu0 %v258, 96
    %v1313 = vpop.permute.xlu0 %1312
    %v1314 = vsel %vm261, %v233, 0
    %v1316 = vsel %vm261, %v1313, 0
    %1318 = vmatprep.subr.mxu0 0.0
    %1319 = vmatpush1.xpose.msra.mxu0 %v1316
    %1320 = vmatprep.subr.mxu0 0.0
    %1321 = vmatpush1.xpose.msra.mxu0 0.0
    %1322 = vmatprep.subr.mxu0 0.0
    %1323 = vmatpush1.xpose.msra.mxu0 0.0
    %1324 = vmatprep.subr.mxu0 0.0
    %1325 = vmatpush1.xpose.msra.mxu0 0.0
    %1326 = vmatprep.subr.mxu0 0.0
    %1327 = vmatpush1.xpose.msra.mxu0 0.0
    %1328 = vmatprep.subr.mxu0 0.0
    %1329 = vmatpush1.xpose.msra.mxu0 0.0
    %1330 = vmatprep.subr.mxu0 0.0
    %1331 = vmatpush1.xpose.msra.mxu0 0.0
    %1332 = vmatprep.subr.mxu0 0.0
    %1333 = vmatpush1.xpose.msra.mxu0 0.0
    %1334 = vmatprep.subr.mxu0 0.0
    %1335 = vmatpush1.xpose.msra.mxu0 0.0
    %1336 = vmatprep.subr.mxu0 0.0
    %1337 = vmatpush1.xpose.msra.mxu0 0.0
    %1338 = vmatprep.subr.mxu0 0.0
    %1339 = vmatpush1.xpose.msra.mxu0 0.0
    %1340 = vmatprep.subr.mxu0 0.0
    %1341 = vmatpush1.xpose.msra.mxu0 0.0
    %1342 = vmatprep.subr.mxu0 0.0
    %1343 = vmatpush1.xpose.msra.mxu0 0.0
    %1344 = vmatprep.subr.mxu0 0.0
    %1345 = vmatpush1.xpose.msra.mxu0 0.0
    %1346 = vmatprep.subr.mxu0 0.0
    %1347 = vmatpush1.xpose.msra.mxu0 0.0
    %1348 = vmatprep.subr.mxu0 0.0
    %1349 = vmatpush1.xpose.msra.mxu0 0.0
    %1350 = vmatprep.subr.mxu0 0.0
    %1351 = vmatpush1.xpose.msra.mxu0 0.0
    %1352 = vmatprep.subr.mxu0 0.0
    %1353 = vmatpush1.xpose.msra.mxu0 0.0
    %1354 = vmatprep.subr.mxu0 0.0
    %1355 = vmatpush1.xpose.msra.mxu0 0.0
    %1356 = vmatprep.subr.mxu0 0.0
    %1357 = vmatpush1.xpose.msra.mxu0 0.0
    %1358 = vmatprep.subr.mxu0 0.0
    %1359 = vmatpush1.xpose.msra.mxu0 0.0
    %1360 = vmatprep.subr.mxu0 0.0
    %1361 = vmatpush1.xpose.msra.mxu0 0.0
    %1362 = vmatprep.subr.mxu0 0.0
    %1363 = vmatpush1.xpose.msra.mxu0 0.0
    %1364 = vmatprep.subr.mxu0 0.0
    %1365 = vmatpush1.xpose.msra.mxu0 0.0
    %1366 = vmatprep.subr.mxu0 0.0
    %1367 = vmatpush1.xpose.msra.mxu0 0.0
    %1368 = vmatprep.subr.mxu0 0.0
    %1369 = vmatpush1.xpose.msra.mxu0 0.0
    %1370 = vmatprep.subr.mxu0 0.0
    %1371 = vmatpush1.xpose.msra.mxu0 0.0
    %1372 = vmatprep.subr.mxu0 0.0
    %1373 = vmatpush1.xpose.msra.mxu0 0.0
    %1374 = vmatprep.subr.mxu0 0.0
    %1375 = vmatpush1.xpose.msra.mxu0 0.0
    %1376 = vmatprep.subr.mxu0 0.0
    %1377 = vmatpush1.xpose.msra.mxu0 0.0
    %1378 = vmatprep.subr.mxu0 0.0
    %1379 = vmatpush1.xpose.msra.mxu0 0.0
    %1380 = vmatprep.subr.mxu0 0.0
    %1381 = vmatpush1.xpose.msra.mxu0 0.0
    %1382 = vmatprep.mubr.f32.mxu0 0.0
    %1383 = vmatmul.mubr.f32.gmra.mrb[0].mxu0 %v1314
    %v1384 = vpop.f32.mrb[0].mxu0
    %v1385 = vadd.f32 0.0, %v1384
    %v1386 = vpop.f32.mrb[0].mxu0
    %1387 = vdwg.mxu0
    %v1388 = vsel %vm261, %v235, 0
    %1390 = vmatprep.subr.mxu0 0.0
    %1391 = vmatpush1.xpose.msra.mxu0 %v1316
    %1392 = vmatprep.subr.mxu0 0.0
    %1393 = vmatpush1.xpose.msra.mxu0 0.0
    %1394 = vmatprep.subr.mxu0 0.0
    %1395 = vmatpush1.xpose.msra.mxu0 0.0
    %1396 = vmatprep.subr.mxu0 0.0
    %1397 = vmatpush1.xpose.msra.mxu0 0.0
    %1398 = vmatprep.subr.mxu0 0.0
    %1399 = vmatpush1.xpose.msra.mxu0 0.0
    %1400 = vmatprep.subr.mxu0 0.0
    %1401 = vmatpush1.xpose.msra.mxu0 0.0
    %1402 = vmatprep.subr.mxu0 0.0
    %1403 = vmatpush1.xpose.msra.mxu0 0.0
    %1404 = vmatprep.subr.mxu0 0.0
    %1405 = vmatpush1.xpose.msra.mxu0 0.0
    %1406 = vmatprep.subr.mxu0 0.0
    %1407 = vmatpush1.xpose.msra.mxu0 0.0
    %1408 = vmatprep.subr.mxu0 0.0
    %1409 = vmatpush1.xpose.msra.mxu0 0.0
    %1410 = vmatprep.subr.mxu0 0.0
    %1411 = vmatpush1.xpose.msra.mxu0 0.0
    %1412 = vmatprep.subr.mxu0 0.0
    %1413 = vmatpush1.xpose.msra.mxu0 0.0
    %1414 = vmatprep.subr.mxu0 0.0
    %1415 = vmatpush1.xpose.msra.mxu0 0.0
    %1416 = vmatprep.subr.mxu0 0.0
    %1417 = vmatpush1.xpose.msra.mxu0 0.0
    %1418 = vmatprep.subr.mxu0 0.0
    %1419 = vmatpush1.xpose.msra.mxu0 0.0
    %1420 = vmatprep.subr.mxu0 0.0
    %1421 = vmatpush1.xpose.msra.mxu0 0.0
    %1422 = vmatprep.subr.mxu0 0.0
    %1423 = vmatpush1.xpose.msra.mxu0 0.0
    %1424 = vmatprep.subr.mxu0 0.0
    %1425 = vmatpush1.xpose.msra.mxu0 0.0
    %1426 = vmatprep.subr.mxu0 0.0
    %1427 = vmatpush1.xpose.msra.mxu0 0.0
    %1428 = vmatprep.subr.mxu0 0.0
    %1429 = vmatpush1.xpose.msra.mxu0 0.0
    %1430 = vmatprep.subr.mxu0 0.0
    %1431 = vmatpush1.xpose.msra.mxu0 0.0
    %1432 = vmatprep.subr.mxu0 0.0
    %1433 = vmatpush1.xpose.msra.mxu0 0.0
    %1434 = vmatprep.subr.mxu0 0.0
    %1435 = vmatpush1.xpose.msra.mxu0 0.0
    %1436 = vmatprep.subr.mxu0 0.0
    %1437 = vmatpush1.xpose.msra.mxu0 0.0
    %1438 = vmatprep.subr.mxu0 0.0
    %1439 = vmatpush1.xpose.msra.mxu0 0.0
    %1440 = vmatprep.subr.mxu0 0.0
    %1441 = vmatpush1.xpose.msra.mxu0 0.0
    %1442 = vmatprep.subr.mxu0 0.0
    %1443 = vmatpush1.xpose.msra.mxu0 0.0
    %1444 = vmatprep.subr.mxu0 0.0
    %1445 = vmatpush1.xpose.msra.mxu0 0.0
    %1446 = vmatprep.subr.mxu0 0.0
    %1447 = vmatpush1.xpose.msra.mxu0 0.0
    %1448 = vmatprep.subr.mxu0 0.0
    %1449 = vmatpush1.xpose.msra.mxu0 0.0
    %1450 = vmatprep.subr.mxu0 0.0
    %1451 = vmatpush1.xpose.msra.mxu0 0.0
    %1452 = vmatprep.subr.mxu0 0.0
    %1453 = vmatpush1.xpose.msra.mxu0 0.0
    %1454 = vmatprep.mubr.f32.mxu0 0.0
    %1455 = vmatmul.mubr.f32.gmra.mrb[0].mxu0 %v1388
    %v1456 = vpop.f32.mrb[0].mxu0
    %v1457 = vadd.f32 0.0, %v1456
    %v1458 = vpop.f32.mrb[0].mxu0
    %1459 = vdwg.mxu0
    %v1460 = vld [vmem:[%s13] sm:$0xff]
    %v1461 = vld [vmem:[%s13 + $0x8] sm:$0xff]
    %v1462 = vld [vmem:[%s13 + $0x10] sm:$0xff]
    %v1463 = vld [vmem:[%s13 + $0x18] sm:$0xff]
    %v1464 = vld [vmem:[%s13 + $0x20] sm:$0xff]
    %v1465 = vld [vmem:[%s13 + $0x28] sm:$0xff]
    %v1466 = vld [vmem:[%s13 + $0x30] sm:$0xff]
    %v1467 = vld [vmem:[%s13 + $0x38] sm:$0xff]
    %vm1468 = vcmask 523264
    %v1470 = vsel %vm1468, %v1460, 0
    %v1473 = vsel %vm1468, %v1461, 0
    %v1476 = vsel %vm1468, %v1462, 0
    %v1479 = vsel %vm1468, %v1463, 0
    %v1482 = vsel %vm1468, %v1464, 0
    %v1485 = vsel %vm1468, %v1465, 0
    %v1488 = vsel %vm1468, %v1466, 0
    %v1491 = vsel %vm1468, %v1467, 0
    %1493 = vmatprep.subr.mxu0 0.0
    %1494 = vmatpush1.msra.mxu0 %v941
    %1495 = vmatprep.subr.mxu0 0.0
    %1496 = vmatpush1.msra.mxu0 %v1013
    %1497 = vmatprep.subr.mxu0 0.0
    %1498 = vmatpush1.msra.mxu0 %v1089
    %1499 = vmatprep.subr.mxu0 0.0
    %1500 = vmatpush1.msra.mxu0 %v1161
    %1501 = vmatprep.subr.mxu0 0.0
    %1502 = vmatpush1.msra.mxu0 %v1237
    %1503 = vmatprep.subr.mxu0 0.0
    %1504 = vmatpush1.msra.mxu0 %v1309
    %1505 = vmatprep.subr.mxu0 0.0
    %1506 = vmatpush1.msra.mxu0 %v1385
    %1507 = vmatprep.subr.mxu0 0.0
    %1508 = vmatpush1.msra.mxu0 %v1457
    %1509 = vmatprep.subr.mxu0 0.0
    %1510 = vmatpush1.msra.mxu0 0.0
    %1511 = vmatprep.subr.mxu0 0.0
    %1512 = vmatpush1.msra.mxu0 0.0
    %1513 = vmatprep.subr.mxu0 0.0
    %1514 = vmatpush1.msra.mxu0 0.0
    %1515 = vmatprep.subr.mxu0 0.0
    %1516 = vmatpush1.msra.mxu0 0.0
    %1517 = vmatprep.subr.mxu0 0.0
    %1518 = vmatpush1.msra.mxu0 0.0
    %1519 = vmatprep.subr.mxu0 0.0
    %1520 = vmatpush1.msra.mxu0 0.0
    %1521 = vmatprep.subr.mxu0 0.0
    %1522 = vmatpush1.msra.mxu0 0.0
    %1523 = vmatprep.subr.mxu0 0.0
    %1524 = vmatpush1.msra.mxu0 0.0
    %1525 = vmatprep.subr.mxu0 0.0
    %1526 = vmatpush1.msra.mxu0 0.0
    %1527 = vmatprep.subr.mxu0 0.0
    %1528 = vmatpush1.msra.mxu0 0.0
    %1529 = vmatprep.subr.mxu0 0.0
    %1530 = vmatpush1.msra.mxu0 0.0
    %1531 = vmatprep.subr.mxu0 0.0
    %1532 = vmatpush1.msra.mxu0 0.0
    %1533 = vmatprep.subr.mxu0 0.0
    %1534 = vmatpush1.msra.mxu0 0.0
    %1535 = vmatprep.subr.mxu0 0.0
    %1536 = vmatpush1.msra.mxu0 0.0
    %1537 = vmatprep.subr.mxu0 0.0
    %1538 = vmatpush1.msra.mxu0 0.0
    %1539 = vmatprep.subr.mxu0 0.0
    %1540 = vmatpush1.msra.mxu0 0.0
    %1541 = vmatprep.subr.mxu0 0.0
    %1542 = vmatpush1.msra.mxu0 0.0
    %1543 = vmatprep.subr.mxu0 0.0
    %1544 = vmatpush1.msra.mxu0 0.0
    %1545 = vmatprep.subr.mxu0 0.0
    %1546 = vmatpush1.msra.mxu0 0.0
    %1547 = vmatprep.subr.mxu0 0.0
    %1548 = vmatpush1.msra.mxu0 0.0
    %1549 = vmatprep.subr.mxu0 0.0
    %1550 = vmatpush1.msra.mxu0 0.0
    %1551 = vmatprep.subr.mxu0 0.0
    %1552 = vmatpush1.msra.mxu0 0.0
    %1553 = vmatprep.subr.mxu0 0.0
    %1554 = vmatpush1.msra.mxu0 0.0
    %1555 = vmatprep.subr.mxu0 0.0
    %1556 = vmatpush1.msra.mxu0 0.0
    %1557 = vmatprep.mubr.f32.mxu0 0.0
    %1558 = vmatmul.mubr.f32.gmra.mrb[0].mxu0 %v1470
    %v1559 = vpop.f32.mrb[0].mxu0
    %v1560 = vadd.f32 0.0, %v1559
    %v1561 = vpop.f32.mrb[0].mxu0
    %1562 = vmatprep.mubr.f32.mxu0 0.0
    %1563 = vmatmul.mubr.f32.gmra.mrb[0].mxu0 %v1473
    %v1564 = vpop.f32.mrb[0].mxu0
    %v1565 = vadd.f32 0.0, %v1564
    %v1566 = vpop.f32.mrb[0].mxu0
    %1567 = vmatprep.mubr.f32.mxu0 0.0
    %1568 = vmatmul.mubr.f32.gmra.mrb[0].mxu0 %v1476
    %v1569 = vpop.f32.mrb[0].mxu0
    %v1570 = vadd.f32 0.0, %v1569
    %v1571 = vpop.f32.mrb[0].mxu0
    %1572 = vmatprep.mubr.f32.mxu0 0.0
    %1573 = vmatmul.mubr.f32.gmra.mrb[0].mxu0 %v1479
    %v1574 = vpop.f32.mrb[0].mxu0
    %v1575 = vadd.f32 0.0, %v1574
    %v1576 = vpop.f32.mrb[0].mxu0
    %1577 = vmatprep.mubr.f32.mxu0 0.0
    %1578 = vmatmul.mubr.f32.gmra.mrb[0].mxu0 %v1482
    %v1579 = vpop.f32.mrb[0].mxu0
    %v1580 = vadd.f32 0.0, %v1579
    %v1581 = vpop.f32.mrb[0].mxu0
    %1582 = vmatprep.mubr.f32.mxu0 0.0
    %1583 = vmatmul.mubr.f32.gmra.mrb[0].mxu0 %v1485
    %v1584 = vpop.f32.mrb[0].mxu0
    %v1585 = vadd.f32 0.0, %v1584
    %v1586 = vpop.f32.mrb[0].mxu0
    %1587 = vmatprep.mubr.f32.mxu0 0.0
    %1588 = vmatmul.mubr.f32.gmra.mrb[0].mxu0 %v1488
    %v1589 = vpop.f32.mrb[0].mxu0
    %v1590 = vadd.f32 0.0, %v1589
    %v1591 = vpop.f32.mrb[0].mxu0
    %1592 = vmatprep.mubr.f32.mxu0 0.0
    %1593 = vmatmul.mubr.f32.gmra.mrb[0].mxu0 %v1491
    %v1594 = vpop.f32.mrb[0].mxu0
    %v1595 = vadd.f32 0.0, %v1594
    %v1596 = vpop.f32.mrb[0].mxu0
    %1597 = vdwg.mxu0
    %v1598 = vld [vmem:[%s9] sm:$0xff]
    %v1599 = vld [vmem:[%s10] sm:$0xff]
    %v1601 = vsel %vm261, %v1560, 0
    %v1604 = vsel %vm261, %v1565, 0
    %v1607 = vsel %vm261, %v1570, 0
    %v1610 = vsel %vm261, %v1575, 0
    %v1613 = vsel %vm261, %v1580, 0
    %v1616 = vsel %vm261, %v1585, 0
    %v1619 = vsel %vm261, %v1590, 0
    %v1622 = vsel %vm261, %v1595, 0
    %1624 = vmatprep.subr.mxu0 0.0
    %1625 = vmatpush1.msra.mxu0 %v1599
    %1626 = vmatprep.subr.mxu0 0.0
    %1627 = vmatpush1.msra.mxu0 0.0
    %1628 = vmatprep.subr.mxu0 0.0
    %1629 = vmatpush1.msra.mxu0 0.0
    %1630 = vmatprep.subr.mxu0 0.0
    %1631 = vmatpush1.msra.mxu0 0.0
    %1632 = vmatprep.subr.mxu0 0.0
    %1633 = vmatpush1.msra.mxu0 0.0
    %1634 = vmatprep.subr.mxu0 0.0
    %1635 = vmatpush1.msra.mxu0 0.0
    %1636 = vmatprep.subr.mxu0 0.0
    %1637 = vmatpush1.msra.mxu0 0.0
    %1638 = vmatprep.subr.mxu0 0.0
    %1639 = vmatpush1.msra.mxu0 0.0
    %1640 = vmatprep.subr.mxu0 0.0
    %1641 = vmatpush1.msra.mxu0 0.0
    %1642 = vmatprep.subr.mxu0 0.0
    %1643 = vmatpush1.msra.mxu0 0.0
    %1644 = vmatprep.subr.mxu0 0.0
    %1645 = vmatpush1.msra.mxu0 0.0
    %1646 = vmatprep.subr.mxu0 0.0
    %1647 = vmatpush1.msra.mxu0 0.0
    %1648 = vmatprep.subr.mxu0 0.0
    %1649 = vmatpush1.msra.mxu0 0.0
    %1650 = vmatprep.subr.mxu0 0.0
    %1651 = vmatpush1.msra.mxu0 0.0
    %1652 = vmatprep.subr.mxu0 0.0
    %1653 = vmatpush1.msra.mxu0 0.0
    %1654 = vmatprep.subr.mxu0 0.0
    %1655 = vmatpush1.msra.mxu0 0.0
    %1656 = vmatprep.subr.mxu0 0.0
    %1657 = vmatpush1.msra.mxu0 0.0
    %1658 = vmatprep.subr.mxu0 0.0
    %1659 = vmatpush1.msra.mxu0 0.0
    %1660 = vmatprep.subr.mxu0 0.0
    %1661 = vmatpush1.msra.mxu0 0.0
    %1662 = vmatprep.subr.mxu0 0.0
    %1663 = vmatpush1.msra.mxu0 0.0
    %1664 = vmatprep.subr.mxu0 0.0
    %1665 = vmatpush1.msra.mxu0 0.0
    %1666 = vmatprep.subr.mxu0 0.0
    %1667 = vmatpush1.msra.mxu0 0.0
    %1668 = vmatprep.subr.mxu0 0.0
    %1669 = vmatpush1.msra.mxu0 0.0
    %1670 = vmatprep.subr.mxu0 0.0
    %1671 = vmatpush1.msra.mxu0 0.0
    %1672 = vmatprep.subr.mxu0 0.0
    %1673 = vmatpush1.msra.mxu0 0.0
    %1674 = vmatprep.subr.mxu0 0.0
    %1675 = vmatpush1.msra.mxu0 0.0
    %1676 = vmatprep.subr.mxu0 0.0
    %1677 = vmatpush1.msra.mxu0 0.0
    %1678 = vmatprep.subr.mxu0 0.0
    %1679 = vmatpush1.msra.mxu0 0.0
    %1680 = vmatprep.subr.mxu0 0.0
    %1681 = vmatpush1.msra.mxu0 0.0
    %1682 = vmatprep.subr.mxu0 0.0
    %1683 = vmatpush1.msra.mxu0 0.0
    %1684 = vmatprep.subr.mxu0 0.0
    %1685 = vmatpush1.msra.mxu0 0.0
    %1686 = vmatprep.subr.mxu0 0.0
    %1687 = vmatpush1.msra.mxu0 0.0
    %1688 = vmatprep.mubr.f32.mxu0 0.0
    %1689 = vmatmul.mubr.f32.gmra.mrb[0].mxu0 %v1601
    %v1690 = vpop.f32.mrb[0].mxu0
    %v1691 = vadd.f32 0.0, %v1690
    %v1692 = vpop.f32.mrb[0].mxu0
    %1693 = vmatprep.mubr.f32.mxu0 0.0
    %1694 = vmatmul.mubr.f32.gmra.mrb[0].mxu0 %v1604
    %v1695 = vpop.f32.mrb[0].mxu0
    %v1696 = vadd.f32 0.0, %v1695
    %v1697 = vpop.f32.mrb[0].mxu0
    %1698 = vmatprep.mubr.f32.mxu0 0.0
    %1699 = vmatmul.mubr.f32.gmra.mrb[0].mxu0 %v1607
    %v1700 = vpop.f32.mrb[0].mxu0
    %v1701 = vadd.f32 0.0, %v1700
    %v1702 = vpop.f32.mrb[0].mxu0
    %1703 = vmatprep.mubr.f32.mxu0 0.0
    %1704 = vmatmul.mubr.f32.gmra.mrb[0].mxu0 %v1610
    %v1705 = vpop.f32.mrb[0].mxu0
    %v1706 = vadd.f32 0.0, %v1705
    %v1707 = vpop.f32.mrb[0].mxu0
    %1708 = vmatprep.mubr.f32.mxu0 0.0
    %1709 = vmatmul.mubr.f32.gmra.mrb[0].mxu0 %v1613
    %v1710 = vpop.f32.mrb[0].mxu0
    %v1711 = vadd.f32 0.0, %v1710
    %v1712 = vpop.f32.mrb[0].mxu0
    %1713 = vmatprep.mubr.f32.mxu0 0.0
    %1714 = vmatmul.mubr.f32.gmra.mrb[0].mxu0 %v1616
    %v1715 = vpop.f32.mrb[0].mxu0
    %v1716 = vadd.f32 0.0, %v1715
    %v1717 = vpop.f32.mrb[0].mxu0
    %1718 = vmatprep.mubr.f32.mxu0 0.0
    %1719 = vmatmul.mubr.f32.gmra.mrb[0].mxu0 %v1619
    %v1720 = vpop.f32.mrb[0].mxu0
    %v1721 = vadd.f32 0.0, %v1720
    %v1722 = vpop.f32.mrb[0].mxu0
    %1723 = vmatprep.mubr.f32.mxu0 0.0
    %1724 = vmatmul.mubr.f32.gmra.mrb[0].mxu0 %v1622
    %v1725 = vpop.f32.mrb[0].mxu0
    %v1726 = vadd.f32 0.0, %v1725
    %v1727 = vpop.f32.mrb[0].mxu0
    %1728 = vdwg.mxu0
    %v1730 = vsel %vm261, %v941, 0
    %v1733 = vsel %vm261, %v1013, 0
    %v1736 = vsel %vm261, %v1089, 0
    %v1739 = vsel %vm261, %v1161, 0
    %v1742 = vsel %vm261, %v1237, 0
    %v1745 = vsel %vm261, %v1309, 0
    %v1748 = vsel %vm261, %v1385, 0
    %v1751 = vsel %vm261, %v1457, 0
    %1753 = vmatprep.subr.mxu0 0.0
    %1754 = vmatpush1.msra.mxu0 %v1598
    %1755 = vmatprep.subr.mxu0 0.0
    %1756 = vmatpush1.msra.mxu0 0.0
    %1757 = vmatprep.subr.mxu0 0.0
    %1758 = vmatpush1.msra.mxu0 0.0
    %1759 = vmatprep.subr.mxu0 0.0
    %1760 = vmatpush1.msra.mxu0 0.0
    %1761 = vmatprep.subr.mxu0 0.0
    %1762 = vmatpush1.msra.mxu0 0.0
    %1763 = vmatprep.subr.mxu0 0.0
    %1764 = vmatpush1.msra.mxu0 0.0
    %1765 = vmatprep.subr.mxu0 0.0
    %1766 = vmatpush1.msra.mxu0 0.0
    %1767 = vmatprep.subr.mxu0 0.0
    %1768 = vmatpush1.msra.mxu0 0.0
    %1769 = vmatprep.subr.mxu0 0.0
    %1770 = vmatpush1.msra.mxu0 0.0
    %1771 = vmatprep.subr.mxu0 0.0
    %1772 = vmatpush1.msra.mxu0 0.0
    %1773 = vmatprep.subr.mxu0 0.0
    %1774 = vmatpush1.msra.mxu0 0.0
    %1775 = vmatprep.subr.mxu0 0.0
    %1776 = vmatpush1.msra.mxu0 0.0
    %1777 = vmatprep.subr.mxu0 0.0
    %1778 = vmatpush1.msra.mxu0 0.0
    %1779 = vmatprep.subr.mxu0 0.0
    %1780 = vmatpush1.msra.mxu0 0.0
    %1781 = vmatprep.subr.mxu0 0.0
    %1782 = vmatpush1.msra.mxu0 0.0
    %1783 = vmatprep.subr.mxu0 0.0
    %1784 = vmatpush1.msra.mxu0 0.0
    %1785 = vmatprep.subr.mxu0 0.0
    %1786 = vmatpush1.msra.mxu0 0.0
    %1787 = vmatprep.subr.mxu0 0.0
    %1788 = vmatpush1.msra.mxu0 0.0
    %1789 = vmatprep.subr.mxu0 0.0
    %1790 = vmatpush1.msra.mxu0 0.0
    %1791 = vmatprep.subr.mxu0 0.0
    %1792 = vmatpush1.msra.mxu0 0.0
    %1793 = vmatprep.subr.mxu0 0.0
    %1794 = vmatpush1.msra.mxu0 0.0
    %1795 = vmatprep.subr.mxu0 0.0
    %1796 = vmatpush1.msra.mxu0 0.0
    %1797 = vmatprep.subr.mxu0 0.0
    %1798 = vmatpush1.msra.mxu0 0.0
    %1799 = vmatprep.subr.mxu0 0.0
    %1800 = vmatpush1.msra.mxu0 0.0
    %1801 = vmatprep.subr.mxu0 0.0
    %1802 = vmatpush1.msra.mxu0 0.0
    %1803 = vmatprep.subr.mxu0 0.0
    %1804 = vmatpush1.msra.mxu0 0.0
    %1805 = vmatprep.subr.mxu0 0.0
    %1806 = vmatpush1.msra.mxu0 0.0
    %1807 = vmatprep.subr.mxu0 0.0
    %1808 = vmatpush1.msra.mxu0 0.0
    %1809 = vmatprep.subr.mxu0 0.0
    %1810 = vmatpush1.msra.mxu0 0.0
    %1811 = vmatprep.subr.mxu0 0.0
    %1812 = vmatpush1.msra.mxu0 0.0
    %1813 = vmatprep.subr.mxu0 0.0
    %1814 = vmatpush1.msra.mxu0 0.0
    %1815 = vmatprep.subr.mxu0 0.0
    %1816 = vmatpush1.msra.mxu0 0.0
    %1817 = vmatprep.mubr.f32.mxu0 0.0
    %1818 = vmatmul.mubr.f32.gmra.mrb[0].mxu0 %v1730
    %v1819 = vpop.f32.mrb[0].mxu0
    %v1820 = vadd.f32 %v1691, %v1819
    %v1821 = vpop.f32.mrb[0].mxu0
    %1822 = vmatprep.mubr.f32.mxu0 0.0
    %1823 = vmatmul.mubr.f32.gmra.mrb[0].mxu0 %v1733
    %v1824 = vpop.f32.mrb[0].mxu0
    %v1825 = vadd.f32 %v1696, %v1824
    %v1826 = vpop.f32.mrb[0].mxu0
    %1827 = vmatprep.mubr.f32.mxu0 0.0
    %1828 = vmatmul.mubr.f32.gmra.mrb[0].mxu0 %v1736
    %v1829 = vpop.f32.mrb[0].mxu0
    %v1830 = vadd.f32 %v1701, %v1829
    %v1831 = vpop.f32.mrb[0].mxu0
    %1832 = vmatprep.mubr.f32.mxu0 0.0
    %1833 = vmatmul.mubr.f32.gmra.mrb[0].mxu0 %v1739
    %v1834 = vpop.f32.mrb[0].mxu0
    %v1835 = vadd.f32 %v1706, %v1834
    %v1836 = vpop.f32.mrb[0].mxu0
    %1837 = vmatprep.mubr.f32.mxu0 0.0
    %1838 = vmatmul.mubr.f32.gmra.mrb[0].mxu0 %v1742
    %v1839 = vpop.f32.mrb[0].mxu0
    %v1840 = vadd.f32 %v1711, %v1839
    %v1841 = vpop.f32.mrb[0].mxu0
    %1842 = vmatprep.mubr.f32.mxu0 0.0
    %1843 = vmatmul.mubr.f32.gmra.mrb[0].mxu0 %v1745
    %v1844 = vpop.f32.mrb[0].mxu0
    %v1845 = vadd.f32 %v1716, %v1844
    %v1846 = vpop.f32.mrb[0].mxu0
    %1847 = vmatprep.mubr.f32.mxu0 0.0
    %1848 = vmatmul.mubr.f32.gmra.mrb[0].mxu0 %v1748
    %v1849 = vpop.f32.mrb[0].mxu0
    %v1850 = vadd.f32 %v1721, %v1849
    %v1851 = vpop.f32.mrb[0].mxu0
    %1852 = vmatprep.mubr.f32.mxu0 0.0
    %1853 = vmatmul.mubr.f32.gmra.mrb[0].mxu0 %v1751
    %v1854 = vpop.f32.mrb[0].mxu0
    %v1855 = vadd.f32 %v1726, %v1854
    %v1856 = vpop.f32.mrb[0].mxu0
    %1857 = vdwg.mxu0
    %v1858 = vld [vmem:[%s11] sm:$0xff]
    %v1859 = vld [vmem:[%s11 + $0x8] sm:$0xff]
    %v1860 = vld [vmem:[%s11 + $0x10] sm:$0xff]
    %v1861 = vld [vmem:[%s11 + $0x18] sm:$0xff]
    %v1862 = vld [vmem:[%s11 + $0x20] sm:$0xff]
    %v1863 = vld [vmem:[%s11 + $0x28] sm:$0xff]
    %v1864 = vld [vmem:[%s11 + $0x30] sm:$0xff]
    %v1865 = vld [vmem:[%s11 + $0x38] sm:$0xff]
    %v1866 = vmul.f32 %v1820, %v1858
    %v1867 = vmul.f32 %v1825, %v1859
    %v1868 = vmul.f32 %v1830, %v1860
    %v1869 = vmul.f32 %v1835, %v1861
    %v1870 = vmul.f32 %v1840, %v1862
    %v1871 = vmul.f32 %v1845, %v1863
    %v1872 = vmul.f32 %v1850, %v1864
    %v1873 = vmul.f32 %v1855, %v1865
    %v1874 = vld [vmem:[%s12] sm:$0xff]
    %v1875 = vld [vmem:[%s12 + $0x8] sm:$0xff]
    %v1876 = vld [vmem:[%s12 + $0x10] sm:$0xff]
    %v1877 = vld [vmem:[%s12 + $0x18] sm:$0xff]
    %v1878 = vld [vmem:[%s12 + $0x20] sm:$0xff]
    %v1879 = vld [vmem:[%s12 + $0x28] sm:$0xff]
    %v1880 = vld [vmem:[%s12 + $0x30] sm:$0xff]
    %v1881 = vld [vmem:[%s12 + $0x38] sm:$0xff]
    %v1883 = vsel %vm1468, %v1866, 0
    %v1886 = vsel %vm1468, %v1867, 0
    %v1889 = vsel %vm1468, %v1868, 0
    %v1892 = vsel %vm1468, %v1869, 0
    %v1895 = vsel %vm1468, %v1870, 0
    %v1898 = vsel %vm1468, %v1871, 0
    %v1901 = vsel %vm1468, %v1872, 0
    %v1904 = vsel %vm1468, %v1873, 0
    %1906 = vmatprep.subr.mxu0 0.0
    %1907 = vmatpush1.msra.mxu0 %v1874
    %1908 = vmatprep.subr.mxu0 0.0
    %1909 = vmatpush1.msra.mxu0 %v1875
    %1910 = vmatprep.subr.mxu0 0.0
    %1911 = vmatpush1.msra.mxu0 %v1876
    %1912 = vmatprep.subr.mxu0 0.0
    %1913 = vmatpush1.msra.mxu0 %v1877
    %1914 = vmatprep.subr.mxu0 0.0
    %1915 = vmatpush1.msra.mxu0 %v1878
    %1916 = vmatprep.subr.mxu0 0.0
    %1917 = vmatpush1.msra.mxu0 %v1879
    %1918 = vmatprep.subr.mxu0 0.0
    %1919 = vmatpush1.msra.mxu0 %v1880
    %1920 = vmatprep.subr.mxu0 0.0
    %1921 = vmatpush1.msra.mxu0 %v1881
    %1922 = vmatprep.subr.mxu0 0.0
    %1923 = vmatpush1.msra.mxu0 0.0
    %1924 = vmatprep.subr.mxu0 0.0
    %1925 = vmatpush1.msra.mxu0 0.0
    %1926 = vmatprep.subr.mxu0 0.0
    %1927 = vmatpush1.msra.mxu0 0.0
    %1928 = vmatprep.subr.mxu0 0.0
    %1929 = vmatpush1.msra.mxu0 0.0
    %1930 = vmatprep.subr.mxu0 0.0
    %1931 = vmatpush1.msra.mxu0 0.0
    %1932 = vmatprep.subr.mxu0 0.0
    %1933 = vmatpush1.msra.mxu0 0.0
    %1934 = vmatprep.subr.mxu0 0.0
    %1935 = vmatpush1.msra.mxu0 0.0
    %1936 = vmatprep.subr.mxu0 0.0
    %1937 = vmatpush1.msra.mxu0 0.0
    %1938 = vmatprep.subr.mxu0 0.0
    %1939 = vmatpush1.msra.mxu0 0.0
    %1940 = vmatprep.subr.mxu0 0.0
    %1941 = vmatpush1.msra.mxu0 0.0
    %1942 = vmatprep.subr.mxu0 0.0
    %1943 = vmatpush1.msra.mxu0 0.0
    %1944 = vmatprep.subr.mxu0 0.0
    %1945 = vmatpush1.msra.mxu0 0.0
    %1946 = vmatprep.subr.mxu0 0.0
    %1947 = vmatpush1.msra.mxu0 0.0
    %1948 = vmatprep.subr.mxu0 0.0
    %1949 = vmatpush1.msra.mxu0 0.0
    %1950 = vmatprep.subr.mxu0 0.0
    %1951 = vmatpush1.msra.mxu0 0.0
    %1952 = vmatprep.subr.mxu0 0.0
    %1953 = vmatpush1.msra.mxu0 0.0
    %1954 = vmatprep.subr.mxu0 0.0
    %1955 = vmatpush1.msra.mxu0 0.0
    %1956 = vmatprep.subr.mxu0 0.0
    %1957 = vmatpush1.msra.mxu0 0.0
    %1958 = vmatprep.subr.mxu0 0.0
    %1959 = vmatpush1.msra.mxu0 0.0
    %1960 = vmatprep.subr.mxu0 0.0
    %1961 = vmatpush1.msra.mxu0 0.0
    %1962 = vmatprep.subr.mxu0 0.0
    %1963 = vmatpush1.msra.mxu0 0.0
    %1964 = vmatprep.subr.mxu0 0.0
    %1965 = vmatpush1.msra.mxu0 0.0
    %1966 = vmatprep.subr.mxu0 0.0
    %1967 = vmatpush1.msra.mxu0 0.0
    %1968 = vmatprep.subr.mxu0 0.0
    %1969 = vmatpush1.msra.mxu0 0.0
    %1970 = vmatprep.mubr.f32.mxu0 0.0
    %1971 = vmatmul.mubr.f32.gmra.mrb[0].mxu0 %v1883
    %v1972 = vpop.f32.mrb[0].mxu0
    %v1973 = vadd.f32 0.0, %v1972
    %v1974 = vpop.f32.mrb[0].mxu0
    %1975 = vmatprep.mubr.f32.mxu0 0.0
    %1976 = vmatmul.mubr.f32.gmra.mrb[0].mxu0 %v1886
    %v1977 = vpop.f32.mrb[0].mxu0
    %v1978 = vadd.f32 0.0, %v1977
    %v1979 = vpop.f32.mrb[0].mxu0
    %1980 = vmatprep.mubr.f32.mxu0 0.0
    %1981 = vmatmul.mubr.f32.gmra.mrb[0].mxu0 %v1889
    %v1982 = vpop.f32.mrb[0].mxu0
    %v1983 = vadd.f32 0.0, %v1982
    %v1984 = vpop.f32.mrb[0].mxu0
    %1985 = vmatprep.mubr.f32.mxu0 0.0
    %1986 = vmatmul.mubr.f32.gmra.mrb[0].mxu0 %v1892
    %v1987 = vpop.f32.mrb[0].mxu0
    %v1988 = vadd.f32 0.0, %v1987
    %v1989 = vpop.f32.mrb[0].mxu0
    %1990 = vmatprep.mubr.f32.mxu0 0.0
    %1991 = vmatmul.mubr.f32.gmra.mrb[0].mxu0 %v1895
    %v1992 = vpop.f32.mrb[0].mxu0
    %v1993 = vadd.f32 0.0, %v1992
    %v1994 = vpop.f32.mrb[0].mxu0
    %1995 = vmatprep.mubr.f32.mxu0 0.0
    %1996 = vmatmul.mubr.f32.gmra.mrb[0].mxu0 %v1898
    %v1997 = vpop.f32.mrb[0].mxu0
    %v1998 = vadd.f32 0.0, %v1997
    %v1999 = vpop.f32.mrb[0].mxu0
    %2000 = vmatprep.mubr.f32.mxu0 0.0
    %2001 = vmatmul.mubr.f32.gmra.mrb[0].mxu0 %v1901
    %v2002 = vpop.f32.mrb[0].mxu0
    %v2003 = vadd.f32 0.0, %v2002
    %v2004 = vpop.f32.mrb[0].mxu0
    %2005 = vmatprep.mubr.f32.mxu0 0.0
    %2006 = vmatmul.mubr.f32.gmra.mrb[0].mxu0 %v1904
    %v2007 = vpop.f32.mrb[0].mxu0
    %v2008 = vadd.f32 0.0, %v2007
    %v2009 = vpop.f32.mrb[0].mxu0
    %2010 = vdwg.mxu0
    %v2011 = vadd.f32 %v333, %v1973
    %v2012 = vadd.f32 %v409, %v1978
    %v2013 = vadd.f32 %v485, %v1983
    %v2014 = vadd.f32 %v561, %v1988
    %v2015 = vadd.f32 %v637, %v1993
    %v2016 = vadd.f32 %v713, %v1998
    %v2017 = vadd.f32 %v789, %v2003
    %v2018 = vadd.f32 %v865, %v2008
    %v2019 = vld [vmem:[%s2] sm:$0xff]
    %v2020 = vld [vmem:[%s2 + $0x8] sm:$0xff]
    %v2021 = vld [vmem:[%s2 + $0x10] sm:$0xff]
    %v2022 = vld [vmem:[%s2 + $0x18] sm:$0xff]
    %v2023 = vld [vmem:[%s2 + $0x20] sm:$0xff]
    %v2024 = vld [vmem:[%s2 + $0x28] sm:$0xff]
    %v2025 = vld [vmem:[%s2 + $0x30] sm:$0xff]
    %v2026 = vld [vmem:[%s2 + $0x38] sm:$0xff]
    %2028 = vset.pattern.permute.xlu0 0
    %2029 = vperm.xlu0 %2028, %v2019
    %v2030 = vpop.permute.xlu0 %2029
    %2033 = vset.pattern.permute.xlu0 0
    %2034 = vperm.xlu0 %2033, %v2020
    %v2035 = vpop.permute.xlu0 %2034
    %2038 = vset.pattern.permute.xlu0 0
    %2039 = vperm.xlu0 %2038, %v2021
    %v2040 = vpop.permute.xlu0 %2039
    %2043 = vset.pattern.permute.xlu0 0
    %2044 = vperm.xlu0 %2043, %v2022
    %v2045 = vpop.permute.xlu0 %2044
    %2048 = vset.pattern.permute.xlu0 0
    %2049 = vperm.xlu0 %2048, %v2023
    %v2050 = vpop.permute.xlu0 %2049
    %2053 = vset.pattern.permute.xlu0 0
    %2054 = vperm.xlu0 %2053, %v2024
    %v2055 = vpop.permute.xlu0 %2054
    %2058 = vset.pattern.permute.xlu0 0
    %2059 = vperm.xlu0 %2058, %v2025
    %v2060 = vpop.permute.xlu0 %2059
    %2063 = vset.pattern.permute.xlu0 0
    %2064 = vperm.xlu0 %2063, %v2026
    %v2065 = vpop.permute.xlu0 %2064
    %v2067 = vadd.f32 %v2011, %v2030
    %v2068 = vadd.f32 %v2012, %v2035
    %v2069 = vadd.f32 %v2013, %v2040
    %v2070 = vadd.f32 %v2014, %v2045
    %v2071 = vadd.f32 %v2015, %v2050
    %v2072 = vadd.f32 %v2016, %v2055
    %v2073 = vadd.f32 %v2017, %v2060
    %v2074 = vadd.f32 %v2018, %v2065
    %v2075 = vsel %vm261, %v2067, -inf
    %2076 = vmax.xlane.f32.xlu0 %v2075
    %v2077 = vpop.xlane.xlu0 %2076
    %v2078 = vsel %vm261, %v2068, -inf
    %2079 = vmax.xlane.f32.xlu0 %v2078
    %v2080 = vpop.xlane.xlu0 %2079
    %v2081 = vsel %vm261, %v2069, -inf
    %2082 = vmax.xlane.f32.xlu0 %v2081
    %v2083 = vpop.xlane.xlu0 %2082
    %v2084 = vsel %vm261, %v2070, -inf
    %2085 = vmax.xlane.f32.xlu0 %v2084
    %v2086 = vpop.xlane.xlu0 %2085
    %v2087 = vsel %vm261, %v2071, -inf
    %2088 = vmax.xlane.f32.xlu0 %v2087
    %v2089 = vpop.xlane.xlu0 %2088
    %v2090 = vsel %vm261, %v2072, -inf
    %2091 = vmax.xlane.f32.xlu0 %v2090
    %v2092 = vpop.xlane.xlu0 %2091
    %v2093 = vsel %vm261, %v2073, -inf
    %2094 = vmax.xlane.f32.xlu0 %v2093
    %v2095 = vpop.xlane.xlu0 %2094
    %v2096 = vsel %vm261, %v2074, -inf
    %2097 = vmax.xlane.f32.xlu0 %v2096
    %v2098 = vpop.xlane.xlu0 %2097
    %v2099 = vsub.f32 %v2067, %v2077
    %v2100 = vsub.f32 %v2068, %v2080
    %v2101 = vsub.f32 %v2069, %v2083
    %v2102 = vsub.f32 %v2070, %v2086
    %v2103 = vsub.f32 %v2071, %v2089
    %v2104 = vsub.f32 %v2072, %v2092
    %v2105 = vsub.f32 %v2073, %v2095
    %v2106 = vsub.f32 %v2074, %v2098
    %v2107 = vmul.f32 %v2099, 1.442695
    %v2108 = vpow.pop %v2107
    %v2109 = vmul.f32 %v2100, 1.442695
    %v2110 = vpow.pop %v2109
    %v2111 = vmul.f32 %v2101, 1.442695
    %v2112 = vpow.pop %v2111
    %v2113 = vmul.f32 %v2102, 1.442695
    %v2114 = vpow.pop %v2113
    %v2115 = vmul.f32 %v2103, 1.442695
    %v2116 = vpow.pop %v2115
    %v2117 = vmul.f32 %v2104, 1.442695
    %v2118 = vpow.pop %v2117
    %v2119 = vmul.f32 %v2105, 1.442695
    %v2120 = vpow.pop %v2119
    %v2121 = vmul.f32 %v2106, 1.442695
    %v2122 = vpow.pop %v2121
    %v2123 = vsel %vm261, %v2108, 0.0
    %2124 = vadd.xlane.f32.xlu0 %v2123
    %v2125 = vpop.xlane.xlu0 %2124
    %v2126 = vsel %vm261, %v2110, 0.0
    %2127 = vadd.xlane.f32.xlu0 %v2126
    %v2128 = vpop.xlane.xlu0 %2127
    %v2129 = vsel %vm261, %v2112, 0.0
    %2130 = vadd.xlane.f32.xlu0 %v2129
    %v2131 = vpop.xlane.xlu0 %2130
    %v2132 = vsel %vm261, %v2114, 0.0
    %2133 = vadd.xlane.f32.xlu0 %v2132
    %v2134 = vpop.xlane.xlu0 %2133
    %v2135 = vsel %vm261, %v2116, 0.0
    %2136 = vadd.xlane.f32.xlu0 %v2135
    %v2137 = vpop.xlane.xlu0 %2136
    %v2138 = vsel %vm261, %v2118, 0.0
    %2139 = vadd.xlane.f32.xlu0 %v2138
    %v2140 = vpop.xlane.xlu0 %2139
    %v2141 = vsel %vm261, %v2120, 0.0
    %2142 = vadd.xlane.f32.xlu0 %v2141
    %v2143 = vpop.xlane.xlu0 %2142
    %v2144 = vsel %vm261, %v2122, 0.0
    %2145 = vadd.xlane.f32.xlu0 %v2144
    %v2146 = vpop.xlane.xlu0 %2145
    %v2147 = vrcp.pop %v2125
    %v2148 = vrcp.pop %v2128
    %v2149 = vrcp.pop %v2131
    %v2150 = vrcp.pop %v2134
    %v2151 = vrcp.pop %v2137
    %v2152 = vrcp.pop %v2140
    %v2153 = vrcp.pop %v2143
    %v2154 = vrcp.pop %v2146
    %v2155 = vmul.f32 %v2108, %v2147
    %v2156 = vmul.f32 %v2110, %v2148
    %v2157 = vmul.f32 %v2112, %v2149
    %v2158 = vmul.f32 %v2114, %v2150
    %v2159 = vmul.f32 %v2116, %v2151
    %v2160 = vmul.f32 %v2118, %v2152
    %v2161 = vmul.f32 %v2120, %v2153
    %v2162 = vmul.f32 %v2122, %v2154
    %2163 = vrot.lane.b32.xlu0 %v177, 64
    %v2164 = vpop.permute.xlu0 %2163
    %v2167 = vsel %vm261, %v2155, 0
    %2169 = vmatprep.subr.mxu0 0.0
    %2170 = vmatpush1.msra.mxu0 %v2164
    %2171 = vmatprep.subr.mxu0 0.0
    %2172 = vmatpush1.msra.mxu0 0.0
    %2173 = vmatprep.subr.mxu0 0.0
    %2174 = vmatpush1.msra.mxu0 0.0
    %2175 = vmatprep.subr.mxu0 0.0
    %2176 = vmatpush1.msra.mxu0 0.0
    %2177 = vmatprep.subr.mxu0 0.0
    %2178 = vmatpush1.msra.mxu0 0.0
    %2179 = vmatprep.subr.mxu0 0.0
    %2180 = vmatpush1.msra.mxu0 0.0
    %2181 = vmatprep.subr.mxu0 0.0
    %2182 = vmatpush1.msra.mxu0 0.0
    %2183 = vmatprep.subr.mxu0 0.0
    %2184 = vmatpush1.msra.mxu0 0.0
    %2185 = vmatprep.subr.mxu0 0.0
    %2186 = vmatpush1.msra.mxu0 0.0
    %2187 = vmatprep.subr.mxu0 0.0
    %2188 = vmatpush1.msra.mxu0 0.0
    %2189 = vmatprep.subr.mxu0 0.0
    %2190 = vmatpush1.msra.mxu0 0.0
    %2191 = vmatprep.subr.mxu0 0.0
    %2192 = vmatpush1.msra.mxu0 0.0
    %2193 = vmatprep.subr.mxu0 0.0
    %2194 = vmatpush1.msra.mxu0 0.0
    %2195 = vmatprep.subr.mxu0 0.0
    %2196 = vmatpush1.msra.mxu0 0.0
    %2197 = vmatprep.subr.mxu0 0.0
    %2198 = vmatpush1.msra.mxu0 0.0
    %2199 = vmatprep.subr.mxu0 0.0
    %2200 = vmatpush1.msra.mxu0 0.0
    %2201 = vmatprep.subr.mxu0 0.0
    %2202 = vmatpush1.msra.mxu0 0.0
    %2203 = vmatprep.subr.mxu0 0.0
    %2204 = vmatpush1.msra.mxu0 0.0
    %2205 = vmatprep.subr.mxu0 0.0
    %2206 = vmatpush1.msra.mxu0 0.0
    %2207 = vmatprep.subr.mxu0 0.0
    %2208 = vmatpush1.msra.mxu0 0.0
    %2209 = vmatprep.subr.mxu0 0.0
    %2210 = vmatpush1.msra.mxu0 0.0
    %2211 = vmatprep.subr.mxu0 0.0
    %2212 = vmatpush1.msra.mxu0 0.0
    %2213 = vmatprep.subr.mxu0 0.0
    %2214 = vmatpush1.msra.mxu0 0.0
    %2215 = vmatprep.subr.mxu0 0.0
    %2216 = vmatpush1.msra.mxu0 0.0
    %2217 = vmatprep.subr.mxu0 0.0
    %2218 = vmatpush1.msra.mxu0 0.0
    %2219 = vmatprep.subr.mxu0 0.0
    %2220 = vmatpush1.msra.mxu0 0.0
    %2221 = vmatprep.subr.mxu0 0.0
    %2222 = vmatpush1.msra.mxu0 0.0
    %2223 = vmatprep.subr.mxu0 0.0
    %2224 = vmatpush1.msra.mxu0 0.0
    %2225 = vmatprep.subr.mxu0 0.0
    %2226 = vmatpush1.msra.mxu0 0.0
    %2227 = vmatprep.subr.mxu0 0.0
    %2228 = vmatpush1.msra.mxu0 0.0
    %2229 = vmatprep.subr.mxu0 0.0
    %2230 = vmatpush1.msra.mxu0 0.0
    %2231 = vmatprep.subr.mxu0 0.0
    %2232 = vmatpush1.msra.mxu0 0.0
    %2233 = vmatprep.mubr.f32.mxu0 0.0
    %2234 = vmatmul.mubr.f32.gmra.mrb[0].mxu0 %v2167
    %v2235 = vpop.f32.mrb[0].mxu0
    %v2236 = vadd.f32 0.0, %v2235
    %v2237 = vpop.f32.mrb[0].mxu0
    %2238 = vdwg.mxu0
    %2239 = vrot.lane.b32.xlu0 %v182, 64
    %v2240 = vpop.permute.xlu0 %2239
    %v2243 = vsel %vm261, %v2156, 0
    %2245 = vmatprep.subr.mxu0 0.0
    %2246 = vmatpush1.msra.mxu0 %v2240
    %2247 = vmatprep.subr.mxu0 0.0
    %2248 = vmatpush1.msra.mxu0 0.0
    %2249 = vmatprep.subr.mxu0 0.0
    %2250 = vmatpush1.msra.mxu0 0.0
    %2251 = vmatprep.subr.mxu0 0.0
    %2252 = vmatpush1.msra.mxu0 0.0
    %2253 = vmatprep.subr.mxu0 0.0
    %2254 = vmatpush1.msra.mxu0 0.0
    %2255 = vmatprep.subr.mxu0 0.0
    %2256 = vmatpush1.msra.mxu0 0.0
    %2257 = vmatprep.subr.mxu0 0.0
    %2258 = vmatpush1.msra.mxu0 0.0
    %2259 = vmatprep.subr.mxu0 0.0
    %2260 = vmatpush1.msra.mxu0 0.0
    %2261 = vmatprep.subr.mxu0 0.0
    %2262 = vmatpush1.msra.mxu0 0.0
    %2263 = vmatprep.subr.mxu0 0.0
    %2264 = vmatpush1.msra.mxu0 0.0
    %2265 = vmatprep.subr.mxu0 0.0
    %2266 = vmatpush1.msra.mxu0 0.0
    %2267 = vmatprep.subr.mxu0 0.0
    %2268 = vmatpush1.msra.mxu0 0.0
    %2269 = vmatprep.subr.mxu0 0.0
    %2270 = vmatpush1.msra.mxu0 0.0
    %2271 = vmatprep.subr.mxu0 0.0
    %2272 = vmatpush1.msra.mxu0 0.0
    %2273 = vmatprep.subr.mxu0 0.0
    %2274 = vmatpush1.msra.mxu0 0.0
    %2275 = vmatprep.subr.mxu0 0.0
    %2276 = vmatpush1.msra.mxu0 0.0
    %2277 = vmatprep.subr.mxu0 0.0
    %2278 = vmatpush1.msra.mxu0 0.0
    %2279 = vmatprep.subr.mxu0 0.0
    %2280 = vmatpush1.msra.mxu0 0.0
    %2281 = vmatprep.subr.mxu0 0.0
    %2282 = vmatpush1.msra.mxu0 0.0
    %2283 = vmatprep.subr.mxu0 0.0
    %2284 = vmatpush1.msra.mxu0 0.0
    %2285 = vmatprep.subr.mxu0 0.0
    %2286 = vmatpush1.msra.mxu0 0.0
    %2287 = vmatprep.subr.mxu0 0.0
    %2288 = vmatpush1.msra.mxu0 0.0
    %2289 = vmatprep.subr.mxu0 0.0
    %2290 = vmatpush1.msra.mxu0 0.0
    %2291 = vmatprep.subr.mxu0 0.0
    %2292 = vmatpush1.msra.mxu0 0.0
    %2293 = vmatprep.subr.mxu0 0.0
    %2294 = vmatpush1.msra.mxu0 0.0
    %2295 = vmatprep.subr.mxu0 0.0
    %2296 = vmatpush1.msra.mxu0 0.0
    %2297 = vmatprep.subr.mxu0 0.0
    %2298 = vmatpush1.msra.mxu0 0.0
    %2299 = vmatprep.subr.mxu0 0.0
    %2300 = vmatpush1.msra.mxu0 0.0
    %2301 = vmatprep.subr.mxu0 0.0
    %2302 = vmatpush1.msra.mxu0 0.0
    %2303 = vmatprep.subr.mxu0 0.0
    %2304 = vmatpush1.msra.mxu0 0.0
    %2305 = vmatprep.subr.mxu0 0.0
    %2306 = vmatpush1.msra.mxu0 0.0
    %2307 = vmatprep.subr.mxu0 0.0
    %2308 = vmatpush1.msra.mxu0 0.0
    %2309 = vmatprep.mubr.f32.mxu0 0.0
    %2310 = vmatmul.mubr.f32.gmra.mrb[0].mxu0 %v2243
    %v2311 = vpop.f32.mrb[0].mxu0
    %v2312 = vadd.f32 0.0, %v2311
    %v2313 = vpop.f32.mrb[0].mxu0
    %2314 = vdwg.mxu0
    %2315 = vrot.lane.b32.xlu0 %v239, 64
    %v2316 = vpop.permute.xlu0 %2315
    %v2319 = vsel %vm261, %v2157, 0
    %2321 = vmatprep.subr.mxu0 0.0
    %2322 = vmatpush1.msra.mxu0 %v2316
    %2323 = vmatprep.subr.mxu0 0.0
    %2324 = vmatpush1.msra.mxu0 0.0
    %2325 = vmatprep.subr.mxu0 0.0
    %2326 = vmatpush1.msra.mxu0 0.0
    %2327 = vmatprep.subr.mxu0 0.0
    %2328 = vmatpush1.msra.mxu0 0.0
    %2329 = vmatprep.subr.mxu0 0.0
    %2330 = vmatpush1.msra.mxu0 0.0
    %2331 = vmatprep.subr.mxu0 0.0
    %2332 = vmatpush1.msra.mxu0 0.0
    %2333 = vmatprep.subr.mxu0 0.0
    %2334 = vmatpush1.msra.mxu0 0.0
    %2335 = vmatprep.subr.mxu0 0.0
    %2336 = vmatpush1.msra.mxu0 0.0
    %2337 = vmatprep.subr.mxu0 0.0
    %2338 = vmatpush1.msra.mxu0 0.0
    %2339 = vmatprep.subr.mxu0 0.0
    %2340 = vmatpush1.msra.mxu0 0.0
    %2341 = vmatprep.subr.mxu0 0.0
    %2342 = vmatpush1.msra.mxu0 0.0
    %2343 = vmatprep.subr.mxu0 0.0
    %2344 = vmatpush1.msra.mxu0 0.0
    %2345 = vmatprep.subr.mxu0 0.0
    %2346 = vmatpush1.msra.mxu0 0.0
    %2347 = vmatprep.subr.mxu0 0.0
    %2348 = vmatpush1.msra.mxu0 0.0
    %2349 = vmatprep.subr.mxu0 0.0
    %2350 = vmatpush1.msra.mxu0 0.0
    %2351 = vmatprep.subr.mxu0 0.0
    %2352 = vmatpush1.msra.mxu0 0.0
    %2353 = vmatprep.subr.mxu0 0.0
    %2354 = vmatpush1.msra.mxu0 0.0
    %2355 = vmatprep.subr.mxu0 0.0
    %2356 = vmatpush1.msra.mxu0 0.0
    %2357 = vmatprep.subr.mxu0 0.0
    %2358 = vmatpush1.msra.mxu0 0.0
    %2359 = vmatprep.subr.mxu0 0.0
    %2360 = vmatpush1.msra.mxu0 0.0
    %2361 = vmatprep.subr.mxu0 0.0
    %2362 = vmatpush1.msra.mxu0 0.0
    %2363 = vmatprep.subr.mxu0 0.0
    %2364 = vmatpush1.msra.mxu0 0.0
    %2365 = vmatprep.subr.mxu0 0.0
    %2366 = vmatpush1.msra.mxu0 0.0
    %2367 = vmatprep.subr.mxu0 0.0
    %2368 = vmatpush1.msra.mxu0 0.0
    %2369 = vmatprep.subr.mxu0 0.0
    %2370 = vmatpush1.msra.mxu0 0.0
    %2371 = vmatprep.subr.mxu0 0.0
    %2372 = vmatpush1.msra.mxu0 0.0
    %2373 = vmatprep.subr.mxu0 0.0
    %2374 = vmatpush1.msra.mxu0 0.0
    %2375 = vmatprep.subr.mxu0 0.0
    %2376 = vmatpush1.msra.mxu0 0.0
    %2377 = vmatprep.subr.mxu0 0.0
    %2378 = vmatpush1.msra.mxu0 0.0
    %2379 = vmatprep.subr.mxu0 0.0
    %2380 = vmatpush1.msra.mxu0 0.0
    %2381 = vmatprep.subr.mxu0 0.0
    %2382 = vmatpush1.msra.mxu0 0.0
    %2383 = vmatprep.subr.mxu0 0.0
    %2384 = vmatpush1.msra.mxu0 0.0
    %2385 = vmatprep.mubr.f32.mxu0 0.0
    %2386 = vmatmul.mubr.f32.gmra.mrb[0].mxu0 %v2319
    %v2387 = vpop.f32.mrb[0].mxu0
    %v2388 = vadd.f32 0.0, %v2387
    %v2389 = vpop.f32.mrb[0].mxu0
    %2390 = vdwg.mxu0
    %2391 = vrot.lane.b32.xlu0 %v241, 64
    %v2392 = vpop.permute.xlu0 %2391
    %v2395 = vsel %vm261, %v2158, 0
    %2397 = vmatprep.subr.mxu0 0.0
    %2398 = vmatpush1.msra.mxu0 %v2392
    %2399 = vmatprep.subr.mxu0 0.0
    %2400 = vmatpush1.msra.mxu0 0.0
    %2401 = vmatprep.subr.mxu0 0.0
    %2402 = vmatpush1.msra.mxu0 0.0
    %2403 = vmatprep.subr.mxu0 0.0
    %2404 = vmatpush1.msra.mxu0 0.0
    %2405 = vmatprep.subr.mxu0 0.0
    %2406 = vmatpush1.msra.mxu0 0.0
    %2407 = vmatprep.subr.mxu0 0.0
    %2408 = vmatpush1.msra.mxu0 0.0
    %2409 = vmatprep.subr.mxu0 0.0
    %2410 = vmatpush1.msra.mxu0 0.0
    %2411 = vmatprep.subr.mxu0 0.0
    %2412 = vmatpush1.msra.mxu0 0.0
    %2413 = vmatprep.subr.mxu0 0.0
    %2414 = vmatpush1.msra.mxu0 0.0
    %2415 = vmatprep.subr.mxu0 0.0
    %2416 = vmatpush1.msra.mxu0 0.0
    %2417 = vmatprep.subr.mxu0 0.0
    %2418 = vmatpush1.msra.mxu0 0.0
    %2419 = vmatprep.subr.mxu0 0.0
    %2420 = vmatpush1.msra.mxu0 0.0
    %2421 = vmatprep.subr.mxu0 0.0
    %2422 = vmatpush1.msra.mxu0 0.0
    %2423 = vmatprep.subr.mxu0 0.0
    %2424 = vmatpush1.msra.mxu0 0.0
    %2425 = vmatprep.subr.mxu0 0.0
    %2426 = vmatpush1.msra.mxu0 0.0
    %2427 = vmatprep.subr.mxu0 0.0
    %2428 = vmatpush1.msra.mxu0 0.0
    %2429 = vmatprep.subr.mxu0 0.0
    %2430 = vmatpush1.msra.mxu0 0.0
    %2431 = vmatprep.subr.mxu0 0.0
    %2432 = vmatpush1.msra.mxu0 0.0
    %2433 = vmatprep.subr.mxu0 0.0
    %2434 = vmatpush1.msra.mxu0 0.0
    %2435 = vmatprep.subr.mxu0 0.0
    %2436 = vmatpush1.msra.mxu0 0.0
    %2437 = vmatprep.subr.mxu0 0.0
    %2438 = vmatpush1.msra.mxu0 0.0
    %2439 = vmatprep.subr.mxu0 0.0
    %2440 = vmatpush1.msra.mxu0 0.0
    %2441 = vmatprep.subr.mxu0 0.0
    %2442 = vmatpush1.msra.mxu0 0.0
    %2443 = vmatprep.subr.mxu0 0.0
    %2444 = vmatpush1.msra.mxu0 0.0
    %2445 = vmatprep.subr.mxu0 0.0
    %2446 = vmatpush1.msra.mxu0 0.0
    %2447 = vmatprep.subr.mxu0 0.0
    %2448 = vmatpush1.msra.mxu0 0.0
    %2449 = vmatprep.subr.mxu0 0.0
    %2450 = vmatpush1.msra.mxu0 0.0
    %2451 = vmatprep.subr.mxu0 0.0
    %2452 = vmatpush1.msra.mxu0 0.0
    %2453 = vmatprep.subr.mxu0 0.0
    %2454 = vmatpush1.msra.mxu0 0.0
    %2455 = vmatprep.subr.mxu0 0.0
    %2456 = vmatpush1.msra.mxu0 0.0
    %2457 = vmatprep.subr.mxu0 0.0
    %2458 = vmatpush1.msra.mxu0 0.0
    %2459 = vmatprep.subr.mxu0 0.0
    %2460 = vmatpush1.msra.mxu0 0.0
    %2461 = vmatprep.mubr.f32.mxu0 0.0
    %2462 = vmatmul.mubr.f32.gmra.mrb[0].mxu0 %v2395
    %v2463 = vpop.f32.mrb[0].mxu0
    %v2464 = vadd.f32 0.0, %v2463
    %v2465 = vpop.f32.mrb[0].mxu0
    %2466 = vdwg.mxu0
    %2467 = vrot.lane.b32.xlu0 %v243, 64
    %v2468 = vpop.permute.xlu0 %2467
    %v2471 = vsel %vm261, %v2159, 0
    %2473 = vmatprep.subr.mxu0 0.0
    %2474 = vmatpush1.msra.mxu0 %v2468
    %2475 = vmatprep.subr.mxu0 0.0
    %2476 = vmatpush1.msra.mxu0 0.0
    %2477 = vmatprep.subr.mxu0 0.0
    %2478 = vmatpush1.msra.mxu0 0.0
    %2479 = vmatprep.subr.mxu0 0.0
    %2480 = vmatpush1.msra.mxu0 0.0
    %2481 = vmatprep.subr.mxu0 0.0
    %2482 = vmatpush1.msra.mxu0 0.0
    %2483 = vmatprep.subr.mxu0 0.0
    %2484 = vmatpush1.msra.mxu0 0.0
    %2485 = vmatprep.subr.mxu0 0.0
    %2486 = vmatpush1.msra.mxu0 0.0
    %2487 = vmatprep.subr.mxu0 0.0
    %2488 = vmatpush1.msra.mxu0 0.0
    %2489 = vmatprep.subr.mxu0 0.0
    %2490 = vmatpush1.msra.mxu0 0.0
    %2491 = vmatprep.subr.mxu0 0.0
    %2492 = vmatpush1.msra.mxu0 0.0
    %2493 = vmatprep.subr.mxu0 0.0
    %2494 = vmatpush1.msra.mxu0 0.0
    %2495 = vmatprep.subr.mxu0 0.0
    %2496 = vmatpush1.msra.mxu0 0.0
    %2497 = vmatprep.subr.mxu0 0.0
    %2498 = vmatpush1.msra.mxu0 0.0
    %2499 = vmatprep.subr.mxu0 0.0
    %2500 = vmatpush1.msra.mxu0 0.0
    %2501 = vmatprep.subr.mxu0 0.0
    %2502 = vmatpush1.msra.mxu0 0.0
    %2503 = vmatprep.subr.mxu0 0.0
    %2504 = vmatpush1.msra.mxu0 0.0
    %2505 = vmatprep.subr.mxu0 0.0
    %2506 = vmatpush1.msra.mxu0 0.0
    %2507 = vmatprep.subr.mxu0 0.0
    %2508 = vmatpush1.msra.mxu0 0.0
    %2509 = vmatprep.subr.mxu0 0.0
    %2510 = vmatpush1.msra.mxu0 0.0
    %2511 = vmatprep.subr.mxu0 0.0
    %2512 = vmatpush1.msra.mxu0 0.0
    %2513 = vmatprep.subr.mxu0 0.0
    %2514 = vmatpush1.msra.mxu0 0.0
    %2515 = vmatprep.subr.mxu0 0.0
    %2516 = vmatpush1.msra.mxu0 0.0
    %2517 = vmatprep.subr.mxu0 0.0
    %2518 = vmatpush1.msra.mxu0 0.0
    %2519 = vmatprep.subr.mxu0 0.0
    %2520 = vmatpush1.msra.mxu0 0.0
    %2521 = vmatprep.subr.mxu0 0.0
    %2522 = vmatpush1.msra.mxu0 0.0
    %2523 = vmatprep.subr.mxu0 0.0
    %2524 = vmatpush1.msra.mxu0 0.0
    %2525 = vmatprep.subr.mxu0 0.0
    %2526 = vmatpush1.msra.mxu0 0.0
    %2527 = vmatprep.subr.mxu0 0.0
    %2528 = vmatpush1.msra.mxu0 0.0
    %2529 = vmatprep.subr.mxu0 0.0
    %2530 = vmatpush1.msra.mxu0 0.0
    %2531 = vmatprep.subr.mxu0 0.0
    %2532 = vmatpush1.msra.mxu0 0.0
    %2533 = vmatprep.subr.mxu0 0.0
    %2534 = vmatpush1.msra.mxu0 0.0
    %2535 = vmatprep.subr.mxu0 0.0
    %2536 = vmatpush1.msra.mxu0 0.0
    %2537 = vmatprep.mubr.f32.mxu0 0.0
    %2538 = vmatmul.mubr.f32.gmra.mrb[0].mxu0 %v2471
    %v2539 = vpop.f32.mrb[0].mxu0
    %v2540 = vadd.f32 0.0, %v2539
    %v2541 = vpop.f32.mrb[0].mxu0
    %2542 = vdwg.mxu0
    %2543 = vrot.lane.b32.xlu0 %v245, 64
    %v2544 = vpop.permute.xlu0 %2543
    %v2547 = vsel %vm261, %v2160, 0
    %2549 = vmatprep.subr.mxu0 0.0
    %2550 = vmatpush1.msra.mxu0 %v2544
    %2551 = vmatprep.subr.mxu0 0.0
    %2552 = vmatpush1.msra.mxu0 0.0
    %2553 = vmatprep.subr.mxu0 0.0
    %2554 = vmatpush1.msra.mxu0 0.0
    %2555 = vmatprep.subr.mxu0 0.0
    %2556 = vmatpush1.msra.mxu0 0.0
    %2557 = vmatprep.subr.mxu0 0.0
    %2558 = vmatpush1.msra.mxu0 0.0
    %2559 = vmatprep.subr.mxu0 0.0
    %2560 = vmatpush1.msra.mxu0 0.0
    %2561 = vmatprep.subr.mxu0 0.0
    %2562 = vmatpush1.msra.mxu0 0.0
    %2563 = vmatprep.subr.mxu0 0.0
    %2564 = vmatpush1.msra.mxu0 0.0
    %2565 = vmatprep.subr.mxu0 0.0
    %2566 = vmatpush1.msra.mxu0 0.0
    %2567 = vmatprep.subr.mxu0 0.0
    %2568 = vmatpush1.msra.mxu0 0.0
    %2569 = vmatprep.subr.mxu0 0.0
    %2570 = vmatpush1.msra.mxu0 0.0
    %2571 = vmatprep.subr.mxu0 0.0
    %2572 = vmatpush1.msra.mxu0 0.0
    %2573 = vmatprep.subr.mxu0 0.0
    %2574 = vmatpush1.msra.mxu0 0.0
    %2575 = vmatprep.subr.mxu0 0.0
    %2576 = vmatpush1.msra.mxu0 0.0
    %2577 = vmatprep.subr.mxu0 0.0
    %2578 = vmatpush1.msra.mxu0 0.0
    %2579 = vmatprep.subr.mxu0 0.0
    %2580 = vmatpush1.msra.mxu0 0.0
    %2581 = vmatprep.subr.mxu0 0.0
    %2582 = vmatpush1.msra.mxu0 0.0
    %2583 = vmatprep.subr.mxu0 0.0
    %2584 = vmatpush1.msra.mxu0 0.0
    %2585 = vmatprep.subr.mxu0 0.0
    %2586 = vmatpush1.msra.mxu0 0.0
    %2587 = vmatprep.subr.mxu0 0.0
    %2588 = vmatpush1.msra.mxu0 0.0
    %2589 = vmatprep.subr.mxu0 0.0
    %2590 = vmatpush1.msra.mxu0 0.0
    %2591 = vmatprep.subr.mxu0 0.0
    %2592 = vmatpush1.msra.mxu0 0.0
    %2593 = vmatprep.subr.mxu0 0.0
    %2594 = vmatpush1.msra.mxu0 0.0
    %2595 = vmatprep.subr.mxu0 0.0
    %2596 = vmatpush1.msra.mxu0 0.0
    %2597 = vmatprep.subr.mxu0 0.0
    %2598 = vmatpush1.msra.mxu0 0.0
    %2599 = vmatprep.subr.mxu0 0.0
    %2600 = vmatpush1.msra.mxu0 0.0
    %2601 = vmatprep.subr.mxu0 0.0
    %2602 = vmatpush1.msra.mxu0 0.0
    %2603 = vmatprep.subr.mxu0 0.0
    %2604 = vmatpush1.msra.mxu0 0.0
    %2605 = vmatprep.subr.mxu0 0.0
    %2606 = vmatpush1.msra.mxu0 0.0
    %2607 = vmatprep.subr.mxu0 0.0
    %2608 = vmatpush1.msra.mxu0 0.0
    %2609 = vmatprep.subr.mxu0 0.0
    %2610 = vmatpush1.msra.mxu0 0.0
    %2611 = vmatprep.subr.mxu0 0.0
    %2612 = vmatpush1.msra.mxu0 0.0
    %2613 = vmatprep.mubr.f32.mxu0 0.0
    %2614 = vmatmul.mubr.f32.gmra.mrb[0].mxu0 %v2547
    %v2615 = vpop.f32.mrb[0].mxu0
    %v2616 = vadd.f32 0.0, %v2615
    %v2617 = vpop.f32.mrb[0].mxu0
    %2618 = vdwg.mxu0
    %2619 = vrot.lane.b32.xlu0 %v247, 64
    %v2620 = vpop.permute.xlu0 %2619
    %v2623 = vsel %vm261, %v2161, 0
    %2625 = vmatprep.subr.mxu0 0.0
    %2626 = vmatpush1.msra.mxu0 %v2620
    %2627 = vmatprep.subr.mxu0 0.0
    %2628 = vmatpush1.msra.mxu0 0.0
    %2629 = vmatprep.subr.mxu0 0.0
    %2630 = vmatpush1.msra.mxu0 0.0
    %2631 = vmatprep.subr.mxu0 0.0
    %2632 = vmatpush1.msra.mxu0 0.0
    %2633 = vmatprep.subr.mxu0 0.0
    %2634 = vmatpush1.msra.mxu0 0.0
    %2635 = vmatprep.subr.mxu0 0.0
    %2636 = vmatpush1.msra.mxu0 0.0
    %2637 = vmatprep.subr.mxu0 0.0
    %2638 = vmatpush1.msra.mxu0 0.0
    %2639 = vmatprep.subr.mxu0 0.0
    %2640 = vmatpush1.msra.mxu0 0.0
    %2641 = vmatprep.subr.mxu0 0.0
    %2642 = vmatpush1.msra.mxu0 0.0
    %2643 = vmatprep.subr.mxu0 0.0
    %2644 = vmatpush1.msra.mxu0 0.0
    %2645 = vmatprep.subr.mxu0 0.0
    %2646 = vmatpush1.msra.mxu0 0.0
    %2647 = vmatprep.subr.mxu0 0.0
    %2648 = vmatpush1.msra.mxu0 0.0
    %2649 = vmatprep.subr.mxu0 0.0
    %2650 = vmatpush1.msra.mxu0 0.0
    %2651 = vmatprep.subr.mxu0 0.0
    %2652 = vmatpush1.msra.mxu0 0.0
    %2653 = vmatprep.subr.mxu0 0.0
    %2654 = vmatpush1.msra.mxu0 0.0
    %2655 = vmatprep.subr.mxu0 0.0
    %2656 = vmatpush1.msra.mxu0 0.0
    %2657 = vmatprep.subr.mxu0 0.0
    %2658 = vmatpush1.msra.mxu0 0.0
    %2659 = vmatprep.subr.mxu0 0.0
    %2660 = vmatpush1.msra.mxu0 0.0
    %2661 = vmatprep.subr.mxu0 0.0
    %2662 = vmatpush1.msra.mxu0 0.0
    %2663 = vmatprep.subr.mxu0 0.0
    %2664 = vmatpush1.msra.mxu0 0.0
    %2665 = vmatprep.subr.mxu0 0.0
    %2666 = vmatpush1.msra.mxu0 0.0
    %2667 = vmatprep.subr.mxu0 0.0
    %2668 = vmatpush1.msra.mxu0 0.0
    %2669 = vmatprep.subr.mxu0 0.0
    %2670 = vmatpush1.msra.mxu0 0.0
    %2671 = vmatprep.subr.mxu0 0.0
    %2672 = vmatpush1.msra.mxu0 0.0
    %2673 = vmatprep.subr.mxu0 0.0
    %2674 = vmatpush1.msra.mxu0 0.0
    %2675 = vmatprep.subr.mxu0 0.0
    %2676 = vmatpush1.msra.mxu0 0.0
    %2677 = vmatprep.subr.mxu0 0.0
    %2678 = vmatpush1.msra.mxu0 0.0
    %2679 = vmatprep.subr.mxu0 0.0
    %2680 = vmatpush1.msra.mxu0 0.0
    %2681 = vmatprep.subr.mxu0 0.0
    %2682 = vmatpush1.msra.mxu0 0.0
    %2683 = vmatprep.subr.mxu0 0.0
    %2684 = vmatpush1.msra.mxu0 0.0
    %2685 = vmatprep.subr.mxu0 0.0
    %2686 = vmatpush1.msra.mxu0 0.0
    %2687 = vmatprep.subr.mxu0 0.0
    %2688 = vmatpush1.msra.mxu0 0.0
    %2689 = vmatprep.mubr.f32.mxu0 0.0
    %2690 = vmatmul.mubr.f32.gmra.mrb[0].mxu0 %v2623
    %v2691 = vpop.f32.mrb[0].mxu0
    %v2692 = vadd.f32 0.0, %v2691
    %v2693 = vpop.f32.mrb[0].mxu0
    %2694 = vdwg.mxu0
    %2695 = vrot.lane.b32.xlu0 %v249, 64
    %v2696 = vpop.permute.xlu0 %2695
    %v2699 = vsel %vm261, %v2162, 0
    %2701 = vmatprep.subr.mxu0 0.0
    %2702 = vmatpush1.msra.mxu0 %v2696
    %2703 = vmatprep.subr.mxu0 0.0
    %2704 = vmatpush1.msra.mxu0 0.0
    %2705 = vmatprep.subr.mxu0 0.0
    %2706 = vmatpush1.msra.mxu0 0.0
    %2707 = vmatprep.subr.mxu0 0.0
    %2708 = vmatpush1.msra.mxu0 0.0
    %2709 = vmatprep.subr.mxu0 0.0
    %2710 = vmatpush1.msra.mxu0 0.0
    %2711 = vmatprep.subr.mxu0 0.0
    %2712 = vmatpush1.msra.mxu0 0.0
    %2713 = vmatprep.subr.mxu0 0.0
    %2714 = vmatpush1.msra.mxu0 0.0
    %2715 = vmatprep.subr.mxu0 0.0
    %2716 = vmatpush1.msra.mxu0 0.0
    %2717 = vmatprep.subr.mxu0 0.0
    %2718 = vmatpush1.msra.mxu0 0.0
    %2719 = vmatprep.subr.mxu0 0.0
    %2720 = vmatpush1.msra.mxu0 0.0
    %2721 = vmatprep.subr.mxu0 0.0
    %2722 = vmatpush1.msra.mxu0 0.0
    %2723 = vmatprep.subr.mxu0 0.0
    %2724 = vmatpush1.msra.mxu0 0.0
    %2725 = vmatprep.subr.mxu0 0.0
    %2726 = vmatpush1.msra.mxu0 0.0
    %2727 = vmatprep.subr.mxu0 0.0
    %2728 = vmatpush1.msra.mxu0 0.0
    %2729 = vmatprep.subr.mxu0 0.0
    %2730 = vmatpush1.msra.mxu0 0.0
    %2731 = vmatprep.subr.mxu0 0.0
    %2732 = vmatpush1.msra.mxu0 0.0
    %2733 = vmatprep.subr.mxu0 0.0
    %2734 = vmatpush1.msra.mxu0 0.0
    %2735 = vmatprep.subr.mxu0 0.0
    %2736 = vmatpush1.msra.mxu0 0.0
    %2737 = vmatprep.subr.mxu0 0.0
    %2738 = vmatpush1.msra.mxu0 0.0
    %2739 = vmatprep.subr.mxu0 0.0
    %2740 = vmatpush1.msra.mxu0 0.0
    %2741 = vmatprep.subr.mxu0 0.0
    %2742 = vmatpush1.msra.mxu0 0.0
    %2743 = vmatprep.subr.mxu0 0.0
    %2744 = vmatpush1.msra.mxu0 0.0
    %2745 = vmatprep.subr.mxu0 0.0
    %2746 = vmatpush1.msra.mxu0 0.0
    %2747 = vmatprep.subr.mxu0 0.0
    %2748 = vmatpush1.msra.mxu0 0.0
    %2749 = vmatprep.subr.mxu0 0.0
    %2750 = vmatpush1.msra.mxu0 0.0
    %2751 = vmatprep.subr.mxu0 0.0
    %2752 = vmatpush1.msra.mxu0 0.0
    %2753 = vmatprep.subr.mxu0 0.0
    %2754 = vmatpush1.msra.mxu0 0.0
    %2755 = vmatprep.subr.mxu0 0.0
    %2756 = vmatpush1.msra.mxu0 0.0
    %2757 = vmatprep.subr.mxu0 0.0
    %2758 = vmatpush1.msra.mxu0 0.0
    %2759 = vmatprep.subr.mxu0 0.0
    %2760 = vmatpush1.msra.mxu0 0.0
    %2761 = vmatprep.subr.mxu0 0.0
    %2762 = vmatpush1.msra.mxu0 0.0
    %2763 = vmatprep.subr.mxu0 0.0
    %2764 = vmatpush1.msra.mxu0 0.0
    %2765 = vmatprep.mubr.f32.mxu0 0.0
    %2766 = vmatmul.mubr.f32.gmra.mrb[0].mxu0 %v2699
    %v2767 = vpop.f32.mrb[0].mxu0
    %v2768 = vadd.f32 0.0, %v2767
    %v2769 = vpop.f32.mrb[0].mxu0
    %2770 = vdwg.mxu0
    %2771 = vst.msk [vmem:[#allocation2] sm:$0xff] %vm261, %v2236
    %2772 = vst.msk [vmem:[#allocation2 + $0x8] sm:$0xff] %vm261, %v2312
    %2775 = vrot.lane.b32.xlu0 %v2388, 8
    %v2776 = vpop.permute.xlu0 %2775
    %2777 = vrot.lane.b32.xlu0 %v2464, 8
    %v2778 = vpop.permute.xlu0 %2777
    %vm2781 = vcmask 130112
    %2782 = vst.msk [vmem:[#allocation2] sm:$0xff] %vm2781, %v2776
    %2783 = vst.msk [vmem:[#allocation2 + $0x8] sm:$0xff] %vm2781, %v2778
    %2786 = vrot.lane.b32.xlu0 %v2540, 16
    %v2787 = vpop.permute.xlu0 %2786
    %2788 = vrot.lane.b32.xlu0 %v2616, 16
    %v2789 = vpop.permute.xlu0 %2788
    %vm2792 = vcmask 195712
    %2793 = vst.msk [vmem:[#allocation2] sm:$0xff] %vm2792, %v2787
    %2794 = vst.msk [vmem:[#allocation2 + $0x8] sm:$0xff] %vm2792, %v2789
    %2797 = vrot.lane.b32.xlu0 %v2692, 24
    %v2798 = vpop.permute.xlu0 %2797
    %2799 = vrot.lane.b32.xlu0 %v2768, 24
    %v2800 = vpop.permute.xlu0 %2799
    %vm2803 = vcmask 261312
    %2804 = vst.msk [vmem:[#allocation2] sm:$0xff] %vm2803, %v2798
    %2805 = vst.msk [vmem:[#allocation2 + $0x8] sm:$0xff] %vm2803, %v2800
    %v2806 = vld [vmem:[#allocation2] sm:$0xff]
    %v2807 = vld [vmem:[#allocation2 + $0x8] sm:$0xff]
    %v2808 = vld [vmem:[%s8] sm:$0xff]
    %v2809 = vld [vmem:[%s8 + $0x8] sm:$0xff]
    %v2810 = vld [vmem:[%s8 + $0x10] sm:$0xff]
    %v2811 = vld [vmem:[%s8 + $0x18] sm:$0xff]
    %v2813 = vsel %vm50, %v2806, 0
    %v2816 = vsel %vm50, %v2807, 0
    %2818 = vmatprep.subr.mxu0 0.0
    %2819 = vmatpush1.msra.mxu0 %v2808
    %2820 = vmatprep.subr.mxu0 0.0
    %2821 = vmatpush1.msra.mxu0 %v2809
    %2822 = vmatprep.subr.mxu0 0.0
    %2823 = vmatpush1.msra.mxu0 %v2810
    %2824 = vmatprep.subr.mxu0 0.0
    %2825 = vmatpush1.msra.mxu0 %v2811
    %2826 = vmatprep.subr.mxu0 0.0
    %2827 = vmatpush1.msra.mxu0 0.0
    %2828 = vmatprep.subr.mxu0 0.0
    %2829 = vmatpush1.msra.mxu0 0.0
    %2830 = vmatprep.subr.mxu0 0.0
    %2831 = vmatpush1.msra.mxu0 0.0
    %2832 = vmatprep.subr.mxu0 0.0
    %2833 = vmatpush1.msra.mxu0 0.0
    %2834 = vmatprep.subr.mxu0 0.0
    %2835 = vmatpush1.msra.mxu0 0.0
    %2836 = vmatprep.subr.mxu0 0.0
    %2837 = vmatpush1.msra.mxu0 0.0
    %2838 = vmatprep.subr.mxu0 0.0
    %2839 = vmatpush1.msra.mxu0 0.0
    %2840 = vmatprep.subr.mxu0 0.0
    %2841 = vmatpush1.msra.mxu0 0.0
    %2842 = vmatprep.subr.mxu0 0.0
    %2843 = vmatpush1.msra.mxu0 0.0
    %2844 = vmatprep.subr.mxu0 0.0
    %2845 = vmatpush1.msra.mxu0 0.0
    %2846 = vmatprep.subr.mxu0 0.0
    %2847 = vmatpush1.msra.mxu0 0.0
    %2848 = vmatprep.subr.mxu0 0.0
    %2849 = vmatpush1.msra.mxu0 0.0
    %2850 = vmatprep.subr.mxu0 0.0
    %2851 = vmatpush1.msra.mxu0 0.0
    %2852 = vmatprep.subr.mxu0 0.0
    %2853 = vmatpush1.msra.mxu0 0.0
    %2854 = vmatprep.subr.mxu0 0.0
    %2855 = vmatpush1.msra.mxu0 0.0
    %2856 = vmatprep.subr.mxu0 0.0
    %2857 = vmatpush1.msra.mxu0 0.0
    %2858 = vmatprep.subr.mxu0 0.0
    %2859 = vmatpush1.msra.mxu0 0.0
    %2860 = vmatprep.subr.mxu0 0.0
    %2861 = vmatpush1.msra.mxu0 0.0
    %2862 = vmatprep.subr.mxu0 0.0
    %2863 = vmatpush1.msra.mxu0 0.0
    %2864 = vmatprep.subr.mxu0 0.0
    %2865 = vmatpush1.msra.mxu0 0.0
    %2866 = vmatprep.subr.mxu0 0.0
    %2867 = vmatpush1.msra.mxu0 0.0
    %2868 = vmatprep.subr.mxu0 0.0
    %2869 = vmatpush1.msra.mxu0 0.0
    %2870 = vmatprep.subr.mxu0 0.0
    %2871 = vmatpush1.msra.mxu0 0.0
    %2872 = vmatprep.subr.mxu0 0.0
    %2873 = vmatpush1.msra.mxu0 0.0
    %2874 = vmatprep.subr.mxu0 0.0
    %2875 = vmatpush1.msra.mxu0 0.0
    %2876 = vmatprep.subr.mxu0 0.0
    %2877 = vmatpush1.msra.mxu0 0.0
    %2878 = vmatprep.subr.mxu0 0.0
    %2879 = vmatpush1.msra.mxu0 0.0
    %2880 = vmatprep.subr.mxu0 0.0
    %2881 = vmatpush1.msra.mxu0 0.0
    %2882 = vmatprep.mubr.f32.mxu0 0.0
    %2883 = vmatmul.mubr.f32.gmra.mrb[0].mxu0 %v2813
    %v2884 = vpop.f32.mrb[0].mxu0
    %v2885 = vadd.f32 0.0, %v2884
    %v2886 = vpop.f32.mrb[0].mxu0
    %2887 = vmatprep.mubr.f32.mxu0 0.0
    %2888 = vmatmul.mubr.f32.gmra.mrb[0].mxu0 %v2816
    %v2889 = vpop.f32.mrb[0].mxu0
    %v2890 = vadd.f32 0.0, %v2889
    %v2891 = vpop.f32.mrb[0].mxu0
    %2892 = vdwg.mxu0
    %2893 = vst.msk [vmem:[#allocation3] sm:$0xff] %vm50, %v2885
    %2894 = vst.msk [vmem:[#allocation3 + $0x8] sm:$0xff] %vm50, %v2890
    // Predicated region
    $region58: #{rel_partial_attn.1} parent=1 // pred_check
      _
    $region59: #{rel_partial_attn.1} parent=1 // pred_check_branch
      %2896 = sbr.rel (0) target = $region61
    $region60: #{rel_partial_attn.1} parent=1 // pred_region
      %s2898 = ssub.s32 256, 256
      %2899 = vsyncadd [#allocation4], %s2898
      %s2900 = sshll.u32 [#allocation3], 4
      %s2901 = int_to_ptr.vmem [resolvable:$true] %s2900
      %2906 = dma.vmem_to_hbm [thread:$0]  %s2901, 256, %s14, [#allocation4], 128, 128, 8
    $region61: #{rel_partial_attn.1} parent=1 // pred_fallthru
      _
    // Predicated region
    $region62: #{rel_partial_attn.1} parent=1 // pred_check
      _
    $region63: #{rel_partial_attn.1} parent=1 // pred_check_branch
      %2908 = sbr.rel (0) target = $region65
    $region64: #{rel_partial_attn.1} parent=1 // pred_region
      %2909 = dma.done [#allocation4], 256
    $region65: #{rel_partial_attn.1} parent=1 // pred_fallthru
      _
    %2910 = vsyncpa [#allocation4], 1

</llo_original>
